<compile_context>
chip_gen: v6e
topology: v6e:2x2x1
jax: 0.10.0
libtpu: 0.0.40
codegen_flags: <defaults>
</compile_context>

<pallas_src>
import functools
import math

import jax
import jax.numpy as jnp
import numpy as np
from jax.experimental import pallas as pl
from jax.experimental.pallas import tpu as pltpu


def _layernorm(v, g, b, eps):
    # nn.LayerNorm: biased variance, eps inside the sqrt.  g/b are (1, D).
    mu = jnp.mean(v, axis=-1, keepdims=True)
    cen = v - mu
    var = jnp.mean(cen * cen, axis=-1, keepdims=True)
    return cen * jax.lax.rsqrt(var + eps) * g + b


def _erf(x):
    # Abramowitz & Stegun 7.1.26 (|err| < 1.5e-7): uses only exp/mul/add/where
    # so it always lowers in Mosaic, and matches the exact erf-based nn.GELU()
    # far below the bf16 tolerance of this kernel.
    a1, a2, a3, a4, a5 = (0.254829592, -0.284496736, 1.421413741,
                          -1.453152027, 1.061405429)
    p = 0.3275911
    ax = jnp.abs(x)
    t = 1.0 / (1.0 + p * ax)
    poly = ((((a5 * t + a4) * t + a3) * t + a2) * t + a1) * t
    y = 1.0 - poly * jnp.exp(-ax * ax)
    return jnp.where(x >= 0.0, y, -y)


def _gelu_exact(x):
    return 0.5 * x * (1.0 + _erf(x * (1.0 / math.sqrt(2.0))))


def _block_kernel(x_ref, ln1g_ref, ln1b_ref,
                  wq_ref, bq_ref, wk_ref, bk_ref, wv_ref, bv_ref,
                  wproj_ref, bproj_ref, ln2g_ref, ln2b_ref,
                  w1_ref, b1_ref, w2_ref, b2_ref, o_ref,
                  *, n_heads, head_dim, q_tile, eps):
    f32, bf16 = jnp.float32, jnp.bfloat16
    H, hd = n_heads, head_dim

    x_all = x_ref[0]                              # (T, D): full sequence
    T, D = x_all.shape

    # ---- hoisted parameter rows (loaded once per grid step, kept 2-D) ----
    ln1g, ln1b = ln1g_ref[...], ln1b_ref[...]
    ln2g, ln2b = ln2g_ref[...], ln2b_ref[...]

    # ---- LayerNorm 1 in f32 over the full sequence (feeds K and V) ----
    xn_all = _layernorm(x_all, ln1g, ln1b, eps).astype(bf16)

    if q_tile == T:                               # default path: no recompute
        xq, xn_q = x_all, xn_all
    else:
        q_start = pl.multiple_of(pl.program_id(1) * q_tile, q_tile)
        xq = x_ref[0, pl.ds(q_start, q_tile), :]
        xn_q = _layernorm(xq, ln1g, ln1b, eps).astype(bf16)

    # ---- dense, lane-wide Q/K/V projections: N = D fills the MXU columns;
    #      bias adds happen on the dense layout; attention scale pre-folded ----
    q_d = jnp.dot(xn_q, wq_ref[...], preferred_element_type=f32) + bq_ref[...]
    k_d = jnp.dot(xn_all, wk_ref[...], preferred_element_type=f32) + bk_ref[...]
    v_d = jnp.dot(xn_all, wv_ref[...], preferred_element_type=f32) + bv_ref[...]

    # ---- per-head attention (static unroll over H; each head is a static,
    #      lane-aligned window of the dense activations) ----
    o_heads = []
    for h in range(H):
        sl = slice(h * hd, (h + 1) * hd)
        qh = q_d[:, sl].astype(bf16)                                  # (Tq, hd)
        kh = k_d[:, sl].astype(bf16)                                  # (T,  hd)
        vh = v_d[:, sl].astype(bf16)                                  # (T,  hd)
        s = jax.lax.dot_general(qh, kh, (((1,), (1,)), ((), ())),     # q @ k^T
                                preferred_element_type=f32)           # (Tq, T)
        s = s - jnp.max(s, axis=-1, keepdims=True)
        p = jnp.exp(s)
        denom = jnp.sum(p, axis=-1, keepdims=True)                    # (Tq, 1)
        oh = jnp.dot(p.astype(bf16), vh, preferred_element_type=f32)  # (Tq, hd)
        # deferred softmax normalization: Tq*hd multiplies instead of Tq*T
        o_heads.append(oh * pl.reciprocal(denom, approx=True))
    o_dense = jnp.concatenate(o_heads, axis=-1).astype(bf16)          # (Tq, D)

    # ---- output projection: single full-depth (K = D) matmul + residual ----
    x1 = xq + (jnp.dot(o_dense, wproj_ref[...], preferred_element_type=f32)
               + bproj_ref[...])

    # ---- LayerNorm 2 + MLP (exact GELU) + residual ----
    x2 = _layernorm(x1, ln2g, ln2b, eps).astype(bf16)
    h1 = jnp.dot(x2, w1_ref[...], preferred_element_type=f32) + b1_ref[...]
    h1 = _gelu_exact(h1)
    # TODO(synk): for ViT-L-class shapes on v7x, tile the MLP hidden axis
    # (grid axis + f32 accumulator) so w1/w2 do not blow past 64 MiB VMEM.
    h2 = jnp.dot(h1.astype(bf16), w2_ref[...], preferred_element_type=f32) + b2_ref[...]

    o_ref[0] = x1 + h2


def vit_block_forward(x, params, *, n_heads, q_tile=None, eps=1e-6):
    """x: (B, T, D) float32. params hold f32 weights pre-transposed for x @ W."""
    B, T, D = x.shape
    assert D % n_heads == 0, "dim must be divisible by n_heads"
    hd = D // n_heads
    hidden = params["w1"].shape[1]
    assert params["wqkv"].shape == (D, 3 * D)
    assert params["wproj"].shape == (D, D)
    assert params["w2"].shape == (hidden, D)

    if q_tile is None:
        # Whole sequence per grid step: LN1 / K / V computed exactly once.
        q_tile = T
        # TODO(synk): on v7x with B == 1, split T (or heads) over >=2 parallel
        # grid steps so both TensorCores get work.
    assert T % q_tile == 0
    nq = T // q_tile

    f32, bf16 = jnp.float32, jnp.bfloat16
    scale = hd ** (-0.5)

    # --- host-side weight prep (done once): split qkv, fold attention scale ---
    wqkv = params["wqkv"].astype(f32)
    bqkv = params["bqkv"].astype(f32)
    wq = (wqkv[:, :D] * scale).astype(bf16)          # scale folded into Q
    bq = (bqkv[:, :D] * scale).astype(f32)
    wk = wqkv[:, D:2 * D].astype(bf16)
    bk = bqkv[:, D:2 * D].astype(f32)
    wv = wqkv[:, 2 * D:].astype(bf16)
    bv = bqkv[:, 2 * D:].astype(f32)

    operands = (
        x.astype(f32),
        params["ln1_g"].astype(f32), params["ln1_b"].astype(f32),
        wq, bq, wk, bk, wv, bv,
        params["wproj"].astype(bf16), params["bproj"].astype(f32),
        params["ln2_g"].astype(f32), params["ln2_b"].astype(f32),
        params["w1"].astype(bf16), params["b1"].astype(f32),
        params["w2"].astype(bf16), params["b2"].astype(f32),
    )

    def const_spec(arr):
        idx = lambda b, qi, _n=arr.ndim: (0,) * _n
        try:
            # Constant-index weights gain nothing from double buffering; a
            # single buffer halves their resident VMEM (key on v7x's 64 MiB).
            return pl.BlockSpec(arr.shape, idx, pipeline_mode=pl.Buffered(1))
        except (TypeError, AttributeError):
            return pl.BlockSpec(arr.shape, idx)

    in_specs = [pl.BlockSpec((1, T, D), lambda b, qi: (b, 0, 0))]   # x, once
    in_specs += [const_spec(a) for a in operands[1:]]
    out_spec = pl.BlockSpec((1, q_tile, D), lambda b, qi: (b, qi, 0))

    kernel = functools.partial(_block_kernel, n_heads=n_heads, head_dim=hd,
                               q_tile=q_tile, eps=eps)

    return pl.pallas_call(
        kernel,
        out_shape=jax.ShapeDtypeStruct((B, T, D), jnp.float32),
        grid=(B, nq),
        in_specs=in_specs,
        out_specs=out_spec,
        compiler_params=pltpu.CompilerParams(
            dimension_semantics=("parallel", "parallel"),
            # below v7x's 64 MiB/TC physical VMEM; ample on v5e/v6e (128 MiB)
            vmem_limit_bytes=48 * 1024 * 1024),
    )(*operands)


def reference_forward(x, p, *, n_heads, eps=1e-6):
    """Pure-JAX f32 reference mirroring the PyTorch Block.forward (eval mode)."""
    B, T, D = x.shape
    hd = D // n_heads
    scale = hd ** (-0.5)

    def ln(v, g, b):
        mu = jnp.mean(v, -1, keepdims=True)
        var = jnp.mean((v - mu) ** 2, -1, keepdims=True)
        return (v - mu) / jnp.sqrt(var + eps) * g[0] + b[0]

    xn = ln(x, p["ln1_g"], p["ln1_b"])
    qkv = xn @ p["wqkv"] + p["bqkv"][0]
    qkv = qkv.reshape(B, T, 3, n_heads, hd).transpose(2, 0, 3, 1, 4)
    q, k, v = qkv[0], qkv[1], qkv[2]
    attn = jax.nn.softmax(jnp.einsum("bhqd,bhkd->bhqk", q, k) * scale, axis=-1)
    wa = jnp.einsum("bhqk,bhkd->bhqd", attn, v).transpose(0, 2, 1, 3).reshape(B, T, D)
    x1 = x + (wa @ p["wproj"] + p["bproj"][0])
    x2n = ln(x1, p["ln2_g"], p["ln2_b"])
    h = jax.nn.gelu(x2n @ p["w1"] + p["b1"][0], approximate=False)
    return x1 + (h @ p["w2"] + p["b2"][0])


if __name__ == "__main__":
    # Small, lane-dense config: D multiple of 128; n_heads=2 -> head_dim=128 so
    # per-head windows of the dense Q/K/V are whole lane tiles; T=8 fills one
    # sublane tile exactly.
    B, T, D = 2, 8, 256
    n_heads = 2
    mlp_ratio = 4.0
    hidden = int(D * mlp_ratio)      # 1024

    key = jax.random.PRNGKey(0)
    ks = jax.random.split(key, 8)
    f32 = jnp.float32

    x = jax.random.normal(ks[0], (B, T, D), dtype=f32)

    params = {
        "ln1_g": jnp.ones((1, D), f32),
        "ln1_b": jnp.zeros((1, D), f32),
        "wqkv": 0.05 * jax.random.normal(ks[1], (D, 3 * D), dtype=f32),   # = Wqkv^T
        "bqkv": 0.01 * jax.random.normal(ks[2], (1, 3 * D), dtype=f32),
        "wproj": 0.05 * jax.random.normal(ks[3], (D, D), dtype=f32),      # = Wproj^T
        "bproj": 0.01 * jax.random.normal(ks[4], (1, D), dtype=f32),
        "ln2_g": jnp.ones((1, D), f32),
        "ln2_b": jnp.zeros((1, D), f32),
        "w1": 0.05 * jax.random.normal(ks[5], (D, hidden), dtype=f32),    # = Wfc1^T
        "b1": 0.01 * jax.random.normal(ks[6], (1, hidden), dtype=f32),
        "w2": 0.05 * jax.random.normal(ks[7], (hidden, D), dtype=f32),    # = Wfc2^T
        "b2": jnp.zeros((1, D), f32),
    }

    out = jax.block_until_ready(vit_block_forward(x, params, n_heads=n_heads))
    ref = jax.block_until_ready(reference_forward(x, params, n_heads=n_heads))

    # Kernel uses bf16 MXU operands with f32 accumulation plus an approximate
    # softmax reciprocal; compare against the pure-f32 reference accordingly.
    np.testing.assert_allclose(np.asarray(out), np.asarray(ref), rtol=3e-2, atol=3e-2)
    print("KERNEL_OK")
</pallas_src>

<mosaic_0001>
module attributes {stable_mosaic.version = 11 : i64} {
  func.func @_block_kernel(%arg0: i32, %arg1: i32, %arg2: memref<1x8x256xf32, #tpu.memory_space<vmem>>, %arg3: memref<1x256xf32, #tpu.memory_space<vmem>>, %arg4: memref<1x256xf32, #tpu.memory_space<vmem>>, %arg5: memref<256x256xbf16, #tpu.memory_space<vmem>>, %arg6: memref<1x256xf32, #tpu.memory_space<vmem>>, %arg7: memref<256x256xbf16, #tpu.memory_space<vmem>>, %arg8: memref<1x256xf32, #tpu.memory_space<vmem>>, %arg9: memref<256x256xbf16, #tpu.memory_space<vmem>>, %arg10: memref<1x256xf32, #tpu.memory_space<vmem>>, %arg11: memref<256x256xbf16, #tpu.memory_space<vmem>>, %arg12: memref<1x256xf32, #tpu.memory_space<vmem>>, %arg13: memref<1x256xf32, #tpu.memory_space<vmem>>, %arg14: memref<1x256xf32, #tpu.memory_space<vmem>>, %arg15: memref<256x1024xbf16, #tpu.memory_space<vmem>>, %arg16: memref<1x1024xf32, #tpu.memory_space<vmem>>, %arg17: memref<1024x256xbf16, #tpu.memory_space<vmem>>, %arg18: memref<1x256xf32, #tpu.memory_space<vmem>>, %arg19: memref<1x8x256xf32, #tpu.memory_space<vmem>>) attributes {dimension_semantics = [#tpu.dimension_semantics<parallel>, #tpu.dimension_semantics<parallel>], iteration_bounds = array<i64: 2, 1>, scalar_prefetch = 0 : i64, scratch_operands = 0 : i64, tpu.core_type = #tpu.core_type<tc>, window_params = [{transform_indices = @transform_0, window_bounds = array<i64: 1, 8, 256>}, {pipeline_mode = #tpu.pipeline_mode<synchronous>, transform_indices = @transform_1, window_bounds = array<i64: 1, 256>}, {pipeline_mode = #tpu.pipeline_mode<synchronous>, transform_indices = @transform_2, window_bounds = array<i64: 1, 256>}, {pipeline_mode = #tpu.pipeline_mode<synchronous>, transform_indices = @transform_3, window_bounds = array<i64: 256, 256>}, {pipeline_mode = #tpu.pipeline_mode<synchronous>, transform_indices = @transform_4, window_bounds = array<i64: 1, 256>}, {pipeline_mode = #tpu.pipeline_mode<synchronous>, transform_indices = @transform_5, window_bounds = array<i64: 256, 256>}, {pipeline_mode = #tpu.pipeline_mode<synchronous>, transform_indices = @transform_6, window_bounds = array<i64: 1, 256>}, {pipeline_mode = #tpu.pipeline_mode<synchronous>, transform_indices = @transform_7, window_bounds = array<i64: 256, 256>}, {pipeline_mode = #tpu.pipeline_mode<synchronous>, transform_indices = @transform_8, window_bounds = array<i64: 1, 256>}, {pipeline_mode = #tpu.pipeline_mode<synchronous>, transform_indices = @transform_9, window_bounds = array<i64: 256, 256>}, {pipeline_mode = #tpu.pipeline_mode<synchronous>, transform_indices = @transform_10, window_bounds = array<i64: 1, 256>}, {pipeline_mode = #tpu.pipeline_mode<synchronous>, transform_indices = @transform_11, window_bounds = array<i64: 1, 256>}, {pipeline_mode = #tpu.pipeline_mode<synchronous>, transform_indices = @transform_12, window_bounds = array<i64: 1, 256>}, {pipeline_mode = #tpu.pipeline_mode<synchronous>, transform_indices = @transform_13, window_bounds = array<i64: 256, 1024>}, {pipeline_mode = #tpu.pipeline_mode<synchronous>, transform_indices = @transform_14, window_bounds = array<i64: 1, 1024>}, {pipeline_mode = #tpu.pipeline_mode<synchronous>, transform_indices = @transform_15, window_bounds = array<i64: 1024, 256>}, {pipeline_mode = #tpu.pipeline_mode<synchronous>, transform_indices = @transform_16, window_bounds = array<i64: 1, 256>}, {transform_indices = @transform_17, window_bounds = array<i64: 1, 8, 256>}]} {
    %c0 = arith.constant 0 : index
    %c0_0 = arith.constant 0 : index
    %c0_1 = arith.constant 0 : index
    %0 = vector.load %arg2[%c0, %c0_0, %c0_1] : memref<1x8x256xf32, #tpu.memory_space<vmem>>, vector<1x8x256xf32>
    %1 = vector.shape_cast %0 : vector<1x8x256xf32> to vector<8x256xf32>
    %c0_2 = arith.constant 0 : index
    %c0_3 = arith.constant 0 : index
    %2 = vector.load %arg3[%c0_2, %c0_3] : memref<1x256xf32, #tpu.memory_space<vmem>>, vector<1x256xf32>
    %c0_4 = arith.constant 0 : index
    %c0_5 = arith.constant 0 : index
    %3 = vector.load %arg4[%c0_4, %c0_5] : memref<1x256xf32, #tpu.memory_space<vmem>>, vector<1x256xf32>
    %c0_6 = arith.constant 0 : index
    %c0_7 = arith.constant 0 : index
    %4 = vector.load %arg13[%c0_6, %c0_7] : memref<1x256xf32, #tpu.memory_space<vmem>>, vector<1x256xf32>
    %c0_8 = arith.constant 0 : index
    %c0_9 = arith.constant 0 : index
    %5 = vector.load %arg14[%c0_8, %c0_9] : memref<1x256xf32, #tpu.memory_space<vmem>>, vector<1x256xf32>
    %cst = arith.constant dense<0.000000e+00> : vector<8xf32>
    %6 = vector.multi_reduction <add>, %1, %cst [1] : vector<8x256xf32> to vector<8xf32>
    %7 = vector.shape_cast %6 : vector<8xf32> to vector<8x1xf32>
    %cst_10 = arith.constant 2.560000e+02 : f32
    %8 = vector.broadcast %cst_10 : f32 to vector<8x1xf32>
    %9 = arith.divf %7, %8 : vector<8x1xf32>
    %10 = vector.broadcast %9 : vector<8x1xf32> to vector<8x256xf32>
    %11 = arith.subf %1, %10 : vector<8x256xf32>
    %12 = arith.mulf %11, %11 : vector<8x256xf32>
    %cst_11 = arith.constant dense<0.000000e+00> : vector<8xf32>
    %13 = vector.multi_reduction <add>, %12, %cst_11 [1] : vector<8x256xf32> to vector<8xf32>
    %14 = vector.shape_cast %13 : vector<8xf32> to vector<8x1xf32>
    %cst_12 = arith.constant 2.560000e+02 : f32
    %15 = vector.broadcast %cst_12 : f32 to vector<8x1xf32>
    %16 = arith.divf %14, %15 : vector<8x1xf32>
    %cst_13 = arith.constant 9.99999997E-7 : f32
    %17 = vector.broadcast %cst_13 : f32 to vector<8x1xf32>
    %18 = arith.addf %16, %17 : vector<8x1xf32>
    %19 = math.rsqrt %18 : vector<8x1xf32>
    %20 = vector.broadcast %19 : vector<8x1xf32> to vector<8x256xf32>
    %21 = arith.mulf %11, %20 : vector<8x256xf32>
    %22 = vector.broadcast %2 : vector<1x256xf32> to vector<8x256xf32>
    %23 = arith.mulf %21, %22 : vector<8x256xf32>
    %24 = vector.broadcast %3 : vector<1x256xf32> to vector<8x256xf32>
    %25 = arith.addf %23, %24 : vector<8x256xf32>
    %26 = arith.truncf %25 : vector<8x256xf32> to vector<8x256xbf16>
    %c0_14 = arith.constant 0 : index
    %c0_15 = arith.constant 0 : index
    %27 = vector.load %arg5[%c0_14, %c0_15] : memref<256x256xbf16, #tpu.memory_space<vmem>>, vector<256x256xbf16>
    %cst_16 = arith.constant dense<0.000000e+00> : vector<8x256xf32>
    %28 = tpu.matmul %26, %27, %cst_16 {dimension_numbers = #tpu.dot_dimension_numbers<[1], [0], [0], [1], [0, 0, 1, 1], [], []>} : vector<8x256xbf16>, vector<256x256xbf16>, vector<8x256xf32> -> vector<8x256xf32>
    %c0_17 = arith.constant 0 : index
    %c0_18 = arith.constant 0 : index
    %29 = vector.load %arg6[%c0_17, %c0_18] : memref<1x256xf32, #tpu.memory_space<vmem>>, vector<1x256xf32>
    %30 = vector.broadcast %29 : vector<1x256xf32> to vector<8x256xf32>
    %31 = arith.addf %28, %30 : vector<8x256xf32>
    %c0_19 = arith.constant 0 : index
    %c0_20 = arith.constant 0 : index
    %32 = vector.load %arg7[%c0_19, %c0_20] : memref<256x256xbf16, #tpu.memory_space<vmem>>, vector<256x256xbf16>
    %cst_21 = arith.constant dense<0.000000e+00> : vector<8x256xf32>
    %33 = tpu.matmul %26, %32, %cst_21 {dimension_numbers = #tpu.dot_dimension_numbers<[1], [0], [0], [1], [0, 0, 1, 1], [], []>} : vector<8x256xbf16>, vector<256x256xbf16>, vector<8x256xf32> -> vector<8x256xf32>
    %c0_22 = arith.constant 0 : index
    %c0_23 = arith.constant 0 : index
    %34 = vector.load %arg8[%c0_22, %c0_23] : memref<1x256xf32, #tpu.memory_space<vmem>>, vector<1x256xf32>
    %35 = vector.broadcast %34 : vector<1x256xf32> to vector<8x256xf32>
    %36 = arith.addf %33, %35 : vector<8x256xf32>
    %c0_24 = arith.constant 0 : index
    %c0_25 = arith.constant 0 : index
    %37 = vector.load %arg9[%c0_24, %c0_25] : memref<256x256xbf16, #tpu.memory_space<vmem>>, vector<256x256xbf16>
    %cst_26 = arith.constant dense<0.000000e+00> : vector<8x256xf32>
    %38 = tpu.matmul %26, %37, %cst_26 {dimension_numbers = #tpu.dot_dimension_numbers<[1], [0], [0], [1], [0, 0, 1, 1], [], []>} : vector<8x256xbf16>, vector<256x256xbf16>, vector<8x256xf32> -> vector<8x256xf32>
    %c0_27 = arith.constant 0 : index
    %c0_28 = arith.constant 0 : index
    %39 = vector.load %arg10[%c0_27, %c0_28] : memref<1x256xf32, #tpu.memory_space<vmem>>, vector<1x256xf32>
    %40 = vector.broadcast %39 : vector<1x256xf32> to vector<8x256xf32>
    %41 = arith.addf %38, %40 : vector<8x256xf32>
    %42 = vector.extract_strided_slice %31 {offsets = [0, 0], sizes = [8, 128], strides = [1, 1]} : vector<8x256xf32> to vector<8x128xf32>
    %43 = arith.truncf %42 : vector<8x128xf32> to vector<8x128xbf16>
    %44 = vector.extract_strided_slice %36 {offsets = [0, 0], sizes = [8, 128], strides = [1, 1]} : vector<8x256xf32> to vector<8x128xf32>
    %45 = arith.truncf %44 : vector<8x128xf32> to vector<8x128xbf16>
    %46 = vector.extract_strided_slice %41 {offsets = [0, 0], sizes = [8, 128], strides = [1, 1]} : vector<8x256xf32> to vector<8x128xf32>
    %47 = arith.truncf %46 : vector<8x128xf32> to vector<8x128xbf16>
    %cst_29 = arith.constant dense<0.000000e+00> : vector<8x8xf32>
    %48 = tpu.matmul %43, %45, %cst_29 {dimension_numbers = #tpu.dot_dimension_numbers<[1], [1], [0], [0], [0, 0, 1, 0], [], []>} : vector<8x128xbf16>, vector<8x128xbf16>, vector<8x8xf32> -> vector<8x8xf32>
    %cst_30 = arith.constant dense<0xFF800000> : vector<8xf32>
    %49 = vector.multi_reduction <maximumf>, %48, %cst_30 [1] : vector<8x8xf32> to vector<8xf32>
    %50 = vector.shape_cast %49 : vector<8xf32> to vector<8x1xf32>
    %51 = vector.broadcast %50 : vector<8x1xf32> to vector<8x8xf32>
    %52 = arith.subf %48, %51 : vector<8x8xf32>
    %53 = math.exp %52 : vector<8x8xf32>
    %cst_31 = arith.constant dense<0.000000e+00> : vector<8xf32>
    %54 = vector.multi_reduction <add>, %53, %cst_31 [1] : vector<8x8xf32> to vector<8xf32>
    %55 = vector.shape_cast %54 : vector<8xf32> to vector<8x1xf32>
    %56 = arith.truncf %53 : vector<8x8xf32> to vector<8x8xbf16>
    %cst_32 = arith.constant dense<0.000000e+00> : vector<8x128xf32>
    %57 = tpu.matmul %56, %47, %cst_32 {dimension_numbers = #tpu.dot_dimension_numbers<[1], [0], [0], [1], [0, 0, 1, 1], [], []>} : vector<8x8xbf16>, vector<8x128xbf16>, vector<8x128xf32> -> vector<8x128xf32>
    %58 = tpu.reciprocal %55 {approx = true} : vector<8x1xf32> -> vector<8x1xf32>
    %59 = vector.broadcast %58 : vector<8x1xf32> to vector<8x128xf32>
    %60 = arith.mulf %57, %59 : vector<8x128xf32>
    %61 = vector.extract_strided_slice %31 {offsets = [0, 128], sizes = [8, 128], strides = [1, 1]} : vector<8x256xf32> to vector<8x128xf32>
    %62 = arith.truncf %61 : vector<8x128xf32> to vector<8x128xbf16>
    %63 = vector.extract_strided_slice %36 {offsets = [0, 128], sizes = [8, 128], strides = [1, 1]} : vector<8x256xf32> to vector<8x128xf32>
    %64 = arith.truncf %63 : vector<8x128xf32> to vector<8x128xbf16>
    %65 = vector.extract_strided_slice %41 {offsets = [0, 128], sizes = [8, 128], strides = [1, 1]} : vector<8x256xf32> to vector<8x128xf32>
    %66 = arith.truncf %65 : vector<8x128xf32> to vector<8x128xbf16>
    %cst_33 = arith.constant dense<0.000000e+00> : vector<8x8xf32>
    %67 = tpu.matmul %62, %64, %cst_33 {dimension_numbers = #tpu.dot_dimension_numbers<[1], [1], [0], [0], [0, 0, 1, 0], [], []>} : vector<8x128xbf16>, vector<8x128xbf16>, vector<8x8xf32> -> vector<8x8xf32>
    %cst_34 = arith.constant dense<0xFF800000> : vector<8xf32>
    %68 = vector.multi_reduction <maximumf>, %67, %cst_34 [1] : vector<8x8xf32> to vector<8xf32>
    %69 = vector.shape_cast %68 : vector<8xf32> to vector<8x1xf32>
    %70 = vector.broadcast %69 : vector<8x1xf32> to vector<8x8xf32>
    %71 = arith.subf %67, %70 : vector<8x8xf32>
    %72 = math.exp %71 : vector<8x8xf32>
    %cst_35 = arith.constant dense<0.000000e+00> : vector<8xf32>
    %73 = vector.multi_reduction <add>, %72, %cst_35 [1] : vector<8x8xf32> to vector<8xf32>
    %74 = vector.shape_cast %73 : vector<8xf32> to vector<8x1xf32>
    %75 = arith.truncf %72 : vector<8x8xf32> to vector<8x8xbf16>
    %cst_36 = arith.constant dense<0.000000e+00> : vector<8x128xf32>
    %76 = tpu.matmul %75, %66, %cst_36 {dimension_numbers = #tpu.dot_dimension_numbers<[1], [0], [0], [1], [0, 0, 1, 1], [], []>} : vector<8x8xbf16>, vector<8x128xbf16>, vector<8x128xf32> -> vector<8x128xf32>
    %77 = tpu.reciprocal %74 {approx = true} : vector<8x1xf32> -> vector<8x1xf32>
    %78 = vector.broadcast %77 : vector<8x1xf32> to vector<8x128xf32>
    %79 = arith.mulf %76, %78 : vector<8x128xf32>
    %80 = tpu.concatenate %60, %79 in 1 : vector<8x128xf32>, vector<8x128xf32> -> vector<8x256xf32>
    %81 = arith.truncf %80 : vector<8x256xf32> to vector<8x256xbf16>
    %c0_37 = arith.constant 0 : index
    %c0_38 = arith.constant 0 : index
    %82 = vector.load %arg11[%c0_37, %c0_38] : memref<256x256xbf16, #tpu.memory_space<vmem>>, vector<256x256xbf16>
    %cst_39 = arith.constant dense<0.000000e+00> : vector<8x256xf32>
    %83 = tpu.matmul %81, %82, %cst_39 {dimension_numbers = #tpu.dot_dimension_numbers<[1], [0], [0], [1], [0, 0, 1, 1], [], []>} : vector<8x256xbf16>, vector<256x256xbf16>, vector<8x256xf32> -> vector<8x256xf32>
    %c0_40 = arith.constant 0 : index
    %c0_41 = arith.constant 0 : index
    %84 = vector.load %arg12[%c0_40, %c0_41] : memref<1x256xf32, #tpu.memory_space<vmem>>, vector<1x256xf32>
    %85 = vector.broadcast %84 : vector<1x256xf32> to vector<8x256xf32>
    %86 = arith.addf %83, %85 : vector<8x256xf32>
    %87 = arith.addf %1, %86 : vector<8x256xf32>
    %cst_42 = arith.constant dense<0.000000e+00> : vector<8xf32>
    %88 = vector.multi_reduction <add>, %87, %cst_42 [1] : vector<8x256xf32> to vector<8xf32>
    %89 = vector.shape_cast %88 : vector<8xf32> to vector<8x1xf32>
    %cst_43 = arith.constant 2.560000e+02 : f32
    %90 = vector.broadcast %cst_43 : f32 to vector<8x1xf32>
    %91 = arith.divf %89, %90 : vector<8x1xf32>
    %92 = vector.broadcast %91 : vector<8x1xf32> to vector<8x256xf32>
    %93 = arith.subf %87, %92 : vector<8x256xf32>
    %94 = arith.mulf %93, %93 : vector<8x256xf32>
    %cst_44 = arith.constant dense<0.000000e+00> : vector<8xf32>
    %95 = vector.multi_reduction <add>, %94, %cst_44 [1] : vector<8x256xf32> to vector<8xf32>
    %96 = vector.shape_cast %95 : vector<8xf32> to vector<8x1xf32>
    %cst_45 = arith.constant 2.560000e+02 : f32
    %97 = vector.broadcast %cst_45 : f32 to vector<8x1xf32>
    %98 = arith.divf %96, %97 : vector<8x1xf32>
    %cst_46 = arith.constant 9.99999997E-7 : f32
    %99 = vector.broadcast %cst_46 : f32 to vector<8x1xf32>
    %100 = arith.addf %98, %99 : vector<8x1xf32>
    %101 = math.rsqrt %100 : vector<8x1xf32>
    %102 = vector.broadcast %101 : vector<8x1xf32> to vector<8x256xf32>
    %103 = arith.mulf %93, %102 : vector<8x256xf32>
    %104 = vector.broadcast %4 : vector<1x256xf32> to vector<8x256xf32>
    %105 = arith.mulf %103, %104 : vector<8x256xf32>
    %106 = vector.broadcast %5 : vector<1x256xf32> to vector<8x256xf32>
    %107 = arith.addf %105, %106 : vector<8x256xf32>
    %108 = arith.truncf %107 : vector<8x256xf32> to vector<8x256xbf16>
    %c0_47 = arith.constant 0 : index
    %c0_48 = arith.constant 0 : index
    %109 = vector.load %arg15[%c0_47, %c0_48] : memref<256x1024xbf16, #tpu.memory_space<vmem>>, vector<256x1024xbf16>
    %cst_49 = arith.constant dense<0.000000e+00> : vector<8x1024xf32>
    %110 = tpu.matmul %108, %109, %cst_49 {dimension_numbers = #tpu.dot_dimension_numbers<[1], [0], [0], [1], [0, 0, 1, 1], [], []>} : vector<8x256xbf16>, vector<256x1024xbf16>, vector<8x1024xf32> -> vector<8x1024xf32>
    %c0_50 = arith.constant 0 : index
    %c0_51 = arith.constant 0 : index
    %111 = vector.load %arg16[%c0_50, %c0_51] : memref<1x1024xf32, #tpu.memory_space<vmem>>, vector<1x1024xf32>
    %112 = vector.broadcast %111 : vector<1x1024xf32> to vector<8x1024xf32>
    %113 = arith.addf %110, %112 : vector<8x1024xf32>
    %cst_52 = arith.constant 5.000000e-01 : f32
    %114 = vector.broadcast %cst_52 : f32 to vector<8x1024xf32>
    %115 = arith.mulf %114, %113 : vector<8x1024xf32>
    %cst_53 = arith.constant 0.707106769 : f32
    %116 = vector.broadcast %cst_53 : f32 to vector<8x1024xf32>
    %117 = arith.mulf %113, %116 : vector<8x1024xf32>
    %118 = math.absf %117 : vector<8x1024xf32>
    %cst_54 = arith.constant 0.327591091 : f32
    %119 = vector.broadcast %cst_54 : f32 to vector<8x1024xf32>
    %120 = arith.mulf %119, %118 : vector<8x1024xf32>
    %cst_55 = arith.constant 1.000000e+00 : f32
    %121 = vector.broadcast %cst_55 : f32 to vector<8x1024xf32>
    %122 = arith.addf %121, %120 : vector<8x1024xf32>
    %cst_56 = arith.constant 1.000000e+00 : f32
    %123 = vector.broadcast %cst_56 : f32 to vector<8x1024xf32>
    %124 = arith.divf %123, %122 : vector<8x1024xf32>
    %cst_57 = arith.constant 1.06140542 : f32
    %125 = vector.broadcast %cst_57 : f32 to vector<8x1024xf32>
    %126 = arith.mulf %125, %124 : vector<8x1024xf32>
    %cst_58 = arith.constant -1.45315206 : f32
    %127 = vector.broadcast %cst_58 : f32 to vector<8x1024xf32>
    %128 = arith.addf %126, %127 : vector<8x1024xf32>
    %129 = arith.mulf %128, %124 : vector<8x1024xf32>
    %cst_59 = arith.constant 1.42141378 : f32
    %130 = vector.broadcast %cst_59 : f32 to vector<8x1024xf32>
    %131 = arith.addf %129, %130 : vector<8x1024xf32>
    %132 = arith.mulf %131, %124 : vector<8x1024xf32>
    %cst_60 = arith.constant -0.284496725 : f32
    %133 = vector.broadcast %cst_60 : f32 to vector<8x1024xf32>
    %134 = arith.addf %132, %133 : vector<8x1024xf32>
    %135 = arith.mulf %134, %124 : vector<8x1024xf32>
    %cst_61 = arith.constant 0.254829586 : f32
    %136 = vector.broadcast %cst_61 : f32 to vector<8x1024xf32>
    %137 = arith.addf %135, %136 : vector<8x1024xf32>
    %138 = arith.mulf %137, %124 : vector<8x1024xf32>
    %cst_62 = arith.constant 0.000000e+00 : f32
    %139 = vector.broadcast %cst_62 : f32 to vector<8x1024xf32>
    %140 = arith.subf %139, %118 : vector<8x1024xf32>
    %141 = arith.mulf %140, %118 : vector<8x1024xf32>
    %142 = math.exp %141 : vector<8x1024xf32>
    %143 = arith.mulf %138, %142 : vector<8x1024xf32>
    %cst_63 = arith.constant 1.000000e+00 : f32
    %144 = vector.broadcast %cst_63 : f32 to vector<8x1024xf32>
    %145 = arith.subf %144, %143 : vector<8x1024xf32>
    %cst_64 = arith.constant 0.000000e+00 : f32
    %146 = vector.broadcast %cst_64 : f32 to vector<8x1024xf32>
    %147 = arith.cmpf oge, %117, %146 : vector<8x1024xf32>
    %cst_65 = arith.constant 0.000000e+00 : f32
    %148 = vector.broadcast %cst_65 : f32 to vector<8x1024xf32>
    %149 = arith.subf %148, %145 : vector<8x1024xf32>
    %150 = arith.select %147, %145, %149 : vector<8x1024xi1>, vector<8x1024xf32>
    %cst_66 = arith.constant 1.000000e+00 : f32
    %151 = vector.broadcast %cst_66 : f32 to vector<8x1024xf32>
    %152 = arith.addf %151, %150 : vector<8x1024xf32>
    %153 = arith.mulf %115, %152 : vector<8x1024xf32>
    %154 = arith.truncf %153 : vector<8x1024xf32> to vector<8x1024xbf16>
    %c0_67 = arith.constant 0 : index
    %c0_68 = arith.constant 0 : index
    %155 = vector.load %arg17[%c0_67, %c0_68] : memref<1024x256xbf16, #tpu.memory_space<vmem>>, vector<1024x256xbf16>
    %cst_69 = arith.constant dense<0.000000e+00> : vector<8x256xf32>
    %156 = tpu.matmul %154, %155, %cst_69 {dimension_numbers = #tpu.dot_dimension_numbers<[1], [0], [0], [1], [0, 0, 1, 1], [], []>} : vector<8x1024xbf16>, vector<1024x256xbf16>, vector<8x256xf32> -> vector<8x256xf32>
    %c0_70 = arith.constant 0 : index
    %c0_71 = arith.constant 0 : index
    %157 = vector.load %arg18[%c0_70, %c0_71] : memref<1x256xf32, #tpu.memory_space<vmem>>, vector<1x256xf32>
    %158 = vector.broadcast %157 : vector<1x256xf32> to vector<8x256xf32>
    %159 = arith.addf %156, %158 : vector<8x256xf32>
    %160 = arith.addf %87, %159 : vector<8x256xf32>
    %c0_72 = arith.constant 0 : index
    %c0_73 = arith.constant 0 : index
    %c0_74 = arith.constant 0 : index
    %161 = vector.load %arg19[%c0_72, %c0_73, %c0_74] : memref<1x8x256xf32, #tpu.memory_space<vmem>>, vector<1x8x256xf32>
    %162 = vector.shape_cast %161 : vector<1x8x256xf32> to vector<8x256xf32>
    %163 = vector.shape_cast %160 : vector<8x256xf32> to vector<1x8x256xf32>
    tpu.vector_store %arg19[%c0_72, %c0_73, %c0_74], %163 {strides = array<i32>} : memref<1x8x256xf32, #tpu.memory_space<vmem>>, vector<1x8x256xf32>,
    return
  }
  func.func @transform_0(%arg0: i32, %arg1: i32) -> (i32, i32, i32) {
    %c0_i32 = arith.constant 0 : i32
    %c0_i32_0 = arith.constant 0 : i32
    %c0_i32_1 = arith.constant 0 : i32
    return %arg0, %c0_i32, %c0_i32_0 : i32, i32, i32
  }
  func.func @transform_1(%arg0: i32, %arg1: i32) -> (i32, i32) {
    %c0_i32 = arith.constant 0 : i32
    %c0_i32_0 = arith.constant 0 : i32
    %c0_i32_1 = arith.constant 0 : i32
    return %c0_i32, %c0_i32_0 : i32, i32
  }
  func.func @transform_2(%arg0: i32, %arg1: i32) -> (i32, i32) {
    %c0_i32 = arith.constant 0 : i32
    %c0_i32_0 = arith.constant 0 : i32
    %c0_i32_1 = arith.constant 0 : i32
    return %c0_i32, %c0_i32_0 : i32, i32
  }
  func.func @transform_3(%arg0: i32, %arg1: i32) -> (i32, i32) {
    %c0_i32 = arith.constant 0 : i32
    %c0_i32_0 = arith.constant 0 : i32
    %c0_i32_1 = arith.constant 0 : i32
    return %c0_i32, %c0_i32_0 : i32, i32
  }
  func.func @transform_4(%arg0: i32, %arg1: i32) -> (i32, i32) {
    %c0_i32 = arith.constant 0 : i32
    %c0_i32_0 = arith.constant 0 : i32
    %c0_i32_1 = arith.constant 0 : i32
    return %c0_i32, %c0_i32_0 : i32, i32
  }
  func.func @transform_5(%arg0: i32, %arg1: i32) -> (i32, i32) {
    %c0_i32 = arith.constant 0 : i32
    %c0_i32_0 = arith.constant 0 : i32
    %c0_i32_1 = arith.constant 0 : i32
    return %c0_i32, %c0_i32_0 : i32, i32
  }
  func.func @transform_6(%arg0: i32, %arg1: i32) -> (i32, i32) {
    %c0_i32 = arith.constant 0 : i32
    %c0_i32_0 = arith.constant 0 : i32
    %c0_i32_1 = arith.constant 0 : i32
    return %c0_i32, %c0_i32_0 : i32, i32
  }
  func.func @transform_7(%arg0: i32, %arg1: i32) -> (i32, i32) {
    %c0_i32 = arith.constant 0 : i32
    %c0_i32_0 = arith.constant 0 : i32
    %c0_i32_1 = arith.constant 0 : i32
    return %c0_i32, %c0_i32_0 : i32, i32
  }
  func.func @transform_8(%arg0: i32, %arg1: i32) -> (i32, i32) {
    %c0_i32 = arith.constant 0 : i32
    %c0_i32_0 = arith.constant 0 : i32
    %c0_i32_1 = arith.constant 0 : i32
    return %c0_i32, %c0_i32_0 : i32, i32
  }
  func.func @transform_9(%arg0: i32, %arg1: i32) -> (i32, i32) {
    %c0_i32 = arith.constant 0 : i32
    %c0_i32_0 = arith.constant 0 : i32
    %c0_i32_1 = arith.constant 0 : i32
    return %c0_i32, %c0_i32_0 : i32, i32
  }
  func.func @transform_10(%arg0: i32, %arg1: i32) -> (i32, i32) {
    %c0_i32 = arith.constant 0 : i32
    %c0_i32_0 = arith.constant 0 : i32
    %c0_i32_1 = arith.constant 0 : i32
    return %c0_i32, %c0_i32_0 : i32, i32
  }
  func.func @transform_11(%arg0: i32, %arg1: i32) -> (i32, i32) {
    %c0_i32 = arith.constant 0 : i32
    %c0_i32_0 = arith.constant 0 : i32
    %c0_i32_1 = arith.constant 0 : i32
    return %c0_i32, %c0_i32_0 : i32, i32
  }
  func.func @transform_12(%arg0: i32, %arg1: i32) -> (i32, i32) {
    %c0_i32 = arith.constant 0 : i32
    %c0_i32_0 = arith.constant 0 : i32
    %c0_i32_1 = arith.constant 0 : i32
    return %c0_i32, %c0_i32_0 : i32, i32
  }
  func.func @transform_13(%arg0: i32, %arg1: i32) -> (i32, i32) {
    %c0_i32 = arith.constant 0 : i32
    %c0_i32_0 = arith.constant 0 : i32
    %c0_i32_1 = arith.constant 0 : i32
    return %c0_i32, %c0_i32_0 : i32, i32
  }
  func.func @transform_14(%arg0: i32, %arg1: i32) -> (i32, i32) {
    %c0_i32 = arith.constant 0 : i32
    %c0_i32_0 = arith.constant 0 : i32
    %c0_i32_1 = arith.constant 0 : i32
    return %c0_i32, %c0_i32_0 : i32, i32
  }
  func.func @transform_15(%arg0: i32, %arg1: i32) -> (i32, i32) {
    %c0_i32 = arith.constant 0 : i32
    %c0_i32_0 = arith.constant 0 : i32
    %c0_i32_1 = arith.constant 0 : i32
    return %c0_i32, %c0_i32_0 : i32, i32
  }
  func.func @transform_16(%arg0: i32, %arg1: i32) -> (i32, i32) {
    %c0_i32 = arith.constant 0 : i32
    %c0_i32_0 = arith.constant 0 : i32
    %c0_i32_1 = arith.constant 0 : i32
    return %c0_i32, %c0_i32_0 : i32, i32
  }
  func.func @transform_17(%arg0: i32, %arg1: i32) -> (i32, i32, i32) {
    %c0_i32 = arith.constant 0 : i32
    %c0_i32_0 = arith.constant 0 : i32
    return %arg0, %arg1, %c0_i32 : i32, i32, i32
  }
}

</mosaic_0001>

<llo_original>
// kernel: tpu_custom_call.1
$region0: #{tpu_custom_call.1}
  #allocation0 [shape = 'u32[]', space=smem, size = 0x4, offset = 0x4, fixed_abs, tag = 'smem constant byte address 0x4 - core index']
  #allocation1 [shape = 'u32[144,128]{1,0:T(1,128)}', space=vmem, size = 0x12000, scoped, tag = 'internal scratch']
  %s0 = inlined_call_operand.hbm [shape: f32[2,8,256], index: 0, kind: input, shape index: {}]
  %s1 = inlined_call_operand.hbm [shape: f32[1,256], index: 1, kind: input, shape index: {}]
  %s2 = inlined_call_operand.vmem [shape: f32[1,256], index: 2, kind: input, shape index: {}]
  %s3 = inlined_call_operand.hbm [shape: bf16[256,256], index: 3, kind: input, shape index: {}]
  %s4 = inlined_call_operand.vmem [shape: f32[1,256], index: 4, kind: input, shape index: {}]
  %s5 = inlined_call_operand.hbm [shape: bf16[256,256], index: 5, kind: input, shape index: {}]
  %s6 = inlined_call_operand.vmem [shape: f32[1,256], index: 6, kind: input, shape index: {}]
  %s7 = inlined_call_operand.hbm [shape: bf16[256,256], index: 7, kind: input, shape index: {}]
  %s8 = inlined_call_operand.vmem [shape: f32[1,256], index: 8, kind: input, shape index: {}]
  %s9 = inlined_call_operand.hbm [shape: bf16[256,256], index: 9, kind: input, shape index: {}]
  %s10 = inlined_call_operand.vmem [shape: f32[1,256], index: 10, kind: input, shape index: {}]
  %s11 = inlined_call_operand.vmem [shape: f32[1,256], index: 11, kind: input, shape index: {}]
  %s12 = inlined_call_operand.hbm [shape: f32[1,256], index: 12, kind: input, shape index: {}]
  %s13 = inlined_call_operand.hbm [shape: bf16[256,1024], index: 13, kind: input, shape index: {}]
  %s14 = inlined_call_operand.vmem [shape: f32[1,1024], index: 14, kind: input, shape index: {}]
  %s15 = inlined_call_operand.hbm [shape: bf16[1024,256], index: 15, kind: input, shape index: {}]
  %s16 = inlined_call_operand.vmem [shape: f32[1,256], index: 16, kind: input, shape index: {}]
  %s17 = inlined_call_operand.hbm [shape: f32[2,8,256], index: 17, kind: output, shape index: {}]
  %s18 = sld [smem:[#allocation0]]
  $region137: #{tpu_custom_call.1} parent=0
    _
  %s20 = ssub.s32 1, %s18
  %s21 = scalar_select 0, %s20, %s18
  $region1: #{tpu_custom_call.1} parent=0
    #allocation2 [shape = 'u8[16384]{0}', space=vmem, size = 0x4000, scoped, tag = 'input window, operand 0']
    #allocation3 [shape = 's32[2]{0}', space=sflag, size = 0x8, scoped, tag = 'scoped memory for tpu_custom_call.1']
    #allocation4 [shape = 's32[2]{0}', space=sflag, size = 0x8, scoped, tag = 'scoped memory for tpu_custom_call.1']
    #allocation5 [shape = 'u8[1024]{0}', space=vmem, size = 0x400, scoped, tag = 'input window, operand 1, single buffered']
    #allocation6 [shape = 's32[1]{0}', space=sflag, size = 0x4, scoped, tag = 'scoped memory for tpu_custom_call.1']
    #allocation7 [shape = 'u8[131072]{0}', space=vmem, size = 0x20000, scoped, tag = 'input window, operand 3, single buffered']
    #allocation8 [shape = 'u8[131072]{0}', space=vmem, size = 0x20000, scoped, tag = 'input window, operand 5, single buffered']
    #allocation9 [shape = 's32[1]{0}', space=sflag, size = 0x4, scoped, tag = 'scoped memory for tpu_custom_call.1']
    #allocation10 [shape = 'u8[131072]{0}', space=vmem, size = 0x20000, scoped, tag = 'input window, operand 7, single buffered']
    #allocation11 [shape = 'u8[131072]{0}', space=vmem, size = 0x20000, scoped, tag = 'input window, operand 9, single buffered']
    #allocation12 [shape = 's32[1]{0}', space=sflag, size = 0x4, scoped, tag = 'scoped memory for tpu_custom_call.1']
    #allocation13 [shape = 'u8[1024]{0}', space=vmem, size = 0x400, scoped, tag = 'input window, operand 12, single buffered']
    #allocation14 [shape = 'u8[524288]{0}', space=vmem, size = 0x80000, scoped, tag = 'input window, operand 13, single buffered']
    #allocation15 [shape = 's32[1]{0}', space=sflag, size = 0x4, scoped, tag = 'scoped memory for tpu_custom_call.1']
    #allocation16 [shape = 'u8[524288]{0}', space=vmem, size = 0x80000, scoped, tag = 'input window, operand 15, single buffered']
    #allocation17 [shape = 'u8[16384]{0}', space=vmem, size = 0x4000, scoped, tag = 'output window, operand 0']
    %22 = vsyncpa [#allocation3], 0
    %s23 = scalar_lea.sflag [#allocation3], 1
    %24 = vsyncpa %s23, 0
    %25 = vsyncpa [#allocation6], 0
    %26 = vsyncpa [#allocation9], 0
    %27 = vsyncpa [#allocation12], 0
    %28 = vsyncpa [#allocation15], 0
    %29 = vsyncpa [#allocation4], 0
    %s30 = scalar_lea.sflag [#allocation4], 1
    %31 = vsyncpa %s30, 0
    loop: start=0, step=1, limit=4
    $region2: #{tpu_custom_call.1} parent=1 // loop_pre_header
      _
    $region3: #{tpu_custom_call.1} parent=1 // loop_header
      %s33 = sphi 0, %s37
      %p34 = scmp.ge.s32.totalorder %s33, 4
      %s40 = sphi 0, %s52
      %s41 = sphi 0, %s48
      %s42 = sphi 0, %s40
      %s43 = sphi 0, %s41
      %s44 = sphi 0, %s42
      %s45 = sphi 0, %s43
      %s55 = sphi 0, %s57
      %s58 = sphi 0, %s55
      %s59 = sphi 0, %s58
      %s75 = sphi 0, %s59
      %s79 = sphi 0, %s79
      %s81 = sphi 0, %s79
      %s82 = sphi 0, %s81
      %s96 = sphi 0, %s82
      %s100 = sphi 0, %s100
      %s102 = sphi 0, %s100
      %s103 = sphi 0, %s102
      %s117 = sphi 0, %s103
      %s121 = sphi 0, %s121
      %s123 = sphi 0, %s121
      %s124 = sphi 0, %s123
      %s138 = sphi 0, %s124
      %s142 = sphi 0, %s142
      %s144 = sphi 0, %s142
      %s145 = sphi 0, %s144
      %s159 = sphi 0, %s145
      %s163 = sphi 0, %s163
      %s165 = sphi 0, %s163
      %s166 = sphi 0, %s165
      %s180 = sphi 0, %s166
      %s184 = sphi 0, %s184
      %s186 = sphi 0, %s184
      %s187 = sphi 0, %s186
      %s201 = sphi 0, %s187
      %s205 = sphi 0, %s205
      %s207 = sphi 0, %s205
      %s208 = sphi 0, %s207
      %s222 = sphi 0, %s208
      %s226 = sphi 0, %s226
      %s228 = sphi 0, %s226
      %s229 = sphi 0, %s228
      %s243 = sphi 0, %s229
      %s247 = sphi 0, %s247
      %s249 = sphi 0, %s247
      %s250 = sphi 0, %s249
      %s264 = sphi 0, %s250
      %s268 = sphi 0, %s268
      %s270 = sphi 0, %s268
      %s271 = sphi 0, %s270
      %s285 = sphi 0, %s271
      %s289 = sphi 0, %s289
      %s291 = sphi 0, %s289
      %s292 = sphi 0, %s291
      %s306 = sphi 0, %s292
      %s310 = sphi 0, %s310
      %s312 = sphi 0, %s310
      %s313 = sphi 0, %s312
      %s327 = sphi 0, %s313
      %s331 = sphi 0, %s331
      %s333 = sphi 0, %s331
      %s334 = sphi 0, %s333
      %s348 = sphi 0, %s334
      %s352 = sphi 0, %s352
      %s354 = sphi 0, %s352
      %s355 = sphi 0, %s354
      %s369 = sphi 0, %s355
      %s373 = sphi 0, %s373
      %s375 = sphi 0, %s373
      %s376 = sphi 0, %s375
      %s390 = sphi 0, %s376
      %s394 = sphi 0, %s394
      %s396 = sphi 0, %s394
      %s397 = sphi 0, %s396
      %s411 = sphi 0, %s397
      %s419 = sphi 0, %s421
      %s422 = sphi 0, %s419
      %s423 = sphi 0, %s422
      %s439 = sphi 0, %s423
    $region4: #{tpu_custom_call.1} parent=1 // loop_header_branch
      %36 = sbr.rel (%p34) target = $region8
    $region5: #{tpu_custom_call.1} parent=1 // loop_body
      %s38 = ssub.s32 %s33, 1
      %s39 = ssub.s32 %s33, 2
      %s46 = sadd.s32 1, %s41
      %p47 = scmp.ge.s32.totalorder %s46, 1
      %s48 = scalar_select %p47, 0, %s46
      %s49 = sadd.s32 1, %s40
      %s50 = scalar_select %p47, %s49, %s40
      %p51 = scmp.ge.s32.totalorder %s50, 2
      %s52 = scalar_select %p51, 0, %s50
      %s53 = ssub.s32 %s40, %s52
      %p54 = scmp.eq.s32.totalorder %s53, 0
      %s56 = sadd.s32 %s55, 1
      %s57 = scalar_select %p54, %s55, %s56
      %p60 = pneg %p54
      %p61 = scmp.eq.s32.totalorder %s33, 1
      %p62 = por %p60, %p61
      %p63 = scmp.ne.s32.totalorder %s55, %s58
      %p64 = scmp.eq.s32.totalorder %s33, 0
      %p65 = por %p63, %p64
      %p66 = scmp.ne.s32.totalorder %s55, %s58
      %p67 = scmp.eq.s32.totalorder %s38, 1
      %p68 = por %p66, %p67
      %p69 = scmp.ne.s32.totalorder %s58, %s59
      %p70 = scmp.eq.s32.totalorder %s38, 0
      %p71 = por %p69, %p70
      %p72 = scmp.ne.s32.totalorder %s58, %s59
      %p73 = scmp.eq.s32.totalorder %s39, 1
      %p74 = por %p72, %p73
      %p76 = scmp.ne.s32.totalorder %s59, %s75
      %p77 = scmp.eq.s32.totalorder %s39, 0
      %p78 = por %p76, %p77
      %s80 = sadd.s32 %s79, 1
      %p83 = scmp.eq.s32.totalorder %s33, 1
      %p84 = scmp.ne.s32.totalorder %s79, %s81
      %p85 = scmp.eq.s32.totalorder %s33, 0
      %p86 = por %p84, %p85
      %p87 = scmp.ne.s32.totalorder %s79, %s81
      %p88 = scmp.eq.s32.totalorder %s38, 1
      %p89 = por %p87, %p88
      %p90 = scmp.ne.s32.totalorder %s81, %s82
      %p91 = scmp.eq.s32.totalorder %s38, 0
      %p92 = por %p90, %p91
      %p93 = scmp.ne.s32.totalorder %s81, %s82
      %p94 = scmp.eq.s32.totalorder %s39, 1
      %p95 = por %p93, %p94
      %p97 = scmp.ne.s32.totalorder %s82, %s96
      %p98 = scmp.eq.s32.totalorder %s39, 0
      %p99 = por %p97, %p98
      %s101 = sadd.s32 %s100, 1
      %p104 = scmp.eq.s32.totalorder %s33, 1
      %p105 = scmp.ne.s32.totalorder %s100, %s102
      %p106 = scmp.eq.s32.totalorder %s33, 0
      %p107 = por %p105, %p106
      %p108 = scmp.ne.s32.totalorder %s100, %s102
      %p109 = scmp.eq.s32.totalorder %s38, 1
      %p110 = por %p108, %p109
      %p111 = scmp.ne.s32.totalorder %s102, %s103
      %p112 = scmp.eq.s32.totalorder %s38, 0
      %p113 = por %p111, %p112
      %p114 = scmp.ne.s32.totalorder %s102, %s103
      %p115 = scmp.eq.s32.totalorder %s39, 1
      %p116 = por %p114, %p115
      %p118 = scmp.ne.s32.totalorder %s103, %s117
      %p119 = scmp.eq.s32.totalorder %s39, 0
      %p120 = por %p118, %p119
      %s122 = sadd.s32 %s121, 1
      %p125 = scmp.eq.s32.totalorder %s33, 1
      %p126 = scmp.ne.s32.totalorder %s121, %s123
      %p127 = scmp.eq.s32.totalorder %s33, 0
      %p128 = por %p126, %p127
      %p129 = scmp.ne.s32.totalorder %s121, %s123
      %p130 = scmp.eq.s32.totalorder %s38, 1
      %p131 = por %p129, %p130
      %p132 = scmp.ne.s32.totalorder %s123, %s124
      %p133 = scmp.eq.s32.totalorder %s38, 0
      %p134 = por %p132, %p133
      %p135 = scmp.ne.s32.totalorder %s123, %s124
      %p136 = scmp.eq.s32.totalorder %s39, 1
      %p137 = por %p135, %p136
      %p139 = scmp.ne.s32.totalorder %s124, %s138
      %p140 = scmp.eq.s32.totalorder %s39, 0
      %p141 = por %p139, %p140
      %s143 = sadd.s32 %s142, 1
      %p146 = scmp.eq.s32.totalorder %s33, 1
      %p147 = scmp.ne.s32.totalorder %s142, %s144
      %p148 = scmp.eq.s32.totalorder %s33, 0
      %p149 = por %p147, %p148
      %p150 = scmp.ne.s32.totalorder %s142, %s144
      %p151 = scmp.eq.s32.totalorder %s38, 1
      %p152 = por %p150, %p151
      %p153 = scmp.ne.s32.totalorder %s144, %s145
      %p154 = scmp.eq.s32.totalorder %s38, 0
      %p155 = por %p153, %p154
      %p156 = scmp.ne.s32.totalorder %s144, %s145
      %p157 = scmp.eq.s32.totalorder %s39, 1
      %p158 = por %p156, %p157
      %p160 = scmp.ne.s32.totalorder %s145, %s159
      %p161 = scmp.eq.s32.totalorder %s39, 0
      %p162 = por %p160, %p161
      %s164 = sadd.s32 %s163, 1
      %p167 = scmp.eq.s32.totalorder %s33, 1
      %p168 = scmp.ne.s32.totalorder %s163, %s165
      %p169 = scmp.eq.s32.totalorder %s33, 0
      %p170 = por %p168, %p169
      %p171 = scmp.ne.s32.totalorder %s163, %s165
      %p172 = scmp.eq.s32.totalorder %s38, 1
      %p173 = por %p171, %p172
      %p174 = scmp.ne.s32.totalorder %s165, %s166
      %p175 = scmp.eq.s32.totalorder %s38, 0
      %p176 = por %p174, %p175
      %p177 = scmp.ne.s32.totalorder %s165, %s166
      %p178 = scmp.eq.s32.totalorder %s39, 1
      %p179 = por %p177, %p178
      %p181 = scmp.ne.s32.totalorder %s166, %s180
      %p182 = scmp.eq.s32.totalorder %s39, 0
      %p183 = por %p181, %p182
      %s185 = sadd.s32 %s184, 1
      %p188 = scmp.eq.s32.totalorder %s33, 1
      %p189 = scmp.ne.s32.totalorder %s184, %s186
      %p190 = scmp.eq.s32.totalorder %s33, 0
      %p191 = por %p189, %p190
      %p192 = scmp.ne.s32.totalorder %s184, %s186
      %p193 = scmp.eq.s32.totalorder %s38, 1
      %p194 = por %p192, %p193
      %p195 = scmp.ne.s32.totalorder %s186, %s187
      %p196 = scmp.eq.s32.totalorder %s38, 0
      %p197 = por %p195, %p196
      %p198 = scmp.ne.s32.totalorder %s186, %s187
      %p199 = scmp.eq.s32.totalorder %s39, 1
      %p200 = por %p198, %p199
      %p202 = scmp.ne.s32.totalorder %s187, %s201
      %p203 = scmp.eq.s32.totalorder %s39, 0
      %p204 = por %p202, %p203
      %s206 = sadd.s32 %s205, 1
      %p209 = scmp.eq.s32.totalorder %s33, 1
      %p210 = scmp.ne.s32.totalorder %s205, %s207
      %p211 = scmp.eq.s32.totalorder %s33, 0
      %p212 = por %p210, %p211
      %p213 = scmp.ne.s32.totalorder %s205, %s207
      %p214 = scmp.eq.s32.totalorder %s38, 1
      %p215 = por %p213, %p214
      %p216 = scmp.ne.s32.totalorder %s207, %s208
      %p217 = scmp.eq.s32.totalorder %s38, 0
      %p218 = por %p216, %p217
      %p219 = scmp.ne.s32.totalorder %s207, %s208
      %p220 = scmp.eq.s32.totalorder %s39, 1
      %p221 = por %p219, %p220
      %p223 = scmp.ne.s32.totalorder %s208, %s222
      %p224 = scmp.eq.s32.totalorder %s39, 0
      %p225 = por %p223, %p224
      %s227 = sadd.s32 %s226, 1
      %p230 = scmp.eq.s32.totalorder %s33, 1
      %p231 = scmp.ne.s32.totalorder %s226, %s228
      %p232 = scmp.eq.s32.totalorder %s33, 0
      %p233 = por %p231, %p232
      %p234 = scmp.ne.s32.totalorder %s226, %s228
      %p235 = scmp.eq.s32.totalorder %s38, 1
      %p236 = por %p234, %p235
      %p237 = scmp.ne.s32.totalorder %s228, %s229
      %p238 = scmp.eq.s32.totalorder %s38, 0
      %p239 = por %p237, %p238
      %p240 = scmp.ne.s32.totalorder %s228, %s229
      %p241 = scmp.eq.s32.totalorder %s39, 1
      %p242 = por %p240, %p241
      %p244 = scmp.ne.s32.totalorder %s229, %s243
      %p245 = scmp.eq.s32.totalorder %s39, 0
      %p246 = por %p244, %p245
      %s248 = sadd.s32 %s247, 1
      %p251 = scmp.eq.s32.totalorder %s33, 1
      %p252 = scmp.ne.s32.totalorder %s247, %s249
      %p253 = scmp.eq.s32.totalorder %s33, 0
      %p254 = por %p252, %p253
      %p255 = scmp.ne.s32.totalorder %s247, %s249
      %p256 = scmp.eq.s32.totalorder %s38, 1
      %p257 = por %p255, %p256
      %p258 = scmp.ne.s32.totalorder %s249, %s250
      %p259 = scmp.eq.s32.totalorder %s38, 0
      %p260 = por %p258, %p259
      %p261 = scmp.ne.s32.totalorder %s249, %s250
      %p262 = scmp.eq.s32.totalorder %s39, 1
      %p263 = por %p261, %p262
      %p265 = scmp.ne.s32.totalorder %s250, %s264
      %p266 = scmp.eq.s32.totalorder %s39, 0
      %p267 = por %p265, %p266
      %s269 = sadd.s32 %s268, 1
      %p272 = scmp.eq.s32.totalorder %s33, 1
      %p273 = scmp.ne.s32.totalorder %s268, %s270
      %p274 = scmp.eq.s32.totalorder %s33, 0
      %p275 = por %p273, %p274
      %p276 = scmp.ne.s32.totalorder %s268, %s270
      %p277 = scmp.eq.s32.totalorder %s38, 1
      %p278 = por %p276, %p277
      %p279 = scmp.ne.s32.totalorder %s270, %s271
      %p280 = scmp.eq.s32.totalorder %s38, 0
      %p281 = por %p279, %p280
      %p282 = scmp.ne.s32.totalorder %s270, %s271
      %p283 = scmp.eq.s32.totalorder %s39, 1
      %p284 = por %p282, %p283
      %p286 = scmp.ne.s32.totalorder %s271, %s285
      %p287 = scmp.eq.s32.totalorder %s39, 0
      %p288 = por %p286, %p287
      %s290 = sadd.s32 %s289, 1
      %p293 = scmp.eq.s32.totalorder %s33, 1
      %p294 = scmp.ne.s32.totalorder %s289, %s291
      %p295 = scmp.eq.s32.totalorder %s33, 0
      %p296 = por %p294, %p295
      %p297 = scmp.ne.s32.totalorder %s289, %s291
      %p298 = scmp.eq.s32.totalorder %s38, 1
      %p299 = por %p297, %p298
      %p300 = scmp.ne.s32.totalorder %s291, %s292
      %p301 = scmp.eq.s32.totalorder %s38, 0
      %p302 = por %p300, %p301
      %p303 = scmp.ne.s32.totalorder %s291, %s292
      %p304 = scmp.eq.s32.totalorder %s39, 1
      %p305 = por %p303, %p304
      %p307 = scmp.ne.s32.totalorder %s292, %s306
      %p308 = scmp.eq.s32.totalorder %s39, 0
      %p309 = por %p307, %p308
      %s311 = sadd.s32 %s310, 1
      %p314 = scmp.eq.s32.totalorder %s33, 1
      %p315 = scmp.ne.s32.totalorder %s310, %s312
      %p316 = scmp.eq.s32.totalorder %s33, 0
      %p317 = por %p315, %p316
      %p318 = scmp.ne.s32.totalorder %s310, %s312
      %p319 = scmp.eq.s32.totalorder %s38, 1
      %p320 = por %p318, %p319
      %p321 = scmp.ne.s32.totalorder %s312, %s313
      %p322 = scmp.eq.s32.totalorder %s38, 0
      %p323 = por %p321, %p322
      %p324 = scmp.ne.s32.totalorder %s312, %s313
      %p325 = scmp.eq.s32.totalorder %s39, 1
      %p326 = por %p324, %p325
      %p328 = scmp.ne.s32.totalorder %s313, %s327
      %p329 = scmp.eq.s32.totalorder %s39, 0
      %p330 = por %p328, %p329
      %s332 = sadd.s32 %s331, 1
      %p335 = scmp.eq.s32.totalorder %s33, 1
      %p336 = scmp.ne.s32.totalorder %s331, %s333
      %p337 = scmp.eq.s32.totalorder %s33, 0
      %p338 = por %p336, %p337
      %p339 = scmp.ne.s32.totalorder %s331, %s333
      %p340 = scmp.eq.s32.totalorder %s38, 1
      %p341 = por %p339, %p340
      %p342 = scmp.ne.s32.totalorder %s333, %s334
      %p343 = scmp.eq.s32.totalorder %s38, 0
      %p344 = por %p342, %p343
      %p345 = scmp.ne.s32.totalorder %s333, %s334
      %p346 = scmp.eq.s32.totalorder %s39, 1
      %p347 = por %p345, %p346
      %p349 = scmp.ne.s32.totalorder %s334, %s348
      %p350 = scmp.eq.s32.totalorder %s39, 0
      %p351 = por %p349, %p350
      %s353 = sadd.s32 %s352, 1
      %p356 = scmp.eq.s32.totalorder %s33, 1
      %p357 = scmp.ne.s32.totalorder %s352, %s354
      %p358 = scmp.eq.s32.totalorder %s33, 0
      %p359 = por %p357, %p358
      %p360 = scmp.ne.s32.totalorder %s352, %s354
      %p361 = scmp.eq.s32.totalorder %s38, 1
      %p362 = por %p360, %p361
      %p363 = scmp.ne.s32.totalorder %s354, %s355
      %p364 = scmp.eq.s32.totalorder %s38, 0
      %p365 = por %p363, %p364
      %p366 = scmp.ne.s32.totalorder %s354, %s355
      %p367 = scmp.eq.s32.totalorder %s39, 1
      %p368 = por %p366, %p367
      %p370 = scmp.ne.s32.totalorder %s355, %s369
      %p371 = scmp.eq.s32.totalorder %s39, 0
      %p372 = por %p370, %p371
      %s374 = sadd.s32 %s373, 1
      %p377 = scmp.eq.s32.totalorder %s33, 1
      %p378 = scmp.ne.s32.totalorder %s373, %s375
      %p379 = scmp.eq.s32.totalorder %s33, 0
      %p380 = por %p378, %p379
      %p381 = scmp.ne.s32.totalorder %s373, %s375
      %p382 = scmp.eq.s32.totalorder %s38, 1
      %p383 = por %p381, %p382
      %p384 = scmp.ne.s32.totalorder %s375, %s376
      %p385 = scmp.eq.s32.totalorder %s38, 0
      %p386 = por %p384, %p385
      %p387 = scmp.ne.s32.totalorder %s375, %s376
      %p388 = scmp.eq.s32.totalorder %s39, 1
      %p389 = por %p387, %p388
      %p391 = scmp.ne.s32.totalorder %s376, %s390
      %p392 = scmp.eq.s32.totalorder %s39, 0
      %p393 = por %p391, %p392
      %s395 = sadd.s32 %s394, 1
      %p398 = scmp.eq.s32.totalorder %s33, 1
      %p399 = scmp.ne.s32.totalorder %s394, %s396
      %p400 = scmp.eq.s32.totalorder %s33, 0
      %p401 = por %p399, %p400
      %p402 = scmp.ne.s32.totalorder %s394, %s396
      %p403 = scmp.eq.s32.totalorder %s38, 1
      %p404 = por %p402, %p403
      %p405 = scmp.ne.s32.totalorder %s396, %s397
      %p406 = scmp.eq.s32.totalorder %s38, 0
      %p407 = por %p405, %p406
      %p408 = scmp.ne.s32.totalorder %s396, %s397
      %p409 = scmp.eq.s32.totalorder %s39, 1
      %p410 = por %p408, %p409
      %p412 = scmp.ne.s32.totalorder %s397, %s411
      %p413 = scmp.eq.s32.totalorder %s39, 0
      %p414 = por %p412, %p413
      %s415 = ssub.s32 %s40, %s52
      %s416 = ssub.s32 %s41, %s48
      %s417 = sor.u32 %s415, %s416
      %p418 = scmp.eq.s32.totalorder %s417, 0
      %s420 = sadd.s32 %s419, 1
      %s421 = scalar_select %p418, %s419, %s420
      %p424 = pneg %p418
      %p425 = scmp.eq.s32.totalorder %s33, 1
      %p426 = por %p424, %p425
      %p427 = scmp.ne.s32.totalorder %s419, %s422
      %p428 = scmp.eq.s32.totalorder %s33, 0
      %p429 = por %p427, %p428
      %p430 = scmp.ne.s32.totalorder %s419, %s422
      %p431 = scmp.eq.s32.totalorder %s38, 1
      %p432 = por %p430, %p431
      %p433 = scmp.ne.s32.totalorder %s422, %s423
      %p434 = scmp.eq.s32.totalorder %s38, 0
      %p435 = por %p433, %p434
      %p436 = scmp.ne.s32.totalorder %s422, %s423
      %p437 = scmp.eq.s32.totalorder %s39, 1
      %p438 = por %p436, %p437
      %p440 = scmp.ne.s32.totalorder %s423, %s439
      %p441 = scmp.eq.s32.totalorder %s39, 0
      %p442 = por %p440, %p441
      %p443 = scmp.le.s32.totalorder 1, %s33
      %p444 = scmp.lt.s32.totalorder %s33, 3
      %p445 = pnand %p443, %p444
      %p446 = pneg %p445
      // Predicated region
      $region9: #{tpu_custom_call.1} parent=5 // pred_check
        _
      $region10: #{tpu_custom_call.1} parent=5 // pred_check_branch
        %448 = sbr.rel (%p445) target = $region12
      $region11: #{tpu_custom_call.1} parent=5 // pred_region
        %s449 = ssub.s32 %s33, 1
        // Predicated region
        $region13: #{tpu_custom_call.1} parent=11 // pred_check
          %p450 = pneg %p92
        $region14: #{tpu_custom_call.1} parent=11 // pred_check_branch
          %452 = sbr.rel (%p450) target = $region16
        $region15: #{tpu_custom_call.1} parent=11 // pred_region
          %s454 = ssub.s32 32, 32
          %455 = vsyncadd [#allocation6], %s454
          %s457 = sshll.u32 [#allocation5], 4
          %s458 = int_to_ptr.vmem [resolvable:$true] %s457
          %460 = dma.hbm_to_vmem [thread:$0]  %s1, 32, %s458, [#allocation6]
        $region16: #{tpu_custom_call.1} parent=11 // pred_fallthru
          _
        // Predicated region
        $region17: #{tpu_custom_call.1} parent=11 // pred_check
          %p461 = pneg %p113
        $region18: #{tpu_custom_call.1} parent=11 // pred_check_branch
          %463 = sbr.rel (%p461) target = $region20
        $region19: #{tpu_custom_call.1} parent=11 // pred_region
          _
        $region20: #{tpu_custom_call.1} parent=11 // pred_fallthru
          _
        // Predicated region
        $region21: #{tpu_custom_call.1} parent=11 // pred_check
          %p464 = pneg %p134
        $region22: #{tpu_custom_call.1} parent=11 // pred_check_branch
          %466 = sbr.rel (%p464) target = $region24
        $region23: #{tpu_custom_call.1} parent=11 // pred_region
          %s468 = ssub.s32 4096, 4096
          %469 = vsyncadd [#allocation6], %s468
          %s470 = sshll.u32 [#allocation7], 4
          %s471 = int_to_ptr.vmem [resolvable:$true] %s470
          %476 = dma.hbm_to_vmem [thread:$0]  %s3, 4096, %s471, [#allocation6], 128, 128, 8
        $region24: #{tpu_custom_call.1} parent=11 // pred_fallthru
          _
        // Predicated region
        $region25: #{tpu_custom_call.1} parent=11 // pred_check
          %p477 = pneg %p155
        $region26: #{tpu_custom_call.1} parent=11 // pred_check_branch
          %479 = sbr.rel (%p477) target = $region28
        $region27: #{tpu_custom_call.1} parent=11 // pred_region
          _
        $region28: #{tpu_custom_call.1} parent=11 // pred_fallthru
          _
        // Predicated region
        $region29: #{tpu_custom_call.1} parent=11 // pred_check
          %p480 = pneg %p176
        $region30: #{tpu_custom_call.1} parent=11 // pred_check_branch
          %482 = sbr.rel (%p480) target = $region32
        $region31: #{tpu_custom_call.1} parent=11 // pred_region
          %s484 = ssub.s32 4096, 4096
          %485 = vsyncadd [#allocation9], %s484
          %s486 = sshll.u32 [#allocation8], 4
          %s487 = int_to_ptr.vmem [resolvable:$true] %s486
          %492 = dma.hbm_to_vmem [thread:$0]  %s5, 4096, %s487, [#allocation9], 128, 128, 8
        $region32: #{tpu_custom_call.1} parent=11 // pred_fallthru
          _
        // Predicated region
        $region33: #{tpu_custom_call.1} parent=11 // pred_check
          %p493 = pneg %p197
        $region34: #{tpu_custom_call.1} parent=11 // pred_check_branch
          %495 = sbr.rel (%p493) target = $region36
        $region35: #{tpu_custom_call.1} parent=11 // pred_region
          _
        $region36: #{tpu_custom_call.1} parent=11 // pred_fallthru
          _
        // Predicated region
        $region37: #{tpu_custom_call.1} parent=11 // pred_check
          %p496 = pneg %p218
        $region38: #{tpu_custom_call.1} parent=11 // pred_check_branch
          %498 = sbr.rel (%p496) target = $region40
        $region39: #{tpu_custom_call.1} parent=11 // pred_region
          %s500 = ssub.s32 4096, 4096
          %501 = vsyncadd [#allocation9], %s500
          %s502 = sshll.u32 [#allocation10], 4
          %s503 = int_to_ptr.vmem [resolvable:$true] %s502
          %508 = dma.hbm_to_vmem [thread:$0]  %s7, 4096, %s503, [#allocation9], 128, 128, 8
        $region40: #{tpu_custom_call.1} parent=11 // pred_fallthru
          _
        // Predicated region
        $region41: #{tpu_custom_call.1} parent=11 // pred_check
          %p509 = pneg %p239
        $region42: #{tpu_custom_call.1} parent=11 // pred_check_branch
          %511 = sbr.rel (%p509) target = $region44
        $region43: #{tpu_custom_call.1} parent=11 // pred_region
          _
        $region44: #{tpu_custom_call.1} parent=11 // pred_fallthru
          _
        // Predicated region
        $region45: #{tpu_custom_call.1} parent=11 // pred_check
          %p512 = pneg %p260
        $region46: #{tpu_custom_call.1} parent=11 // pred_check_branch
          %514 = sbr.rel (%p512) target = $region48
        $region47: #{tpu_custom_call.1} parent=11 // pred_region
          %s516 = ssub.s32 4096, 4096
          %517 = vsyncadd [#allocation12], %s516
          %s518 = sshll.u32 [#allocation11], 4
          %s519 = int_to_ptr.vmem [resolvable:$true] %s518
          %524 = dma.hbm_to_vmem [thread:$0]  %s9, 4096, %s519, [#allocation12], 128, 128, 8
        $region48: #{tpu_custom_call.1} parent=11 // pred_fallthru
          _
        // Predicated region
        $region49: #{tpu_custom_call.1} parent=11 // pred_check
          %p525 = pneg %p281
        $region50: #{tpu_custom_call.1} parent=11 // pred_check_branch
          %527 = sbr.rel (%p525) target = $region52
        $region51: #{tpu_custom_call.1} parent=11 // pred_region
          _
        $region52: #{tpu_custom_call.1} parent=11 // pred_fallthru
          _
        // Predicated region
        $region53: #{tpu_custom_call.1} parent=11 // pred_check
          %p528 = pneg %p302
        $region54: #{tpu_custom_call.1} parent=11 // pred_check_branch
          %530 = sbr.rel (%p528) target = $region56
        $region55: #{tpu_custom_call.1} parent=11 // pred_region
          _
        $region56: #{tpu_custom_call.1} parent=11 // pred_fallthru
          _
        // Predicated region
        $region57: #{tpu_custom_call.1} parent=11 // pred_check
          %p531 = pneg %p323
        $region58: #{tpu_custom_call.1} parent=11 // pred_check_branch
          %533 = sbr.rel (%p531) target = $region60
        $region59: #{tpu_custom_call.1} parent=11 // pred_region
          %s535 = ssub.s32 32, 32
          %536 = vsyncadd [#allocation12], %s535
          %s538 = sshll.u32 [#allocation13], 4
          %s539 = int_to_ptr.vmem [resolvable:$true] %s538
          %541 = dma.hbm_to_vmem [thread:$0]  %s12, 32, %s539, [#allocation12]
        $region60: #{tpu_custom_call.1} parent=11 // pred_fallthru
          _
        // Predicated region
        $region61: #{tpu_custom_call.1} parent=11 // pred_check
          %p542 = pneg %p344
        $region62: #{tpu_custom_call.1} parent=11 // pred_check_branch
          %544 = sbr.rel (%p542) target = $region64
        $region63: #{tpu_custom_call.1} parent=11 // pred_region
          %s546 = ssub.s32 16384, 16384
          %547 = vsyncadd [#allocation15], %s546
          %s548 = sshll.u32 [#allocation14], 4
          %s549 = int_to_ptr.vmem [resolvable:$true] %s548
          %554 = dma.hbm_to_vmem [thread:$0]  %s13, 16384, %s549, [#allocation15], 512, 512, 32
        $region64: #{tpu_custom_call.1} parent=11 // pred_fallthru
          _
        // Predicated region
        $region65: #{tpu_custom_call.1} parent=11 // pred_check
          %p555 = pneg %p365
        $region66: #{tpu_custom_call.1} parent=11 // pred_check_branch
          %557 = sbr.rel (%p555) target = $region68
        $region67: #{tpu_custom_call.1} parent=11 // pred_region
          _
        $region68: #{tpu_custom_call.1} parent=11 // pred_fallthru
          _
        // Predicated region
        $region69: #{tpu_custom_call.1} parent=11 // pred_check
          %p558 = pneg %p386
        $region70: #{tpu_custom_call.1} parent=11 // pred_check_branch
          %560 = sbr.rel (%p558) target = $region72
        $region71: #{tpu_custom_call.1} parent=11 // pred_region
          %s562 = ssub.s32 16384, 16384
          %563 = vsyncadd [#allocation15], %s562
          %s564 = sshll.u32 [#allocation16], 4
          %s565 = int_to_ptr.vmem [resolvable:$true] %s564
          %570 = dma.hbm_to_vmem [thread:$0]  %s15, 16384, %s565, [#allocation15], 128, 128, 8
        $region72: #{tpu_custom_call.1} parent=11 // pred_fallthru
          _
        // Predicated region
        $region73: #{tpu_custom_call.1} parent=11 // pred_check
          %p571 = pneg %p407
        $region74: #{tpu_custom_call.1} parent=11 // pred_check_branch
          %573 = sbr.rel (%p571) target = $region76
        $region75: #{tpu_custom_call.1} parent=11 // pred_region
          _
        $region76: #{tpu_custom_call.1} parent=11 // pred_fallthru
          _
      $region12: #{tpu_custom_call.1} parent=5 // pred_fallthru
        _
      %p574 = scmp.lt.s32.totalorder %s33, 2
      // Predicated region
      $region77: #{tpu_custom_call.1} parent=5 // pred_check
        %p575 = pneg %p574
      $region78: #{tpu_custom_call.1} parent=5 // pred_check_branch
        %577 = sbr.rel (%p575) target = $region80
      $region79: #{tpu_custom_call.1} parent=5 // pred_region
        // Predicated region
        $region81: #{tpu_custom_call.1} parent=79 // pred_check
          %p578 = pneg %p65
        $region82: #{tpu_custom_call.1} parent=79 // pred_check_branch
          %580 = sbr.rel (%p578) target = $region84
        $region83: #{tpu_custom_call.1} parent=79 // pred_region
          %s581 = sand.u32 %s55, 1
          %s582 = scalar_lea.sflag [#allocation3], %s581
          %s583 = sand.u32 %s55, 1
          %s584 = smul.addr %s583, 16
          %s585 = scalar_lea.vmem [#allocation2], %s584
          %s587 = ssub.s32 256, 256
          %588 = vsyncadd %s582, %s587
          %s589 = smul.addr %s40, 2
          %s590 = smul.addr %s589, 128
          %s591 = scalar_lea.hbm %s0, %s590
          %s593 = sshll.u32 %s585, 4
          %s594 = int_to_ptr.vmem [resolvable:$true] %s593
          %596 = dma.hbm_to_vmem [thread:$0]  %s591, 256, %s594, %s582
        $region84: #{tpu_custom_call.1} parent=79 // pred_fallthru
          _
      $region80: #{tpu_custom_call.1} parent=5 // pred_fallthru
        _
      %p597 = scmp.le.s32.totalorder 1, %s33
      %p598 = scmp.lt.s32.totalorder %s33, 3
      %p599 = pnand %p597, %p598
      %p600 = pneg %p599
      // Predicated region
      $region85: #{tpu_custom_call.1} parent=5 // pred_check
        _
      $region86: #{tpu_custom_call.1} parent=5 // pred_check_branch
        %602 = sbr.rel (%p599) target = $region88
      $region87: #{tpu_custom_call.1} parent=5 // pred_region
        %s603 = ssub.s32 %s33, 1
        %s604 = sand.u32 %s58, 1
        %s605 = scalar_lea.sflag [#allocation3], %s604
        %s606 = sand.u32 %s58, 1
        %s607 = smul.addr %s606, 16
        %s608 = scalar_lea.vmem [#allocation2], %s607
        // Predicated region
        $region89: #{tpu_custom_call.1} parent=87 // pred_check
          %p609 = pneg %p71
        $region90: #{tpu_custom_call.1} parent=87 // pred_check_branch
          %611 = sbr.rel (%p609) target = $region92
        $region91: #{tpu_custom_call.1} parent=87 // pred_region
          %612 = dma.done %s605, 256
        $region92: #{tpu_custom_call.1} parent=87 // pred_fallthru
          _
        // Predicated region
        $region93: #{tpu_custom_call.1} parent=87 // pred_check
          %p613 = pneg %p92
        $region94: #{tpu_custom_call.1} parent=87 // pred_check_branch
          %615 = sbr.rel (%p613) target = $region96
        $region95: #{tpu_custom_call.1} parent=87 // pred_region
          %616 = dma.done [#allocation6], 32
        $region96: #{tpu_custom_call.1} parent=87 // pred_fallthru
          _
        // Predicated region
        $region97: #{tpu_custom_call.1} parent=87 // pred_check
          %p617 = pneg %p134
        $region98: #{tpu_custom_call.1} parent=87 // pred_check_branch
          %619 = sbr.rel (%p617) target = $region100
        $region99: #{tpu_custom_call.1} parent=87 // pred_region
          %620 = dma.done [#allocation6], 4096
        $region100: #{tpu_custom_call.1} parent=87 // pred_fallthru
          _
        // Predicated region
        $region101: #{tpu_custom_call.1} parent=87 // pred_check
          %p621 = pneg %p176
        $region102: #{tpu_custom_call.1} parent=87 // pred_check_branch
          %623 = sbr.rel (%p621) target = $region104
        $region103: #{tpu_custom_call.1} parent=87 // pred_region
          %624 = dma.done [#allocation9], 4096
        $region104: #{tpu_custom_call.1} parent=87 // pred_fallthru
          _
        // Predicated region
        $region105: #{tpu_custom_call.1} parent=87 // pred_check
          %p625 = pneg %p218
        $region106: #{tpu_custom_call.1} parent=87 // pred_check_branch
          %627 = sbr.rel (%p625) target = $region108
        $region107: #{tpu_custom_call.1} parent=87 // pred_region
          %628 = dma.done [#allocation9], 4096
        $region108: #{tpu_custom_call.1} parent=87 // pred_fallthru
          _
        // Predicated region
        $region109: #{tpu_custom_call.1} parent=87 // pred_check
          %p629 = pneg %p260
        $region110: #{tpu_custom_call.1} parent=87 // pred_check_branch
          %631 = sbr.rel (%p629) target = $region112
        $region111: #{tpu_custom_call.1} parent=87 // pred_region
          %632 = dma.done [#allocation12], 4096
        $region112: #{tpu_custom_call.1} parent=87 // pred_fallthru
          _
        // Predicated region
        $region113: #{tpu_custom_call.1} parent=87 // pred_check
          %p633 = pneg %p323
        $region114: #{tpu_custom_call.1} parent=87 // pred_check_branch
          %635 = sbr.rel (%p633) target = $region116
        $region115: #{tpu_custom_call.1} parent=87 // pred_region
          %636 = dma.done [#allocation12], 32
        $region116: #{tpu_custom_call.1} parent=87 // pred_fallthru
          _
        // Predicated region
        $region117: #{tpu_custom_call.1} parent=87 // pred_check
          %p637 = pneg %p344
        $region118: #{tpu_custom_call.1} parent=87 // pred_check_branch
          %639 = sbr.rel (%p637) target = $region120
        $region119: #{tpu_custom_call.1} parent=87 // pred_region
          %640 = dma.done [#allocation15], 16384
        $region120: #{tpu_custom_call.1} parent=87 // pred_fallthru
          _
        // Predicated region
        $region121: #{tpu_custom_call.1} parent=87 // pred_check
          %p641 = pneg %p386
        $region122: #{tpu_custom_call.1} parent=87 // pred_check_branch
          %643 = sbr.rel (%p641) target = $region124
        $region123: #{tpu_custom_call.1} parent=87 // pred_region
          %644 = dma.done [#allocation15], 16384
        $region124: #{tpu_custom_call.1} parent=87 // pred_fallthru
          _
        %s645 = sand.u32 %s58, 1
        %s646 = scalar_lea.sflag [#allocation3], %s645
        %s647 = sand.u32 %s58, 1
        %s648 = smul.addr %s647, 16
        %s649 = scalar_lea.vmem [#allocation2], %s648
        %p650 = pneg %p71
        %p651 = pneg %p68
        %p652 = pneg %p92
        %p653 = pneg %p89
        %p654 = pneg %p113
        %p655 = pneg %p110
        %p656 = pneg %p134
        %p657 = pneg %p131
        %p658 = pneg %p155
        %p659 = pneg %p152
        %p660 = pneg %p176
        %p661 = pneg %p173
        %p662 = pneg %p197
        %p663 = pneg %p194
        %p664 = pneg %p218
        %p665 = pneg %p215
        %p666 = pneg %p239
        %p667 = pneg %p236
        %p668 = pneg %p260
        %p669 = pneg %p257
        %p670 = pneg %p281
        %p671 = pneg %p278
        %p672 = pneg %p302
        %p673 = pneg %p299
        %p674 = pneg %p323
        %p675 = pneg %p320
        %p676 = pneg %p344
        %p677 = pneg %p341
        %p678 = pneg %p365
        %p679 = pneg %p362
        %p680 = pneg %p386
        %p681 = pneg %p383
        %p682 = pneg %p407
        %p683 = pneg %p404
        %p684 = pneg %p435
        %p685 = pneg %p432
        %s686 = sand.u32 %s422, 1
        %s687 = scalar_lea.sflag [#allocation4], %s686
        %s688 = sand.u32 %s422, 1
        %s689 = smul.addr %s688, 16
        %s690 = scalar_lea.vmem [#allocation17], %s689
        %v692 = vld [vmem:[%s608] sm:$0xff]
        %v693 = vld [vmem:[%s608 + $0x8] sm:$0xff]
        %v694 = vld [vmem:[#allocation5] sm:$0x3]
        %v695 = vld [vmem:[%s2] sm:$0x3]
        %v696 = vld [vmem:[%s11] sm:$0x3]
        %v697 = vld [vmem:[#allocation13] sm:$0x3]
        %v698 = vadd.f32 %v692, %v693
        %699 = vadd.xlane.f32.xlu0 %v698
        %v700 = vpop.xlane.xlu0 %699
        %v701 = vrcp.pop 256.0
        %v702 = vmul.f32 %v700, %v701
        %v703 = vsub.f32 %v692, %v702
        %v704 = vsub.f32 %v693, %v702
        %v705 = vmul.f32 %v703, %v703
        %v706 = vmul.f32 %v704, %v704
        %v707 = vadd.f32 %v705, %v706
        %708 = vadd.xlane.f32.xlu0 %v707
        %v709 = vpop.xlane.xlu0 %708
        %v710 = vmul.f32 %v709, %v701
        %v711 = vadd.f32 %v710, 1e-06
        %v712 = vrsqrt.pop %v711
        %v713 = vmul.f32 %v703, %v712
        %v714 = vmul.f32 %v704, %v712
        %v716 = vlaneseq
        %v717 = vshrl.u32 %v716, 7
        %v718 = vsub.s32 0, %v717
        %v719 = vrot.slane %v694, %v718
        %v720 = vlaneseq
        %v721 = vshrl.u32 %v720, 7
        %v722 = vsub.s32 1, %v721
        %v723 = vrot.slane %v694, %v722
        %v726 = vmul.f32 %v713, %v719
        %v727 = vmul.f32 %v714, %v723
        %v729 = vlaneseq
        %v730 = vshrl.u32 %v729, 7
        %v731 = vsub.s32 0, %v730
        %v732 = vrot.slane %v695, %v731
        %v733 = vlaneseq
        %v734 = vshrl.u32 %v733, 7
        %v735 = vsub.s32 1, %v734
        %v736 = vrot.slane %v695, %v735
        %v739 = vadd.f32 %v726, %v732
        %v740 = vadd.f32 %v727, %v736
        %v741 = vpack.c.bf16 %v739, %v739
        %v742 = vpack.c.bf16 %v740, %v740
        %v743 = vld [vmem:[#allocation7] sm:$0xff]
        %v744 = vld [vmem:[#allocation7 + $0x8] sm:$0xff]
        %v745 = vld [vmem:[#allocation7 + $0x10] sm:$0xff]
        %v746 = vld [vmem:[#allocation7 + $0x18] sm:$0xff]
        %v747 = vld [vmem:[#allocation7 + $0x20] sm:$0xff]
        %v748 = vld [vmem:[#allocation7 + $0x28] sm:$0xff]
        %v749 = vld [vmem:[#allocation7 + $0x30] sm:$0xff]
        %v750 = vld [vmem:[#allocation7 + $0x38] sm:$0xff]
        %v751 = vld [vmem:[#allocation7 + $0x40] sm:$0xff]
        %v752 = vld [vmem:[#allocation7 + $0x48] sm:$0xff]
        %v753 = vld [vmem:[#allocation7 + $0x50] sm:$0xff]
        %v754 = vld [vmem:[#allocation7 + $0x58] sm:$0xff]
        %v755 = vld [vmem:[#allocation7 + $0x60] sm:$0xff]
        %v756 = vld [vmem:[#allocation7 + $0x68] sm:$0xff]
        %v757 = vld [vmem:[#allocation7 + $0x70] sm:$0xff]
        %v758 = vld [vmem:[#allocation7 + $0x78] sm:$0xff]
        %v759 = vld [vmem:[#allocation7 + $0x80] sm:$0xff]
        %v760 = vld [vmem:[#allocation7 + $0x88] sm:$0xff]
        %v761 = vld [vmem:[#allocation7 + $0x90] sm:$0xff]
        %v762 = vld [vmem:[#allocation7 + $0x98] sm:$0xff]
        %v763 = vld [vmem:[#allocation7 + $0xa0] sm:$0xff]
        %v764 = vld [vmem:[#allocation7 + $0xa8] sm:$0xff]
        %v765 = vld [vmem:[#allocation7 + $0xb0] sm:$0xff]
        %v766 = vld [vmem:[#allocation7 + $0xb8] sm:$0xff]
        %v767 = vld [vmem:[#allocation7 + $0xc0] sm:$0xff]
        %v768 = vld [vmem:[#allocation7 + $0xc8] sm:$0xff]
        %v769 = vld [vmem:[#allocation7 + $0xd0] sm:$0xff]
        %v770 = vld [vmem:[#allocation7 + $0xd8] sm:$0xff]
        %v771 = vld [vmem:[#allocation7 + $0xe0] sm:$0xff]
        %v772 = vld [vmem:[#allocation7 + $0xe8] sm:$0xff]
        %v773 = vld [vmem:[#allocation7 + $0xf0] sm:$0xff]
        %v774 = vld [vmem:[#allocation7 + $0xf8] sm:$0xff]
        %v775 = vld [vmem:[%s4] sm:$0x3]
        %v777 = vlaneseq
        %v778 = vshrl.u32 %v777, 7
        %v779 = vsub.s32 0, %v778
        %v780 = vrot.slane %v775, %v779
        %v781 = vlaneseq
        %v782 = vshrl.u32 %v781, 7
        %v783 = vsub.s32 1, %v782
        %v784 = vrot.slane %v775, %v783
        %v819 = vunpack.c.l.b16 %v743
        %v820 = vunpack.c.h.b16 %v743
        %v821 = vunpack.c.l.b16 %v744
        %v822 = vunpack.c.h.b16 %v744
        %v823 = vunpack.c.l.b16 %v745
        %v824 = vunpack.c.h.b16 %v745
        %v825 = vunpack.c.l.b16 %v746
        %v826 = vunpack.c.h.b16 %v746
        %v827 = vunpack.c.l.b16 %v747
        %v828 = vunpack.c.h.b16 %v747
        %v829 = vunpack.c.l.b16 %v748
        %v830 = vunpack.c.h.b16 %v748
        %v831 = vunpack.c.l.b16 %v749
        %v832 = vunpack.c.h.b16 %v749
        %v833 = vunpack.c.l.b16 %v750
        %v834 = vunpack.c.h.b16 %v750
        %v835 = vunpack.c.l.b16 %v751
        %v836 = vunpack.c.h.b16 %v751
        %v837 = vunpack.c.l.b16 %v752
        %v838 = vunpack.c.h.b16 %v752
        %v839 = vunpack.c.l.b16 %v753
        %v840 = vunpack.c.h.b16 %v753
        %v841 = vunpack.c.l.b16 %v754
        %v842 = vunpack.c.h.b16 %v754
        %v843 = vunpack.c.l.b16 %v755
        %v844 = vunpack.c.h.b16 %v755
        %v845 = vunpack.c.l.b16 %v756
        %v846 = vunpack.c.h.b16 %v756
        %v847 = vunpack.c.l.b16 %v757
        %v848 = vunpack.c.h.b16 %v757
        %v849 = vunpack.c.l.b16 %v758
        %v850 = vunpack.c.h.b16 %v758
        %v851 = vunpack.c.l.b16 %v759
        %v852 = vunpack.c.h.b16 %v759
        %v853 = vunpack.c.l.b16 %v760
        %v854 = vunpack.c.h.b16 %v760
        %v855 = vunpack.c.l.b16 %v761
        %v856 = vunpack.c.h.b16 %v761
        %v857 = vunpack.c.l.b16 %v762
        %v858 = vunpack.c.h.b16 %v762
        %v859 = vunpack.c.l.b16 %v763
        %v860 = vunpack.c.h.b16 %v763
        %v861 = vunpack.c.l.b16 %v764
        %v862 = vunpack.c.h.b16 %v764
        %v863 = vunpack.c.l.b16 %v765
        %v864 = vunpack.c.h.b16 %v765
        %v865 = vunpack.c.l.b16 %v766
        %v866 = vunpack.c.h.b16 %v766
        %v867 = vunpack.c.l.b16 %v767
        %v868 = vunpack.c.h.b16 %v767
        %v869 = vunpack.c.l.b16 %v768
        %v870 = vunpack.c.h.b16 %v768
        %v871 = vunpack.c.l.b16 %v769
        %v872 = vunpack.c.h.b16 %v769
        %v873 = vunpack.c.l.b16 %v770
        %v874 = vunpack.c.h.b16 %v770
        %v875 = vunpack.c.l.b16 %v771
        %v876 = vunpack.c.h.b16 %v771
        %v877 = vunpack.c.l.b16 %v772
        %v878 = vunpack.c.h.b16 %v772
        %v879 = vunpack.c.l.b16 %v773
        %v880 = vunpack.c.h.b16 %v773
        %v881 = vunpack.c.l.b16 %v774
        %v882 = vunpack.c.h.b16 %v774
        %v883 = vpack.c.b16 %v821, %v819
        %v884 = vpack.c.b16 %v822, %v820
        %v885 = vpack.c.b16 %v825, %v823
        %v886 = vpack.c.b16 %v826, %v824
        %v887 = vpack.c.b16 %v829, %v827
        %v888 = vpack.c.b16 %v830, %v828
        %v889 = vpack.c.b16 %v833, %v831
        %v890 = vpack.c.b16 %v834, %v832
        %v891 = vpack.c.b16 %v837, %v835
        %v892 = vpack.c.b16 %v838, %v836
        %v893 = vpack.c.b16 %v841, %v839
        %v894 = vpack.c.b16 %v842, %v840
        %v895 = vpack.c.b16 %v845, %v843
        %v896 = vpack.c.b16 %v846, %v844
        %v897 = vpack.c.b16 %v849, %v847
        %v898 = vpack.c.b16 %v850, %v848
        %v899 = vpack.c.b16 %v853, %v851
        %v900 = vpack.c.b16 %v854, %v852
        %v901 = vpack.c.b16 %v857, %v855
        %v902 = vpack.c.b16 %v858, %v856
        %v903 = vpack.c.b16 %v861, %v859
        %v904 = vpack.c.b16 %v862, %v860
        %v905 = vpack.c.b16 %v865, %v863
        %v906 = vpack.c.b16 %v866, %v864
        %v907 = vpack.c.b16 %v869, %v867
        %v908 = vpack.c.b16 %v870, %v868
        %v909 = vpack.c.b16 %v873, %v871
        %v910 = vpack.c.b16 %v874, %v872
        %v911 = vpack.c.b16 %v877, %v875
        %v912 = vpack.c.b16 %v878, %v876
        %v913 = vpack.c.b16 %v881, %v879
        %v914 = vpack.c.b16 %v882, %v880
        %947 = vmatprep.subr.bf16.mxu0 %v898
        %948 = vmatpush1.bf16.msra.mxu0 %v897
        %949 = vmatprep.subr.bf16.mxu0 %v896
        %950 = vmatpush1.bf16.msra.mxu0 %v895
        %951 = vmatprep.subr.bf16.mxu0 %v894
        %952 = vmatpush1.bf16.msra.mxu0 %v893
        %953 = vmatprep.subr.bf16.mxu0 %v892
        %954 = vmatpush1.bf16.msra.mxu0 %v891
        %955 = vmatprep.subr.bf16.mxu0 %v890
        %956 = vmatpush1.bf16.msra.mxu0 %v889
        %957 = vmatprep.subr.bf16.mxu0 %v888
        %958 = vmatpush1.bf16.msra.mxu0 %v887
        %959 = vmatprep.subr.bf16.mxu0 %v886
        %960 = vmatpush1.bf16.msra.mxu0 %v885
        %961 = vmatprep.subr.bf16.mxu0 %v884
        %962 = vmatpush1.bf16.msra.mxu0 %v883
        %963 = vmatprep.subr.bf16.mxu0 %v914
        %964 = vmatpush2.bf16.msra.mxu0 %v913
        %965 = vmatprep.subr.bf16.mxu0 %v912
        %966 = vmatpush2.bf16.msra.mxu0 %v911
        %967 = vmatprep.subr.bf16.mxu0 %v910
        %968 = vmatpush2.bf16.msra.mxu0 %v909
        %969 = vmatprep.subr.bf16.mxu0 %v908
        %970 = vmatpush2.bf16.msra.mxu0 %v907
        %971 = vmatprep.subr.bf16.mxu0 %v906
        %972 = vmatpush2.bf16.msra.mxu0 %v905
        %973 = vmatprep.subr.bf16.mxu0 %v904
        %974 = vmatpush2.bf16.msra.mxu0 %v903
        %975 = vmatprep.subr.bf16.mxu0 %v902
        %976 = vmatpush2.bf16.msra.mxu0 %v901
        %977 = vmatprep.subr.bf16.mxu0 %v900
        %978 = vmatpush2.bf16.msra.mxu0 %v899
        %979 = vmatprep.mubr.bf16.mxu0 %v742
        %980 = vmatmul.mubr.bf16.gmra.mxu0 %v741
        %v981 = vpop.f32.mrf.mxu0
        %v982 = vadd.f32 %v780, %v981
        %v983 = vpop.f32.mrf.mxu0
        %v984 = vadd.f32 %v784, %v983
        %v985 = vpop.f32.mrf.mxu0
        %v986 = vpop.f32.mrf.mxu0
        %987 = vdwg.mxu0
        %v988 = vld [vmem:[#allocation8] sm:$0xff]
        %v989 = vld [vmem:[#allocation8 + $0x8] sm:$0xff]
        %v990 = vld [vmem:[#allocation8 + $0x10] sm:$0xff]
        %v991 = vld [vmem:[#allocation8 + $0x18] sm:$0xff]
        %v992 = vld [vmem:[#allocation8 + $0x20] sm:$0xff]
        %v993 = vld [vmem:[#allocation8 + $0x28] sm:$0xff]
        %v994 = vld [vmem:[#allocation8 + $0x30] sm:$0xff]
        %v995 = vld [vmem:[#allocation8 + $0x38] sm:$0xff]
        %v996 = vld [vmem:[#allocation8 + $0x40] sm:$0xff]
        %v997 = vld [vmem:[#allocation8 + $0x48] sm:$0xff]
        %v998 = vld [vmem:[#allocation8 + $0x50] sm:$0xff]
        %v999 = vld [vmem:[#allocation8 + $0x58] sm:$0xff]
        %v1000 = vld [vmem:[#allocation8 + $0x60] sm:$0xff]
        %v1001 = vld [vmem:[#allocation8 + $0x68] sm:$0xff]
        %v1002 = vld [vmem:[#allocation8 + $0x70] sm:$0xff]
        %v1003 = vld [vmem:[#allocation8 + $0x78] sm:$0xff]
        %v1004 = vld [vmem:[#allocation8 + $0x80] sm:$0xff]
        %v1005 = vld [vmem:[#allocation8 + $0x88] sm:$0xff]
        %v1006 = vld [vmem:[#allocation8 + $0x90] sm:$0xff]
        %v1007 = vld [vmem:[#allocation8 + $0x98] sm:$0xff]
        %v1008 = vld [vmem:[#allocation8 + $0xa0] sm:$0xff]
        %v1009 = vld [vmem:[#allocation8 + $0xa8] sm:$0xff]
        %v1010 = vld [vmem:[#allocation8 + $0xb0] sm:$0xff]
        %v1011 = vld [vmem:[#allocation8 + $0xb8] sm:$0xff]
        %v1012 = vld [vmem:[#allocation8 + $0xc0] sm:$0xff]
        %v1013 = vld [vmem:[#allocation8 + $0xc8] sm:$0xff]
        %v1014 = vld [vmem:[#allocation8 + $0xd0] sm:$0xff]
        %v1015 = vld [vmem:[#allocation8 + $0xd8] sm:$0xff]
        %v1016 = vld [vmem:[#allocation8 + $0xe0] sm:$0xff]
        %v1017 = vld [vmem:[#allocation8 + $0xe8] sm:$0xff]
        %v1018 = vld [vmem:[#allocation8 + $0xf0] sm:$0xff]
        %v1019 = vld [vmem:[#allocation8 + $0xf8] sm:$0xff]
        %v1020 = vld [vmem:[%s6] sm:$0x3]
        %v1022 = vlaneseq
        %v1023 = vshrl.u32 %v1022, 7
        %v1024 = vsub.s32 0, %v1023
        %v1025 = vrot.slane %v1020, %v1024
        %v1026 = vlaneseq
        %v1027 = vshrl.u32 %v1026, 7
        %v1028 = vsub.s32 1, %v1027
        %v1029 = vrot.slane %v1020, %v1028
        %v1064 = vunpack.c.l.b16 %v988
        %v1065 = vunpack.c.h.b16 %v988
        %v1066 = vunpack.c.l.b16 %v989
        %v1067 = vunpack.c.h.b16 %v989
        %v1068 = vunpack.c.l.b16 %v990
        %v1069 = vunpack.c.h.b16 %v990
        %v1070 = vunpack.c.l.b16 %v991
        %v1071 = vunpack.c.h.b16 %v991
        %v1072 = vunpack.c.l.b16 %v992
        %v1073 = vunpack.c.h.b16 %v992
        %v1074 = vunpack.c.l.b16 %v993
        %v1075 = vunpack.c.h.b16 %v993
        %v1076 = vunpack.c.l.b16 %v994
        %v1077 = vunpack.c.h.b16 %v994
        %v1078 = vunpack.c.l.b16 %v995
        %v1079 = vunpack.c.h.b16 %v995
        %v1080 = vunpack.c.l.b16 %v996
        %v1081 = vunpack.c.h.b16 %v996
        %v1082 = vunpack.c.l.b16 %v997
        %v1083 = vunpack.c.h.b16 %v997
        %v1084 = vunpack.c.l.b16 %v998
        %v1085 = vunpack.c.h.b16 %v998
        %v1086 = vunpack.c.l.b16 %v999
        %v1087 = vunpack.c.h.b16 %v999
        %v1088 = vunpack.c.l.b16 %v1000
        %v1089 = vunpack.c.h.b16 %v1000
        %v1090 = vunpack.c.l.b16 %v1001
        %v1091 = vunpack.c.h.b16 %v1001
        %v1092 = vunpack.c.l.b16 %v1002
        %v1093 = vunpack.c.h.b16 %v1002
        %v1094 = vunpack.c.l.b16 %v1003
        %v1095 = vunpack.c.h.b16 %v1003
        %v1096 = vunpack.c.l.b16 %v1004
        %v1097 = vunpack.c.h.b16 %v1004
        %v1098 = vunpack.c.l.b16 %v1005
        %v1099 = vunpack.c.h.b16 %v1005
        %v1100 = vunpack.c.l.b16 %v1006
        %v1101 = vunpack.c.h.b16 %v1006
        %v1102 = vunpack.c.l.b16 %v1007
        %v1103 = vunpack.c.h.b16 %v1007
        %v1104 = vunpack.c.l.b16 %v1008
        %v1105 = vunpack.c.h.b16 %v1008
        %v1106 = vunpack.c.l.b16 %v1009
        %v1107 = vunpack.c.h.b16 %v1009
        %v1108 = vunpack.c.l.b16 %v1010
        %v1109 = vunpack.c.h.b16 %v1010
        %v1110 = vunpack.c.l.b16 %v1011
        %v1111 = vunpack.c.h.b16 %v1011
        %v1112 = vunpack.c.l.b16 %v1012
        %v1113 = vunpack.c.h.b16 %v1012
        %v1114 = vunpack.c.l.b16 %v1013
        %v1115 = vunpack.c.h.b16 %v1013
        %v1116 = vunpack.c.l.b16 %v1014
        %v1117 = vunpack.c.h.b16 %v1014
        %v1118 = vunpack.c.l.b16 %v1015
        %v1119 = vunpack.c.h.b16 %v1015
        %v1120 = vunpack.c.l.b16 %v1016
        %v1121 = vunpack.c.h.b16 %v1016
        %v1122 = vunpack.c.l.b16 %v1017
        %v1123 = vunpack.c.h.b16 %v1017
        %v1124 = vunpack.c.l.b16 %v1018
        %v1125 = vunpack.c.h.b16 %v1018
        %v1126 = vunpack.c.l.b16 %v1019
        %v1127 = vunpack.c.h.b16 %v1019
        %v1128 = vpack.c.b16 %v1066, %v1064
        %v1129 = vpack.c.b16 %v1067, %v1065
        %v1130 = vpack.c.b16 %v1070, %v1068
        %v1131 = vpack.c.b16 %v1071, %v1069
        %v1132 = vpack.c.b16 %v1074, %v1072
        %v1133 = vpack.c.b16 %v1075, %v1073
        %v1134 = vpack.c.b16 %v1078, %v1076
        %v1135 = vpack.c.b16 %v1079, %v1077
        %v1136 = vpack.c.b16 %v1082, %v1080
        %v1137 = vpack.c.b16 %v1083, %v1081
        %v1138 = vpack.c.b16 %v1086, %v1084
        %v1139 = vpack.c.b16 %v1087, %v1085
        %v1140 = vpack.c.b16 %v1090, %v1088
        %v1141 = vpack.c.b16 %v1091, %v1089
        %v1142 = vpack.c.b16 %v1094, %v1092
        %v1143 = vpack.c.b16 %v1095, %v1093
        %v1144 = vpack.c.b16 %v1098, %v1096
        %v1145 = vpack.c.b16 %v1099, %v1097
        %v1146 = vpack.c.b16 %v1102, %v1100
        %v1147 = vpack.c.b16 %v1103, %v1101
        %v1148 = vpack.c.b16 %v1106, %v1104
        %v1149 = vpack.c.b16 %v1107, %v1105
        %v1150 = vpack.c.b16 %v1110, %v1108
        %v1151 = vpack.c.b16 %v1111, %v1109
        %v1152 = vpack.c.b16 %v1114, %v1112
        %v1153 = vpack.c.b16 %v1115, %v1113
        %v1154 = vpack.c.b16 %v1118, %v1116
        %v1155 = vpack.c.b16 %v1119, %v1117
        %v1156 = vpack.c.b16 %v1122, %v1120
        %v1157 = vpack.c.b16 %v1123, %v1121
        %v1158 = vpack.c.b16 %v1126, %v1124
        %v1159 = vpack.c.b16 %v1127, %v1125
        %1192 = vmatprep.subr.bf16.mxu0 %v1143
        %1193 = vmatpush1.bf16.msra.mxu0 %v1142
        %1194 = vmatprep.subr.bf16.mxu0 %v1141
        %1195 = vmatpush1.bf16.msra.mxu0 %v1140
        %1196 = vmatprep.subr.bf16.mxu0 %v1139
        %1197 = vmatpush1.bf16.msra.mxu0 %v1138
        %1198 = vmatprep.subr.bf16.mxu0 %v1137
        %1199 = vmatpush1.bf16.msra.mxu0 %v1136
        %1200 = vmatprep.subr.bf16.mxu0 %v1135
        %1201 = vmatpush1.bf16.msra.mxu0 %v1134
        %1202 = vmatprep.subr.bf16.mxu0 %v1133
        %1203 = vmatpush1.bf16.msra.mxu0 %v1132
        %1204 = vmatprep.subr.bf16.mxu0 %v1131
        %1205 = vmatpush1.bf16.msra.mxu0 %v1130
        %1206 = vmatprep.subr.bf16.mxu0 %v1129
        %1207 = vmatpush1.bf16.msra.mxu0 %v1128
        %1208 = vmatprep.subr.bf16.mxu0 %v1159
        %1209 = vmatpush2.bf16.msra.mxu0 %v1158
        %1210 = vmatprep.subr.bf16.mxu0 %v1157
        %1211 = vmatpush2.bf16.msra.mxu0 %v1156
        %1212 = vmatprep.subr.bf16.mxu0 %v1155
        %1213 = vmatpush2.bf16.msra.mxu0 %v1154
        %1214 = vmatprep.subr.bf16.mxu0 %v1153
        %1215 = vmatpush2.bf16.msra.mxu0 %v1152
        %1216 = vmatprep.subr.bf16.mxu0 %v1151
        %1217 = vmatpush2.bf16.msra.mxu0 %v1150
        %1218 = vmatprep.subr.bf16.mxu0 %v1149
        %1219 = vmatpush2.bf16.msra.mxu0 %v1148
        %1220 = vmatprep.subr.bf16.mxu0 %v1147
        %1221 = vmatpush2.bf16.msra.mxu0 %v1146
        %1222 = vmatprep.subr.bf16.mxu0 %v1145
        %1223 = vmatpush2.bf16.msra.mxu0 %v1144
        %1224 = vmatprep.mubr.bf16.mxu0 %v742
        %1225 = vmatmul.mubr.bf16.gmra.mxu0 %v741
        %v1226 = vpop.f32.mrf.mxu0
        %v1227 = vadd.f32 %v1025, %v1226
        %v1228 = vpop.f32.mrf.mxu0
        %v1229 = vadd.f32 %v1029, %v1228
        %v1230 = vpop.f32.mrf.mxu0
        %v1231 = vpop.f32.mrf.mxu0
        %1232 = vdwg.mxu0
        %v1233 = vld [vmem:[#allocation10] sm:$0xff]
        %v1234 = vld [vmem:[#allocation10 + $0x8] sm:$0xff]
        %v1235 = vld [vmem:[#allocation10 + $0x10] sm:$0xff]
        %v1236 = vld [vmem:[#allocation10 + $0x18] sm:$0xff]
        %v1237 = vld [vmem:[#allocation10 + $0x20] sm:$0xff]
        %v1238 = vld [vmem:[#allocation10 + $0x28] sm:$0xff]
        %v1239 = vld [vmem:[#allocation10 + $0x30] sm:$0xff]
        %v1240 = vld [vmem:[#allocation10 + $0x38] sm:$0xff]
        %v1241 = vld [vmem:[#allocation10 + $0x40] sm:$0xff]
        %v1242 = vld [vmem:[#allocation10 + $0x48] sm:$0xff]
        %v1243 = vld [vmem:[#allocation10 + $0x50] sm:$0xff]
        %v1244 = vld [vmem:[#allocation10 + $0x58] sm:$0xff]
        %v1245 = vld [vmem:[#allocation10 + $0x60] sm:$0xff]
        %v1246 = vld [vmem:[#allocation10 + $0x68] sm:$0xff]
        %v1247 = vld [vmem:[#allocation10 + $0x70] sm:$0xff]
        %v1248 = vld [vmem:[#allocation10 + $0x78] sm:$0xff]
        %v1249 = vld [vmem:[#allocation10 + $0x80] sm:$0xff]
        %v1250 = vld [vmem:[#allocation10 + $0x88] sm:$0xff]
        %v1251 = vld [vmem:[#allocation10 + $0x90] sm:$0xff]
        %v1252 = vld [vmem:[#allocation10 + $0x98] sm:$0xff]
        %v1253 = vld [vmem:[#allocation10 + $0xa0] sm:$0xff]
        %v1254 = vld [vmem:[#allocation10 + $0xa8] sm:$0xff]
        %v1255 = vld [vmem:[#allocation10 + $0xb0] sm:$0xff]
        %v1256 = vld [vmem:[#allocation10 + $0xb8] sm:$0xff]
        %v1257 = vld [vmem:[#allocation10 + $0xc0] sm:$0xff]
        %v1258 = vld [vmem:[#allocation10 + $0xc8] sm:$0xff]
        %v1259 = vld [vmem:[#allocation10 + $0xd0] sm:$0xff]
        %v1260 = vld [vmem:[#allocation10 + $0xd8] sm:$0xff]
        %v1261 = vld [vmem:[#allocation10 + $0xe0] sm:$0xff]
        %v1262 = vld [vmem:[#allocation10 + $0xe8] sm:$0xff]
        %v1263 = vld [vmem:[#allocation10 + $0xf0] sm:$0xff]
        %v1264 = vld [vmem:[#allocation10 + $0xf8] sm:$0xff]
        %v1265 = vld [vmem:[%s8] sm:$0x3]
        %v1267 = vlaneseq
        %v1268 = vshrl.u32 %v1267, 7
        %v1269 = vsub.s32 0, %v1268
        %v1270 = vrot.slane %v1265, %v1269
        %v1271 = vlaneseq
        %v1272 = vshrl.u32 %v1271, 7
        %v1273 = vsub.s32 1, %v1272
        %v1274 = vrot.slane %v1265, %v1273
        %v1309 = vunpack.c.l.b16 %v1233
        %v1310 = vunpack.c.h.b16 %v1233
        %v1311 = vunpack.c.l.b16 %v1234
        %v1312 = vunpack.c.h.b16 %v1234
        %v1313 = vunpack.c.l.b16 %v1235
        %v1314 = vunpack.c.h.b16 %v1235
        %v1315 = vunpack.c.l.b16 %v1236
        %v1316 = vunpack.c.h.b16 %v1236
        %v1317 = vunpack.c.l.b16 %v1237
        %v1318 = vunpack.c.h.b16 %v1237
        %v1319 = vunpack.c.l.b16 %v1238
        %v1320 = vunpack.c.h.b16 %v1238
        %v1321 = vunpack.c.l.b16 %v1239
        %v1322 = vunpack.c.h.b16 %v1239
        %v1323 = vunpack.c.l.b16 %v1240
        %v1324 = vunpack.c.h.b16 %v1240
        %v1325 = vunpack.c.l.b16 %v1241
        %v1326 = vunpack.c.h.b16 %v1241
        %v1327 = vunpack.c.l.b16 %v1242
        %v1328 = vunpack.c.h.b16 %v1242
        %v1329 = vunpack.c.l.b16 %v1243
        %v1330 = vunpack.c.h.b16 %v1243
        %v1331 = vunpack.c.l.b16 %v1244
        %v1332 = vunpack.c.h.b16 %v1244
        %v1333 = vunpack.c.l.b16 %v1245
        %v1334 = vunpack.c.h.b16 %v1245
        %v1335 = vunpack.c.l.b16 %v1246
        %v1336 = vunpack.c.h.b16 %v1246
        %v1337 = vunpack.c.l.b16 %v1247
        %v1338 = vunpack.c.h.b16 %v1247
        %v1339 = vunpack.c.l.b16 %v1248
        %v1340 = vunpack.c.h.b16 %v1248
        %v1341 = vunpack.c.l.b16 %v1249
        %v1342 = vunpack.c.h.b16 %v1249
        %v1343 = vunpack.c.l.b16 %v1250
        %v1344 = vunpack.c.h.b16 %v1250
        %v1345 = vunpack.c.l.b16 %v1251
        %v1346 = vunpack.c.h.b16 %v1251
        %v1347 = vunpack.c.l.b16 %v1252
        %v1348 = vunpack.c.h.b16 %v1252
        %v1349 = vunpack.c.l.b16 %v1253
        %v1350 = vunpack.c.h.b16 %v1253
        %v1351 = vunpack.c.l.b16 %v1254
        %v1352 = vunpack.c.h.b16 %v1254
        %v1353 = vunpack.c.l.b16 %v1255
        %v1354 = vunpack.c.h.b16 %v1255
        %v1355 = vunpack.c.l.b16 %v1256
        %v1356 = vunpack.c.h.b16 %v1256
        %v1357 = vunpack.c.l.b16 %v1257
        %v1358 = vunpack.c.h.b16 %v1257
        %v1359 = vunpack.c.l.b16 %v1258
        %v1360 = vunpack.c.h.b16 %v1258
        %v1361 = vunpack.c.l.b16 %v1259
        %v1362 = vunpack.c.h.b16 %v1259
        %v1363 = vunpack.c.l.b16 %v1260
        %v1364 = vunpack.c.h.b16 %v1260
        %v1365 = vunpack.c.l.b16 %v1261
        %v1366 = vunpack.c.h.b16 %v1261
        %v1367 = vunpack.c.l.b16 %v1262
        %v1368 = vunpack.c.h.b16 %v1262
        %v1369 = vunpack.c.l.b16 %v1263
        %v1370 = vunpack.c.h.b16 %v1263
        %v1371 = vunpack.c.l.b16 %v1264
        %v1372 = vunpack.c.h.b16 %v1264
        %v1373 = vpack.c.b16 %v1311, %v1309
        %v1374 = vpack.c.b16 %v1312, %v1310
        %v1375 = vpack.c.b16 %v1315, %v1313
        %v1376 = vpack.c.b16 %v1316, %v1314
        %v1377 = vpack.c.b16 %v1319, %v1317
        %v1378 = vpack.c.b16 %v1320, %v1318
        %v1379 = vpack.c.b16 %v1323, %v1321
        %v1380 = vpack.c.b16 %v1324, %v1322
        %v1381 = vpack.c.b16 %v1327, %v1325
        %v1382 = vpack.c.b16 %v1328, %v1326
        %v1383 = vpack.c.b16 %v1331, %v1329
        %v1384 = vpack.c.b16 %v1332, %v1330
        %v1385 = vpack.c.b16 %v1335, %v1333
        %v1386 = vpack.c.b16 %v1336, %v1334
        %v1387 = vpack.c.b16 %v1339, %v1337
        %v1388 = vpack.c.b16 %v1340, %v1338
        %v1389 = vpack.c.b16 %v1343, %v1341
        %v1390 = vpack.c.b16 %v1344, %v1342
        %v1391 = vpack.c.b16 %v1347, %v1345
        %v1392 = vpack.c.b16 %v1348, %v1346
        %v1393 = vpack.c.b16 %v1351, %v1349
        %v1394 = vpack.c.b16 %v1352, %v1350
        %v1395 = vpack.c.b16 %v1355, %v1353
        %v1396 = vpack.c.b16 %v1356, %v1354
        %v1397 = vpack.c.b16 %v1359, %v1357
        %v1398 = vpack.c.b16 %v1360, %v1358
        %v1399 = vpack.c.b16 %v1363, %v1361
        %v1400 = vpack.c.b16 %v1364, %v1362
        %v1401 = vpack.c.b16 %v1367, %v1365
        %v1402 = vpack.c.b16 %v1368, %v1366
        %v1403 = vpack.c.b16 %v1371, %v1369
        %v1404 = vpack.c.b16 %v1372, %v1370
        %1437 = vmatprep.subr.bf16.mxu0 %v1388
        %1438 = vmatpush1.bf16.msra.mxu0 %v1387
        %1439 = vmatprep.subr.bf16.mxu0 %v1386
        %1440 = vmatpush1.bf16.msra.mxu0 %v1385
        %1441 = vmatprep.subr.bf16.mxu0 %v1384
        %1442 = vmatpush1.bf16.msra.mxu0 %v1383
        %1443 = vmatprep.subr.bf16.mxu0 %v1382
        %1444 = vmatpush1.bf16.msra.mxu0 %v1381
        %1445 = vmatprep.subr.bf16.mxu0 %v1380
        %1446 = vmatpush1.bf16.msra.mxu0 %v1379
        %1447 = vmatprep.subr.bf16.mxu0 %v1378
        %1448 = vmatpush1.bf16.msra.mxu0 %v1377
        %1449 = vmatprep.subr.bf16.mxu0 %v1376
        %1450 = vmatpush1.bf16.msra.mxu0 %v1375
        %1451 = vmatprep.subr.bf16.mxu0 %v1374
        %1452 = vmatpush1.bf16.msra.mxu0 %v1373
        %1453 = vmatprep.subr.bf16.mxu0 %v1404
        %1454 = vmatpush2.bf16.msra.mxu0 %v1403
        %1455 = vmatprep.subr.bf16.mxu0 %v1402
        %1456 = vmatpush2.bf16.msra.mxu0 %v1401
        %1457 = vmatprep.subr.bf16.mxu0 %v1400
        %1458 = vmatpush2.bf16.msra.mxu0 %v1399
        %1459 = vmatprep.subr.bf16.mxu0 %v1398
        %1460 = vmatpush2.bf16.msra.mxu0 %v1397
        %1461 = vmatprep.subr.bf16.mxu0 %v1396
        %1462 = vmatpush2.bf16.msra.mxu0 %v1395
        %1463 = vmatprep.subr.bf16.mxu0 %v1394
        %1464 = vmatpush2.bf16.msra.mxu0 %v1393
        %1465 = vmatprep.subr.bf16.mxu0 %v1392
        %1466 = vmatpush2.bf16.msra.mxu0 %v1391
        %1467 = vmatprep.subr.bf16.mxu0 %v1390
        %1468 = vmatpush2.bf16.msra.mxu0 %v1389
        %1469 = vmatprep.mubr.bf16.mxu0 %v742
        %1470 = vmatmul.mubr.bf16.gmra.mxu0 %v741
        %v1471 = vpop.f32.mrf.mxu0
        %v1472 = vadd.f32 %v1270, %v1471
        %v1473 = vpop.f32.mrf.mxu0
        %v1474 = vadd.f32 %v1274, %v1473
        %v1475 = vpop.f32.mrf.mxu0
        %v1476 = vpop.f32.mrf.mxu0
        %1477 = vdwg.mxu0
        %v1478 = vpack.c.bf16 %v982, %v982
        %v1479 = vpack.c.bf16 %v1227, %v1227
        %v1480 = vpack.c.bf16 %v1472, %v1472
        %1481 = vmatprep.subr.bf16.mxu0 0
        %1482 = vmatpush1.bf16.xpose.msra.mxu0 0
        %1483 = vmatprep.subr.bf16.mxu0 0
        %1484 = vmatpush1.bf16.xpose.msra.mxu0 0
        %1485 = vmatprep.subr.bf16.mxu0 0
        %1486 = vmatpush1.bf16.xpose.msra.mxu0 0
        %1487 = vmatprep.subr.bf16.mxu0 0
        %1488 = vmatpush1.bf16.xpose.msra.mxu0 0
        %1489 = vmatprep.subr.bf16.mxu0 0
        %1490 = vmatpush1.bf16.xpose.msra.mxu0 0
        %1491 = vmatprep.subr.bf16.mxu0 0
        %1492 = vmatpush1.bf16.xpose.msra.mxu0 0
        %1493 = vmatprep.subr.bf16.mxu0 0
        %1494 = vmatpush1.bf16.xpose.msra.mxu0 0
        %1495 = vmatprep.subr.bf16.mxu0 0
        %1496 = vmatpush1.bf16.xpose.msra.mxu0 %v1479
        %1497 = vmatprep.subr.bf16.mxu0 0
        %1498 = vmatpush2.bf16.xpose.msra.mxu0 0
        %1499 = vmatprep.subr.bf16.mxu0 0
        %1500 = vmatpush2.bf16.xpose.msra.mxu0 0
        %1501 = vmatprep.subr.bf16.mxu0 0
        %1502 = vmatpush2.bf16.xpose.msra.mxu0 0
        %1503 = vmatprep.subr.bf16.mxu0 0
        %1504 = vmatpush2.bf16.xpose.msra.mxu0 0
        %1505 = vmatprep.subr.bf16.mxu0 0
        %1506 = vmatpush2.bf16.xpose.msra.mxu0 0
        %1507 = vmatprep.subr.bf16.mxu0 0
        %1508 = vmatpush2.bf16.xpose.msra.mxu0 0
        %1509 = vmatprep.subr.bf16.mxu0 0
        %1510 = vmatpush2.bf16.xpose.msra.mxu0 0
        %1511 = vmatprep.subr.bf16.mxu0 0
        %1512 = vmatpush2.bf16.xpose.msra.mxu0 0
        %1513 = vmatprep.mubr.bf16.mxu0 0
        %1514 = vmatmul.mubr.bf16.gmra.mxu0 %v1478
        %v1515 = vpop.f32.mrf.mxu0
        %v1516 = vadd.f32 0.0, %v1515
        %v1517 = vpop.f32.mrf.mxu0
        %v1518 = vpop.f32.mrf.mxu0
        %v1519 = vpop.f32.mrf.mxu0
        %1520 = vdwg.mxu0
        %vm1521 = vcmask 64512
        %v1522 = vsel %vm1521, %v1516, -inf
        %1523 = vmax.xlane.f32.xlu0 %v1522
        %v1524 = vpop.xlane.xlu0 %1523
        %v1525 = vsub.f32 %v1516, %v1524
        %v1526 = vmul.f32 %v1525, 1.442695
        %v1527 = vpow.pop %v1526
        %v1528 = vsel %vm1521, %v1527, 0.0
        %1529 = vadd.xlane.f32.xlu0 %v1528
        %v1530 = vpop.xlane.xlu0 %1529
        %v1531 = vpack.c.bf16 %v1527, %v1527
        %v1533 = vsel %vm1521, %v1531, 0
        %vm1535 = vcmask 1043456
        %v1537 = vsel %vm1535, %v1480, 0
        %1539 = vmatprep.subr.bf16.mxu0 0
        %1540 = vmatpush1.bf16.msra.mxu0 0
        %1541 = vmatprep.subr.bf16.mxu0 0
        %1542 = vmatpush1.bf16.msra.mxu0 0
        %1543 = vmatprep.subr.bf16.mxu0 0
        %1544 = vmatpush1.bf16.msra.mxu0 0
        %1545 = vmatprep.subr.bf16.mxu0 0
        %1546 = vmatpush1.bf16.msra.mxu0 0
        %1547 = vmatprep.subr.bf16.mxu0 0
        %1548 = vmatpush1.bf16.msra.mxu0 0
        %1549 = vmatprep.subr.bf16.mxu0 0
        %1550 = vmatpush1.bf16.msra.mxu0 0
        %1551 = vmatprep.subr.bf16.mxu0 0
        %1552 = vmatpush1.bf16.msra.mxu0 0
        %1553 = vmatprep.subr.bf16.mxu0 0
        %1554 = vmatpush1.bf16.msra.mxu0 %v1537
        %1555 = vmatprep.subr.bf16.mxu0 0
        %1556 = vmatpush2.bf16.msra.mxu0 0
        %1557 = vmatprep.subr.bf16.mxu0 0
        %1558 = vmatpush2.bf16.msra.mxu0 0
        %1559 = vmatprep.subr.bf16.mxu0 0
        %1560 = vmatpush2.bf16.msra.mxu0 0
        %1561 = vmatprep.subr.bf16.mxu0 0
        %1562 = vmatpush2.bf16.msra.mxu0 0
        %1563 = vmatprep.subr.bf16.mxu0 0
        %1564 = vmatpush2.bf16.msra.mxu0 0
        %1565 = vmatprep.subr.bf16.mxu0 0
        %1566 = vmatpush2.bf16.msra.mxu0 0
        %1567 = vmatprep.subr.bf16.mxu0 0
        %1568 = vmatpush2.bf16.msra.mxu0 0
        %1569 = vmatprep.subr.bf16.mxu0 0
        %1570 = vmatpush2.bf16.msra.mxu0 0
        %1571 = vmatprep.mubr.bf16.mxu0 0
        %1572 = vmatmul.mubr.bf16.gmra.mxu0 %v1533
        %v1573 = vpop.f32.mrf.mxu0
        %v1574 = vadd.f32 0.0, %v1573
        %v1575 = vpop.f32.mrf.mxu0
        %v1576 = vpop.f32.mrf.mxu0
        %v1577 = vpop.f32.mrf.mxu0
        %1578 = vdwg.mxu0
        %v1579 = vrcp.pop %v1530
        %v1580 = vmul.f32 %v1574, %v1579
        %v1581 = vpack.c.bf16 %v984, %v984
        %v1582 = vpack.c.bf16 %v1229, %v1229
        %v1583 = vpack.c.bf16 %v1474, %v1474
        %1584 = vmatprep.subr.bf16.mxu0 0
        %1585 = vmatpush1.bf16.xpose.msra.mxu0 0
        %1586 = vmatprep.subr.bf16.mxu0 0
        %1587 = vmatpush1.bf16.xpose.msra.mxu0 0
        %1588 = vmatprep.subr.bf16.mxu0 0
        %1589 = vmatpush1.bf16.xpose.msra.mxu0 0
        %1590 = vmatprep.subr.bf16.mxu0 0
        %1591 = vmatpush1.bf16.xpose.msra.mxu0 0
        %1592 = vmatprep.subr.bf16.mxu0 0
        %1593 = vmatpush1.bf16.xpose.msra.mxu0 0
        %1594 = vmatprep.subr.bf16.mxu0 0
        %1595 = vmatpush1.bf16.xpose.msra.mxu0 0
        %1596 = vmatprep.subr.bf16.mxu0 0
        %1597 = vmatpush1.bf16.xpose.msra.mxu0 0
        %1598 = vmatprep.subr.bf16.mxu0 0
        %1599 = vmatpush1.bf16.xpose.msra.mxu0 %v1582
        %1600 = vmatprep.subr.bf16.mxu0 0
        %1601 = vmatpush2.bf16.xpose.msra.mxu0 0
        %1602 = vmatprep.subr.bf16.mxu0 0
        %1603 = vmatpush2.bf16.xpose.msra.mxu0 0
        %1604 = vmatprep.subr.bf16.mxu0 0
        %1605 = vmatpush2.bf16.xpose.msra.mxu0 0
        %1606 = vmatprep.subr.bf16.mxu0 0
        %1607 = vmatpush2.bf16.xpose.msra.mxu0 0
        %1608 = vmatprep.subr.bf16.mxu0 0
        %1609 = vmatpush2.bf16.xpose.msra.mxu0 0
        %1610 = vmatprep.subr.bf16.mxu0 0
        %1611 = vmatpush2.bf16.xpose.msra.mxu0 0
        %1612 = vmatprep.subr.bf16.mxu0 0
        %1613 = vmatpush2.bf16.xpose.msra.mxu0 0
        %1614 = vmatprep.subr.bf16.mxu0 0
        %1615 = vmatpush2.bf16.xpose.msra.mxu0 0
        %1616 = vmatprep.mubr.bf16.mxu0 0
        %1617 = vmatmul.mubr.bf16.gmra.mxu0 %v1581
        %v1618 = vpop.f32.mrf.mxu0
        %v1619 = vadd.f32 0.0, %v1618
        %v1620 = vpop.f32.mrf.mxu0
        %v1621 = vpop.f32.mrf.mxu0
        %v1622 = vpop.f32.mrf.mxu0
        %1623 = vdwg.mxu0
        %v1624 = vsel %vm1521, %v1619, -inf
        %1625 = vmax.xlane.f32.xlu0 %v1624
        %v1626 = vpop.xlane.xlu0 %1625
        %v1627 = vsub.f32 %v1619, %v1626
        %v1628 = vmul.f32 %v1627, 1.442695
        %v1629 = vpow.pop %v1628
        %v1630 = vsel %vm1521, %v1629, 0.0
        %1631 = vadd.xlane.f32.xlu0 %v1630
        %v1632 = vpop.xlane.xlu0 %1631
        %v1633 = vpack.c.bf16 %v1629, %v1629
        %v1635 = vsel %vm1521, %v1633, 0
        %v1638 = vsel %vm1535, %v1583, 0
        %1640 = vmatprep.subr.bf16.mxu0 0
        %1641 = vmatpush1.bf16.msra.mxu0 0
        %1642 = vmatprep.subr.bf16.mxu0 0
        %1643 = vmatpush1.bf16.msra.mxu0 0
        %1644 = vmatprep.subr.bf16.mxu0 0
        %1645 = vmatpush1.bf16.msra.mxu0 0
        %1646 = vmatprep.subr.bf16.mxu0 0
        %1647 = vmatpush1.bf16.msra.mxu0 0
        %1648 = vmatprep.subr.bf16.mxu0 0
        %1649 = vmatpush1.bf16.msra.mxu0 0
        %1650 = vmatprep.subr.bf16.mxu0 0
        %1651 = vmatpush1.bf16.msra.mxu0 0
        %1652 = vmatprep.subr.bf16.mxu0 0
        %1653 = vmatpush1.bf16.msra.mxu0 0
        %1654 = vmatprep.subr.bf16.mxu0 0
        %1655 = vmatpush1.bf16.msra.mxu0 %v1638
        %1656 = vmatprep.subr.bf16.mxu0 0
        %1657 = vmatpush2.bf16.msra.mxu0 0
        %1658 = vmatprep.subr.bf16.mxu0 0
        %1659 = vmatpush2.bf16.msra.mxu0 0
        %1660 = vmatprep.subr.bf16.mxu0 0
        %1661 = vmatpush2.bf16.msra.mxu0 0
        %1662 = vmatprep.subr.bf16.mxu0 0
        %1663 = vmatpush2.bf16.msra.mxu0 0
        %1664 = vmatprep.subr.bf16.mxu0 0
        %1665 = vmatpush2.bf16.msra.mxu0 0
        %1666 = vmatprep.subr.bf16.mxu0 0
        %1667 = vmatpush2.bf16.msra.mxu0 0
        %1668 = vmatprep.subr.bf16.mxu0 0
        %1669 = vmatpush2.bf16.msra.mxu0 0
        %1670 = vmatprep.subr.bf16.mxu0 0
        %1671 = vmatpush2.bf16.msra.mxu0 0
        %1672 = vmatprep.mubr.bf16.mxu0 0
        %1673 = vmatmul.mubr.bf16.gmra.mxu0 %v1635
        %v1674 = vpop.f32.mrf.mxu0
        %v1675 = vadd.f32 0.0, %v1674
        %v1676 = vpop.f32.mrf.mxu0
        %v1677 = vpop.f32.mrf.mxu0
        %v1678 = vpop.f32.mrf.mxu0
        %1679 = vdwg.mxu0
        %v1680 = vrcp.pop %v1632
        %v1681 = vmul.f32 %v1675, %v1680
        %v1682 = vpack.c.bf16 %v1580, %v1580
        %v1683 = vpack.c.bf16 %v1681, %v1681
        %v1684 = vld [vmem:[#allocation11] sm:$0xff]
        %v1685 = vld [vmem:[#allocation11 + $0x8] sm:$0xff]
        %v1686 = vld [vmem:[#allocation11 + $0x10] sm:$0xff]
        %v1687 = vld [vmem:[#allocation11 + $0x18] sm:$0xff]
        %v1688 = vld [vmem:[#allocation11 + $0x20] sm:$0xff]
        %v1689 = vld [vmem:[#allocation11 + $0x28] sm:$0xff]
        %v1690 = vld [vmem:[#allocation11 + $0x30] sm:$0xff]
        %v1691 = vld [vmem:[#allocation11 + $0x38] sm:$0xff]
        %v1692 = vld [vmem:[#allocation11 + $0x40] sm:$0xff]
        %v1693 = vld [vmem:[#allocation11 + $0x48] sm:$0xff]
        %v1694 = vld [vmem:[#allocation11 + $0x50] sm:$0xff]
        %v1695 = vld [vmem:[#allocation11 + $0x58] sm:$0xff]
        %v1696 = vld [vmem:[#allocation11 + $0x60] sm:$0xff]
        %v1697 = vld [vmem:[#allocation11 + $0x68] sm:$0xff]
        %v1698 = vld [vmem:[#allocation11 + $0x70] sm:$0xff]
        %v1699 = vld [vmem:[#allocation11 + $0x78] sm:$0xff]
        %v1700 = vld [vmem:[#allocation11 + $0x80] sm:$0xff]
        %v1701 = vld [vmem:[#allocation11 + $0x88] sm:$0xff]
        %v1702 = vld [vmem:[#allocation11 + $0x90] sm:$0xff]
        %v1703 = vld [vmem:[#allocation11 + $0x98] sm:$0xff]
        %v1704 = vld [vmem:[#allocation11 + $0xa0] sm:$0xff]
        %v1705 = vld [vmem:[#allocation11 + $0xa8] sm:$0xff]
        %v1706 = vld [vmem:[#allocation11 + $0xb0] sm:$0xff]
        %v1707 = vld [vmem:[#allocation11 + $0xb8] sm:$0xff]
        %v1708 = vld [vmem:[#allocation11 + $0xc0] sm:$0xff]
        %v1709 = vld [vmem:[#allocation11 + $0xc8] sm:$0xff]
        %v1710 = vld [vmem:[#allocation11 + $0xd0] sm:$0xff]
        %v1711 = vld [vmem:[#allocation11 + $0xd8] sm:$0xff]
        %v1712 = vld [vmem:[#allocation11 + $0xe0] sm:$0xff]
        %v1713 = vld [vmem:[#allocation11 + $0xe8] sm:$0xff]
        %v1714 = vld [vmem:[#allocation11 + $0xf0] sm:$0xff]
        %v1715 = vld [vmem:[#allocation11 + $0xf8] sm:$0xff]
        %v1716 = vld [vmem:[%s10] sm:$0x3]
        %v1718 = vlaneseq
        %v1719 = vshrl.u32 %v1718, 7
        %v1720 = vsub.s32 0, %v1719
        %v1721 = vrot.slane %v1716, %v1720
        %v1722 = vlaneseq
        %v1723 = vshrl.u32 %v1722, 7
        %v1724 = vsub.s32 1, %v1723
        %v1725 = vrot.slane %v1716, %v1724
        %v1760 = vunpack.c.l.b16 %v1684
        %v1761 = vunpack.c.h.b16 %v1684
        %v1762 = vunpack.c.l.b16 %v1685
        %v1763 = vunpack.c.h.b16 %v1685
        %v1764 = vunpack.c.l.b16 %v1686
        %v1765 = vunpack.c.h.b16 %v1686
        %v1766 = vunpack.c.l.b16 %v1687
        %v1767 = vunpack.c.h.b16 %v1687
        %v1768 = vunpack.c.l.b16 %v1688
        %v1769 = vunpack.c.h.b16 %v1688
        %v1770 = vunpack.c.l.b16 %v1689
        %v1771 = vunpack.c.h.b16 %v1689
        %v1772 = vunpack.c.l.b16 %v1690
        %v1773 = vunpack.c.h.b16 %v1690
        %v1774 = vunpack.c.l.b16 %v1691
        %v1775 = vunpack.c.h.b16 %v1691
        %v1776 = vunpack.c.l.b16 %v1692
        %v1777 = vunpack.c.h.b16 %v1692
        %v1778 = vunpack.c.l.b16 %v1693
        %v1779 = vunpack.c.h.b16 %v1693
        %v1780 = vunpack.c.l.b16 %v1694
        %v1781 = vunpack.c.h.b16 %v1694
        %v1782 = vunpack.c.l.b16 %v1695
        %v1783 = vunpack.c.h.b16 %v1695
        %v1784 = vunpack.c.l.b16 %v1696
        %v1785 = vunpack.c.h.b16 %v1696
        %v1786 = vunpack.c.l.b16 %v1697
        %v1787 = vunpack.c.h.b16 %v1697
        %v1788 = vunpack.c.l.b16 %v1698
        %v1789 = vunpack.c.h.b16 %v1698
        %v1790 = vunpack.c.l.b16 %v1699
        %v1791 = vunpack.c.h.b16 %v1699
        %v1792 = vunpack.c.l.b16 %v1700
        %v1793 = vunpack.c.h.b16 %v1700
        %v1794 = vunpack.c.l.b16 %v1701
        %v1795 = vunpack.c.h.b16 %v1701
        %v1796 = vunpack.c.l.b16 %v1702
        %v1797 = vunpack.c.h.b16 %v1702
        %v1798 = vunpack.c.l.b16 %v1703
        %v1799 = vunpack.c.h.b16 %v1703
        %v1800 = vunpack.c.l.b16 %v1704
        %v1801 = vunpack.c.h.b16 %v1704
        %v1802 = vunpack.c.l.b16 %v1705
        %v1803 = vunpack.c.h.b16 %v1705
        %v1804 = vunpack.c.l.b16 %v1706
        %v1805 = vunpack.c.h.b16 %v1706
        %v1806 = vunpack.c.l.b16 %v1707
        %v1807 = vunpack.c.h.b16 %v1707
        %v1808 = vunpack.c.l.b16 %v1708
        %v1809 = vunpack.c.h.b16 %v1708
        %v1810 = vunpack.c.l.b16 %v1709
        %v1811 = vunpack.c.h.b16 %v1709
        %v1812 = vunpack.c.l.b16 %v1710
        %v1813 = vunpack.c.h.b16 %v1710
        %v1814 = vunpack.c.l.b16 %v1711
        %v1815 = vunpack.c.h.b16 %v1711
        %v1816 = vunpack.c.l.b16 %v1712
        %v1817 = vunpack.c.h.b16 %v1712
        %v1818 = vunpack.c.l.b16 %v1713
        %v1819 = vunpack.c.h.b16 %v1713
        %v1820 = vunpack.c.l.b16 %v1714
        %v1821 = vunpack.c.h.b16 %v1714
        %v1822 = vunpack.c.l.b16 %v1715
        %v1823 = vunpack.c.h.b16 %v1715
        %v1824 = vpack.c.b16 %v1762, %v1760
        %v1825 = vpack.c.b16 %v1763, %v1761
        %v1826 = vpack.c.b16 %v1766, %v1764
        %v1827 = vpack.c.b16 %v1767, %v1765
        %v1828 = vpack.c.b16 %v1770, %v1768
        %v1829 = vpack.c.b16 %v1771, %v1769
        %v1830 = vpack.c.b16 %v1774, %v1772
        %v1831 = vpack.c.b16 %v1775, %v1773
        %v1832 = vpack.c.b16 %v1778, %v1776
        %v1833 = vpack.c.b16 %v1779, %v1777
        %v1834 = vpack.c.b16 %v1782, %v1780
        %v1835 = vpack.c.b16 %v1783, %v1781
        %v1836 = vpack.c.b16 %v1786, %v1784
        %v1837 = vpack.c.b16 %v1787, %v1785
        %v1838 = vpack.c.b16 %v1790, %v1788
        %v1839 = vpack.c.b16 %v1791, %v1789
        %v1840 = vpack.c.b16 %v1794, %v1792
        %v1841 = vpack.c.b16 %v1795, %v1793
        %v1842 = vpack.c.b16 %v1798, %v1796
        %v1843 = vpack.c.b16 %v1799, %v1797
        %v1844 = vpack.c.b16 %v1802, %v1800
        %v1845 = vpack.c.b16 %v1803, %v1801
        %v1846 = vpack.c.b16 %v1806, %v1804
        %v1847 = vpack.c.b16 %v1807, %v1805
        %v1848 = vpack.c.b16 %v1810, %v1808
        %v1849 = vpack.c.b16 %v1811, %v1809
        %v1850 = vpack.c.b16 %v1814, %v1812
        %v1851 = vpack.c.b16 %v1815, %v1813
        %v1852 = vpack.c.b16 %v1818, %v1816
        %v1853 = vpack.c.b16 %v1819, %v1817
        %v1854 = vpack.c.b16 %v1822, %v1820
        %v1855 = vpack.c.b16 %v1823, %v1821
        %1888 = vmatprep.subr.bf16.mxu0 %v1839
        %1889 = vmatpush1.bf16.msra.mxu0 %v1838
        %1890 = vmatprep.subr.bf16.mxu0 %v1837
        %1891 = vmatpush1.bf16.msra.mxu0 %v1836
        %1892 = vmatprep.subr.bf16.mxu0 %v1835
        %1893 = vmatpush1.bf16.msra.mxu0 %v1834
        %1894 = vmatprep.subr.bf16.mxu0 %v1833
        %1895 = vmatpush1.bf16.msra.mxu0 %v1832
        %1896 = vmatprep.subr.bf16.mxu0 %v1831
        %1897 = vmatpush1.bf16.msra.mxu0 %v1830
        %1898 = vmatprep.subr.bf16.mxu0 %v1829
        %1899 = vmatpush1.bf16.msra.mxu0 %v1828
        %1900 = vmatprep.subr.bf16.mxu0 %v1827
        %1901 = vmatpush1.bf16.msra.mxu0 %v1826
        %1902 = vmatprep.subr.bf16.mxu0 %v1825
        %1903 = vmatpush1.bf16.msra.mxu0 %v1824
        %1904 = vmatprep.subr.bf16.mxu0 %v1855
        %1905 = vmatpush2.bf16.msra.mxu0 %v1854
        %1906 = vmatprep.subr.bf16.mxu0 %v1853
        %1907 = vmatpush2.bf16.msra.mxu0 %v1852
        %1908 = vmatprep.subr.bf16.mxu0 %v1851
        %1909 = vmatpush2.bf16.msra.mxu0 %v1850
        %1910 = vmatprep.subr.bf16.mxu0 %v1849
        %1911 = vmatpush2.bf16.msra.mxu0 %v1848
        %1912 = vmatprep.subr.bf16.mxu0 %v1847
        %1913 = vmatpush2.bf16.msra.mxu0 %v1846
        %1914 = vmatprep.subr.bf16.mxu0 %v1845
        %1915 = vmatpush2.bf16.msra.mxu0 %v1844
        %1916 = vmatprep.subr.bf16.mxu0 %v1843
        %1917 = vmatpush2.bf16.msra.mxu0 %v1842
        %1918 = vmatprep.subr.bf16.mxu0 %v1841
        %1919 = vmatpush2.bf16.msra.mxu0 %v1840
        %1920 = vmatprep.mubr.bf16.mxu0 %v1683
        %1921 = vmatmul.mubr.bf16.gmra.mxu0 %v1682
        %v1922 = vpop.f32.mrf.mxu0
        %v1923 = vadd.f32 %v1721, %v1922
        %v1924 = vpop.f32.mrf.mxu0
        %v1925 = vadd.f32 %v1725, %v1924
        %v1926 = vpop.f32.mrf.mxu0
        %v1927 = vpop.f32.mrf.mxu0
        %1928 = vdwg.mxu0
        %v1929 = vadd.f32 %v692, %v1923
        %v1930 = vadd.f32 %v693, %v1925
        %v1931 = vadd.f32 %v1929, %v1930
        %1932 = vadd.xlane.f32.xlu0 %v1931
        %v1933 = vpop.xlane.xlu0 %1932
        %v1934 = vmul.f32 %v1933, %v701
        %v1935 = vsub.f32 %v1929, %v1934
        %v1936 = vsub.f32 %v1930, %v1934
        %v1937 = vmul.f32 %v1935, %v1935
        %v1938 = vmul.f32 %v1936, %v1936
        %v1939 = vadd.f32 %v1937, %v1938
        %1940 = vadd.xlane.f32.xlu0 %v1939
        %v1941 = vpop.xlane.xlu0 %1940
        %v1942 = vmul.f32 %v1941, %v701
        %v1943 = vadd.f32 %v1942, 1e-06
        %v1944 = vrsqrt.pop %v1943
        %v1945 = vmul.f32 %v1935, %v1944
        %v1946 = vmul.f32 %v1936, %v1944
        %v1948 = vlaneseq
        %v1949 = vshrl.u32 %v1948, 7
        %v1950 = vsub.s32 0, %v1949
        %v1951 = vrot.slane %v696, %v1950
        %v1952 = vlaneseq
        %v1953 = vshrl.u32 %v1952, 7
        %v1954 = vsub.s32 1, %v1953
        %v1955 = vrot.slane %v696, %v1954
        %v1958 = vmul.f32 %v1945, %v1951
        %v1959 = vmul.f32 %v1946, %v1955
        %v1961 = vlaneseq
        %v1962 = vshrl.u32 %v1961, 7
        %v1963 = vsub.s32 0, %v1962
        %v1964 = vrot.slane %v697, %v1963
        %v1965 = vlaneseq
        %v1966 = vshrl.u32 %v1965, 7
        %v1967 = vsub.s32 1, %v1966
        %v1968 = vrot.slane %v697, %v1967
        %v1971 = vadd.f32 %v1958, %v1964
        %v1972 = vadd.f32 %v1959, %v1968
        %v1973 = vpack.c.bf16 %v1971, %v1971
        %v1974 = vpack.c.bf16 %v1972, %v1972
        %v1975 = vld [vmem:[#allocation14] sm:$0xff]
        %v1976 = vld [vmem:[#allocation14 + $0x8] sm:$0xff]
        %v1977 = vld [vmem:[#allocation14 + $0x10] sm:$0xff]
        %v1978 = vld [vmem:[#allocation14 + $0x18] sm:$0xff]
        %v1979 = vld [vmem:[#allocation14 + $0x20] sm:$0xff]
        %v1980 = vld [vmem:[#allocation14 + $0x28] sm:$0xff]
        %v1981 = vld [vmem:[#allocation14 + $0x30] sm:$0xff]
        %v1982 = vld [vmem:[#allocation14 + $0x38] sm:$0xff]
        %v1983 = vld [vmem:[#allocation14 + $0x40] sm:$0xff]
        %v1984 = vld [vmem:[#allocation14 + $0x48] sm:$0xff]
        %v1985 = vld [vmem:[#allocation14 + $0x50] sm:$0xff]
        %v1986 = vld [vmem:[#allocation14 + $0x58] sm:$0xff]
        %v1987 = vld [vmem:[#allocation14 + $0x60] sm:$0xff]
        %v1988 = vld [vmem:[#allocation14 + $0x68] sm:$0xff]
        %v1989 = vld [vmem:[#allocation14 + $0x70] sm:$0xff]
        %v1990 = vld [vmem:[#allocation14 + $0x78] sm:$0xff]
        %v1991 = vld [vmem:[#allocation14 + $0x80] sm:$0xff]
        %v1992 = vld [vmem:[#allocation14 + $0x88] sm:$0xff]
        %v1993 = vld [vmem:[#allocation14 + $0x90] sm:$0xff]
        %v1994 = vld [vmem:[#allocation14 + $0x98] sm:$0xff]
        %v1995 = vld [vmem:[#allocation14 + $0xa0] sm:$0xff]
        %v1996 = vld [vmem:[#allocation14 + $0xa8] sm:$0xff]
        %v1997 = vld [vmem:[#allocation14 + $0xb0] sm:$0xff]
        %v1998 = vld [vmem:[#allocation14 + $0xb8] sm:$0xff]
        %v1999 = vld [vmem:[#allocation14 + $0xc0] sm:$0xff]
        %v2000 = vld [vmem:[#allocation14 + $0xc8] sm:$0xff]
        %v2001 = vld [vmem:[#allocation14 + $0xd0] sm:$0xff]
        %v2002 = vld [vmem:[#allocation14 + $0xd8] sm:$0xff]
        %v2003 = vld [vmem:[#allocation14 + $0xe0] sm:$0xff]
        %v2004 = vld [vmem:[#allocation14 + $0xe8] sm:$0xff]
        %v2005 = vld [vmem:[#allocation14 + $0xf0] sm:$0xff]
        %v2006 = vld [vmem:[#allocation14 + $0xf8] sm:$0xff]
        %v2007 = vld [vmem:[#allocation14 + $0x100] sm:$0xff]
        %v2008 = vld [vmem:[#allocation14 + $0x108] sm:$0xff]
        %v2009 = vld [vmem:[#allocation14 + $0x110] sm:$0xff]
        %v2010 = vld [vmem:[#allocation14 + $0x118] sm:$0xff]
        %v2011 = vld [vmem:[#allocation14 + $0x120] sm:$0xff]
        %v2012 = vld [vmem:[#allocation14 + $0x128] sm:$0xff]
        %v2013 = vld [vmem:[#allocation14 + $0x130] sm:$0xff]
        %v2014 = vld [vmem:[#allocation14 + $0x138] sm:$0xff]
        %v2015 = vld [vmem:[#allocation14 + $0x140] sm:$0xff]
        %v2016 = vld [vmem:[#allocation14 + $0x148] sm:$0xff]
        %v2017 = vld [vmem:[#allocation14 + $0x150] sm:$0xff]
        %v2018 = vld [vmem:[#allocation14 + $0x158] sm:$0xff]
        %v2019 = vld [vmem:[#allocation14 + $0x160] sm:$0xff]
        %v2020 = vld [vmem:[#allocation14 + $0x168] sm:$0xff]
        %v2021 = vld [vmem:[#allocation14 + $0x170] sm:$0xff]
        %v2022 = vld [vmem:[#allocation14 + $0x178] sm:$0xff]
        %v2023 = vld [vmem:[#allocation14 + $0x180] sm:$0xff]
        %v2024 = vld [vmem:[#allocation14 + $0x188] sm:$0xff]
        %v2025 = vld [vmem:[#allocation14 + $0x190] sm:$0xff]
        %v2026 = vld [vmem:[#allocation14 + $0x198] sm:$0xff]
        %v2027 = vld [vmem:[#allocation14 + $0x1a0] sm:$0xff]
        %v2028 = vld [vmem:[#allocation14 + $0x1a8] sm:$0xff]
        %v2029 = vld [vmem:[#allocation14 + $0x1b0] sm:$0xff]
        %v2030 = vld [vmem:[#allocation14 + $0x1b8] sm:$0xff]
        %v2031 = vld [vmem:[#allocation14 + $0x1c0] sm:$0xff]
        %v2032 = vld [vmem:[#allocation14 + $0x1c8] sm:$0xff]
        %v2033 = vld [vmem:[#allocation14 + $0x1d0] sm:$0xff]
        %v2034 = vld [vmem:[#allocation14 + $0x1d8] sm:$0xff]
        %v2035 = vld [vmem:[#allocation14 + $0x1e0] sm:$0xff]
        %v2036 = vld [vmem:[#allocation14 + $0x1e8] sm:$0xff]
        %v2037 = vld [vmem:[#allocation14 + $0x1f0] sm:$0xff]
        %v2038 = vld [vmem:[#allocation14 + $0x1f8] sm:$0xff]
        %v2039 = vld [vmem:[#allocation14 + $0x200] sm:$0xff]
        %v2040 = vld [vmem:[#allocation14 + $0x208] sm:$0xff]
        %v2041 = vld [vmem:[#allocation14 + $0x210] sm:$0xff]
        %v2042 = vld [vmem:[#allocation14 + $0x218] sm:$0xff]
        %v2043 = vld [vmem:[#allocation14 + $0x220] sm:$0xff]
        %v2044 = vld [vmem:[#allocation14 + $0x228] sm:$0xff]
        %v2045 = vld [vmem:[#allocation14 + $0x230] sm:$0xff]
        %v2046 = vld [vmem:[#allocation14 + $0x238] sm:$0xff]
        %v2047 = vld [vmem:[#allocation14 + $0x240] sm:$0xff]
        %v2048 = vld [vmem:[#allocation14 + $0x248] sm:$0xff]
        %v2049 = vld [vmem:[#allocation14 + $0x250] sm:$0xff]
        %v2050 = vld [vmem:[#allocation14 + $0x258] sm:$0xff]
        %v2051 = vld [vmem:[#allocation14 + $0x260] sm:$0xff]
        %v2052 = vld [vmem:[#allocation14 + $0x268] sm:$0xff]
        %v2053 = vld [vmem:[#allocation14 + $0x270] sm:$0xff]
        %v2054 = vld [vmem:[#allocation14 + $0x278] sm:$0xff]
        %v2055 = vld [vmem:[#allocation14 + $0x280] sm:$0xff]
        %v2056 = vld [vmem:[#allocation14 + $0x288] sm:$0xff]
        %v2057 = vld [vmem:[#allocation14 + $0x290] sm:$0xff]
        %v2058 = vld [vmem:[#allocation14 + $0x298] sm:$0xff]
        %v2059 = vld [vmem:[#allocation14 + $0x2a0] sm:$0xff]
        %v2060 = vld [vmem:[#allocation14 + $0x2a8] sm:$0xff]
        %v2061 = vld [vmem:[#allocation14 + $0x2b0] sm:$0xff]
        %v2062 = vld [vmem:[#allocation14 + $0x2b8] sm:$0xff]
        %v2063 = vld [vmem:[#allocation14 + $0x2c0] sm:$0xff]
        %v2064 = vld [vmem:[#allocation14 + $0x2c8] sm:$0xff]
        %v2065 = vld [vmem:[#allocation14 + $0x2d0] sm:$0xff]
        %v2066 = vld [vmem:[#allocation14 + $0x2d8] sm:$0xff]
        %v2067 = vld [vmem:[#allocation14 + $0x2e0] sm:$0xff]
        %v2068 = vld [vmem:[#allocation14 + $0x2e8] sm:$0xff]
        %v2069 = vld [vmem:[#allocation14 + $0x2f0] sm:$0xff]
        %v2070 = vld [vmem:[#allocation14 + $0x2f8] sm:$0xff]
        %v2071 = vld [vmem:[#allocation14 + $0x300] sm:$0xff]
        %v2072 = vld [vmem:[#allocation14 + $0x308] sm:$0xff]
        %v2073 = vld [vmem:[#allocation14 + $0x310] sm:$0xff]
        %v2074 = vld [vmem:[#allocation14 + $0x318] sm:$0xff]
        %v2075 = vld [vmem:[#allocation14 + $0x320] sm:$0xff]
        %v2076 = vld [vmem:[#allocation14 + $0x328] sm:$0xff]
        %v2077 = vld [vmem:[#allocation14 + $0x330] sm:$0xff]
        %v2078 = vld [vmem:[#allocation14 + $0x338] sm:$0xff]
        %v2079 = vld [vmem:[#allocation14 + $0x340] sm:$0xff]
        %v2080 = vld [vmem:[#allocation14 + $0x348] sm:$0xff]
        %v2081 = vld [vmem:[#allocation14 + $0x350] sm:$0xff]
        %v2082 = vld [vmem:[#allocation14 + $0x358] sm:$0xff]
        %v2083 = vld [vmem:[#allocation14 + $0x360] sm:$0xff]
        %v2084 = vld [vmem:[#allocation14 + $0x368] sm:$0xff]
        %v2085 = vld [vmem:[#allocation14 + $0x370] sm:$0xff]
        %v2086 = vld [vmem:[#allocation14 + $0x378] sm:$0xff]
        %v2087 = vld [vmem:[#allocation14 + $0x380] sm:$0xff]
        %v2088 = vld [vmem:[#allocation14 + $0x388] sm:$0xff]
        %v2089 = vld [vmem:[#allocation14 + $0x390] sm:$0xff]
        %v2090 = vld [vmem:[#allocation14 + $0x398] sm:$0xff]
        %v2091 = vld [vmem:[#allocation14 + $0x3a0] sm:$0xff]
        %v2092 = vld [vmem:[#allocation14 + $0x3a8] sm:$0xff]
        %v2093 = vld [vmem:[#allocation14 + $0x3b0] sm:$0xff]
        %v2094 = vld [vmem:[#allocation14 + $0x3b8] sm:$0xff]
        %v2095 = vld [vmem:[#allocation14 + $0x3c0] sm:$0xff]
        %v2096 = vld [vmem:[#allocation14 + $0x3c8] sm:$0xff]
        %v2097 = vld [vmem:[#allocation14 + $0x3d0] sm:$0xff]
        %v2098 = vld [vmem:[#allocation14 + $0x3d8] sm:$0xff]
        %v2099 = vld [vmem:[#allocation14 + $0x3e0] sm:$0xff]
        %v2100 = vld [vmem:[#allocation14 + $0x3e8] sm:$0xff]
        %v2101 = vld [vmem:[#allocation14 + $0x3f0] sm:$0xff]
        %v2102 = vld [vmem:[#allocation14 + $0x3f8] sm:$0xff]
        %v2103 = vld [vmem:[%s14] sm:$0xff]
        %v2105 = vlaneseq
        %v2106 = vshrl.u32 %v2105, 7
        %v2107 = vsub.s32 0, %v2106
        %v2108 = vrot.slane %v2103, %v2107
        %v2109 = vlaneseq
        %v2110 = vshrl.u32 %v2109, 7
        %v2111 = vsub.s32 1, %v2110
        %v2112 = vrot.slane %v2103, %v2111
        %v2113 = vlaneseq
        %v2114 = vshrl.u32 %v2113, 7
        %v2115 = vsub.s32 2, %v2114
        %v2116 = vrot.slane %v2103, %v2115
        %v2117 = vlaneseq
        %v2118 = vshrl.u32 %v2117, 7
        %v2119 = vsub.s32 3, %v2118
        %v2120 = vrot.slane %v2103, %v2119
        %v2121 = vlaneseq
        %v2122 = vshrl.u32 %v2121, 7
        %v2123 = vsub.s32 4, %v2122
        %v2124 = vrot.slane %v2103, %v2123
        %v2125 = vlaneseq
        %v2126 = vshrl.u32 %v2125, 7
        %v2127 = vsub.s32 5, %v2126
        %v2128 = vrot.slane %v2103, %v2127
        %v2129 = vlaneseq
        %v2130 = vshrl.u32 %v2129, 7
        %v2131 = vsub.s32 6, %v2130
        %v2132 = vrot.slane %v2103, %v2131
        %v2133 = vlaneseq
        %v2134 = vshrl.u32 %v2133, 7
        %v2135 = vsub.s32 7, %v2134
        %v2136 = vrot.slane %v2103, %v2135
        %v2273 = vunpack.c.l.b16 %v1975
        %v2274 = vunpack.c.h.b16 %v1975
        %v2275 = vunpack.c.l.b16 %v1976
        %v2276 = vunpack.c.h.b16 %v1976
        %v2277 = vunpack.c.l.b16 %v1977
        %v2278 = vunpack.c.h.b16 %v1977
        %v2279 = vunpack.c.l.b16 %v1978
        %v2280 = vunpack.c.h.b16 %v1978
        %v2281 = vunpack.c.l.b16 %v1979
        %v2282 = vunpack.c.h.b16 %v1979
        %v2283 = vunpack.c.l.b16 %v1980
        %v2284 = vunpack.c.h.b16 %v1980
        %v2285 = vunpack.c.l.b16 %v1981
        %v2286 = vunpack.c.h.b16 %v1981
        %v2287 = vunpack.c.l.b16 %v1982
        %v2288 = vunpack.c.h.b16 %v1982
        %v2289 = vunpack.c.l.b16 %v1983
        %v2290 = vunpack.c.h.b16 %v1983
        %v2291 = vunpack.c.l.b16 %v1984
        %v2292 = vunpack.c.h.b16 %v1984
        %v2293 = vunpack.c.l.b16 %v1985
        %v2294 = vunpack.c.h.b16 %v1985
        %v2295 = vunpack.c.l.b16 %v1986
        %v2296 = vunpack.c.h.b16 %v1986
        %v2297 = vunpack.c.l.b16 %v1987
        %v2298 = vunpack.c.h.b16 %v1987
        %v2299 = vunpack.c.l.b16 %v1988
        %v2300 = vunpack.c.h.b16 %v1988
        %v2301 = vunpack.c.l.b16 %v1989
        %v2302 = vunpack.c.h.b16 %v1989
        %v2303 = vunpack.c.l.b16 %v1990
        %v2304 = vunpack.c.h.b16 %v1990
        %v2305 = vunpack.c.l.b16 %v1991
        %v2306 = vunpack.c.h.b16 %v1991
        %v2307 = vunpack.c.l.b16 %v1992
        %v2308 = vunpack.c.h.b16 %v1992
        %v2309 = vunpack.c.l.b16 %v1993
        %v2310 = vunpack.c.h.b16 %v1993
        %v2311 = vunpack.c.l.b16 %v1994
        %v2312 = vunpack.c.h.b16 %v1994
        %v2313 = vunpack.c.l.b16 %v1995
        %v2314 = vunpack.c.h.b16 %v1995
        %v2315 = vunpack.c.l.b16 %v1996
        %v2316 = vunpack.c.h.b16 %v1996
        %v2317 = vunpack.c.l.b16 %v1997
        %v2318 = vunpack.c.h.b16 %v1997
        %v2319 = vunpack.c.l.b16 %v1998
        %v2320 = vunpack.c.h.b16 %v1998
        %v2321 = vunpack.c.l.b16 %v1999
        %v2322 = vunpack.c.h.b16 %v1999
        %v2323 = vunpack.c.l.b16 %v2000
        %v2324 = vunpack.c.h.b16 %v2000
        %v2325 = vunpack.c.l.b16 %v2001
        %v2326 = vunpack.c.h.b16 %v2001
        %v2327 = vunpack.c.l.b16 %v2002
        %v2328 = vunpack.c.h.b16 %v2002
        %v2329 = vunpack.c.l.b16 %v2003
        %v2330 = vunpack.c.h.b16 %v2003
        %v2331 = vunpack.c.l.b16 %v2004
        %v2332 = vunpack.c.h.b16 %v2004
        %v2333 = vunpack.c.l.b16 %v2005
        %v2334 = vunpack.c.h.b16 %v2005
        %v2335 = vunpack.c.l.b16 %v2006
        %v2336 = vunpack.c.h.b16 %v2006
        %v2337 = vunpack.c.l.b16 %v2007
        %v2338 = vunpack.c.h.b16 %v2007
        %v2339 = vunpack.c.l.b16 %v2008
        %v2340 = vunpack.c.h.b16 %v2008
        %v2341 = vunpack.c.l.b16 %v2009
        %v2342 = vunpack.c.h.b16 %v2009
        %v2343 = vunpack.c.l.b16 %v2010
        %v2344 = vunpack.c.h.b16 %v2010
        %v2345 = vunpack.c.l.b16 %v2011
        %v2346 = vunpack.c.h.b16 %v2011
        %v2347 = vunpack.c.l.b16 %v2012
        %v2348 = vunpack.c.h.b16 %v2012
        %v2349 = vunpack.c.l.b16 %v2013
        %v2350 = vunpack.c.h.b16 %v2013
        %v2351 = vunpack.c.l.b16 %v2014
        %v2352 = vunpack.c.h.b16 %v2014
        %v2353 = vunpack.c.l.b16 %v2015
        %v2354 = vunpack.c.h.b16 %v2015
        %v2355 = vunpack.c.l.b16 %v2016
        %v2356 = vunpack.c.h.b16 %v2016
        %v2357 = vunpack.c.l.b16 %v2017
        %v2358 = vunpack.c.h.b16 %v2017
        %v2359 = vunpack.c.l.b16 %v2018
        %v2360 = vunpack.c.h.b16 %v2018
        %v2361 = vunpack.c.l.b16 %v2019
        %v2362 = vunpack.c.h.b16 %v2019
        %v2363 = vunpack.c.l.b16 %v2020
        %v2364 = vunpack.c.h.b16 %v2020
        %v2365 = vunpack.c.l.b16 %v2021
        %v2366 = vunpack.c.h.b16 %v2021
        %v2367 = vunpack.c.l.b16 %v2022
        %v2368 = vunpack.c.h.b16 %v2022
        %v2369 = vunpack.c.l.b16 %v2023
        %v2370 = vunpack.c.h.b16 %v2023
        %v2371 = vunpack.c.l.b16 %v2024
        %v2372 = vunpack.c.h.b16 %v2024
        %v2373 = vunpack.c.l.b16 %v2025
        %v2374 = vunpack.c.h.b16 %v2025
        %v2375 = vunpack.c.l.b16 %v2026
        %v2376 = vunpack.c.h.b16 %v2026
        %v2377 = vunpack.c.l.b16 %v2027
        %v2378 = vunpack.c.h.b16 %v2027
        %v2379 = vunpack.c.l.b16 %v2028
        %v2380 = vunpack.c.h.b16 %v2028
        %v2381 = vunpack.c.l.b16 %v2029
        %v2382 = vunpack.c.h.b16 %v2029
        %v2383 = vunpack.c.l.b16 %v2030
        %v2384 = vunpack.c.h.b16 %v2030
        %v2385 = vunpack.c.l.b16 %v2031
        %v2386 = vunpack.c.h.b16 %v2031
        %v2387 = vunpack.c.l.b16 %v2032
        %v2388 = vunpack.c.h.b16 %v2032
        %v2389 = vunpack.c.l.b16 %v2033
        %v2390 = vunpack.c.h.b16 %v2033
        %v2391 = vunpack.c.l.b16 %v2034
        %v2392 = vunpack.c.h.b16 %v2034
        %v2393 = vunpack.c.l.b16 %v2035
        %v2394 = vunpack.c.h.b16 %v2035
        %v2395 = vunpack.c.l.b16 %v2036
        %v2396 = vunpack.c.h.b16 %v2036
        %v2397 = vunpack.c.l.b16 %v2037
        %v2398 = vunpack.c.h.b16 %v2037
        %v2399 = vunpack.c.l.b16 %v2038
        %v2400 = vunpack.c.h.b16 %v2038
        %v2401 = vunpack.c.l.b16 %v2039
        %v2402 = vunpack.c.h.b16 %v2039
        %v2403 = vunpack.c.l.b16 %v2040
        %v2404 = vunpack.c.h.b16 %v2040
        %v2405 = vunpack.c.l.b16 %v2041
        %v2406 = vunpack.c.h.b16 %v2041
        %v2407 = vunpack.c.l.b16 %v2042
        %v2408 = vunpack.c.h.b16 %v2042
        %v2409 = vunpack.c.l.b16 %v2043
        %v2410 = vunpack.c.h.b16 %v2043
        %v2411 = vunpack.c.l.b16 %v2044
        %v2412 = vunpack.c.h.b16 %v2044
        %v2413 = vunpack.c.l.b16 %v2045
        %v2414 = vunpack.c.h.b16 %v2045
        %v2415 = vunpack.c.l.b16 %v2046
        %v2416 = vunpack.c.h.b16 %v2046
        %v2417 = vunpack.c.l.b16 %v2047
        %v2418 = vunpack.c.h.b16 %v2047
        %v2419 = vunpack.c.l.b16 %v2048
        %v2420 = vunpack.c.h.b16 %v2048
        %v2421 = vunpack.c.l.b16 %v2049
        %v2422 = vunpack.c.h.b16 %v2049
        %v2423 = vunpack.c.l.b16 %v2050
        %v2424 = vunpack.c.h.b16 %v2050
        %v2425 = vunpack.c.l.b16 %v2051
        %v2426 = vunpack.c.h.b16 %v2051
        %v2427 = vunpack.c.l.b16 %v2052
        %v2428 = vunpack.c.h.b16 %v2052
        %v2429 = vunpack.c.l.b16 %v2053
        %v2430 = vunpack.c.h.b16 %v2053
        %v2431 = vunpack.c.l.b16 %v2054
        %v2432 = vunpack.c.h.b16 %v2054
        %v2433 = vunpack.c.l.b16 %v2055
        %v2434 = vunpack.c.h.b16 %v2055
        %v2435 = vunpack.c.l.b16 %v2056
        %v2436 = vunpack.c.h.b16 %v2056
        %v2437 = vunpack.c.l.b16 %v2057
        %v2438 = vunpack.c.h.b16 %v2057
        %v2439 = vunpack.c.l.b16 %v2058
        %v2440 = vunpack.c.h.b16 %v2058
        %v2441 = vunpack.c.l.b16 %v2059
        %v2442 = vunpack.c.h.b16 %v2059
        %v2443 = vunpack.c.l.b16 %v2060
        %v2444 = vunpack.c.h.b16 %v2060
        %v2445 = vunpack.c.l.b16 %v2061
        %v2446 = vunpack.c.h.b16 %v2061
        %v2447 = vunpack.c.l.b16 %v2062
        %v2448 = vunpack.c.h.b16 %v2062
        %v2449 = vunpack.c.l.b16 %v2063
        %v2450 = vunpack.c.h.b16 %v2063
        %v2451 = vunpack.c.l.b16 %v2064
        %v2452 = vunpack.c.h.b16 %v2064
        %v2453 = vunpack.c.l.b16 %v2065
        %v2454 = vunpack.c.h.b16 %v2065
        %v2455 = vunpack.c.l.b16 %v2066
        %v2456 = vunpack.c.h.b16 %v2066
        %v2457 = vunpack.c.l.b16 %v2067
        %v2458 = vunpack.c.h.b16 %v2067
        %v2459 = vunpack.c.l.b16 %v2068
        %v2460 = vunpack.c.h.b16 %v2068
        %v2461 = vunpack.c.l.b16 %v2069
        %v2462 = vunpack.c.h.b16 %v2069
        %v2463 = vunpack.c.l.b16 %v2070
        %v2464 = vunpack.c.h.b16 %v2070
        %v2465 = vunpack.c.l.b16 %v2071
        %v2466 = vunpack.c.h.b16 %v2071
        %v2467 = vunpack.c.l.b16 %v2072
        %v2468 = vunpack.c.h.b16 %v2072
        %v2469 = vunpack.c.l.b16 %v2073
        %v2470 = vunpack.c.h.b16 %v2073
        %v2471 = vunpack.c.l.b16 %v2074
        %v2472 = vunpack.c.h.b16 %v2074
        %v2473 = vunpack.c.l.b16 %v2075
        %v2474 = vunpack.c.h.b16 %v2075
        %v2475 = vunpack.c.l.b16 %v2076
        %v2476 = vunpack.c.h.b16 %v2076
        %v2477 = vunpack.c.l.b16 %v2077
        %v2478 = vunpack.c.h.b16 %v2077
        %v2479 = vunpack.c.l.b16 %v2078
        %v2480 = vunpack.c.h.b16 %v2078
        %v2481 = vunpack.c.l.b16 %v2079
        %v2482 = vunpack.c.h.b16 %v2079
        %v2483 = vunpack.c.l.b16 %v2080
        %v2484 = vunpack.c.h.b16 %v2080
        %v2485 = vunpack.c.l.b16 %v2081
        %v2486 = vunpack.c.h.b16 %v2081
        %v2487 = vunpack.c.l.b16 %v2082
        %v2488 = vunpack.c.h.b16 %v2082
        %v2489 = vunpack.c.l.b16 %v2083
        %v2490 = vunpack.c.h.b16 %v2083
        %v2491 = vunpack.c.l.b16 %v2084
        %v2492 = vunpack.c.h.b16 %v2084
        %v2493 = vunpack.c.l.b16 %v2085
        %v2494 = vunpack.c.h.b16 %v2085
        %v2495 = vunpack.c.l.b16 %v2086
        %v2496 = vunpack.c.h.b16 %v2086
        %v2497 = vunpack.c.l.b16 %v2087
        %v2498 = vunpack.c.h.b16 %v2087
        %v2499 = vunpack.c.l.b16 %v2088
        %v2500 = vunpack.c.h.b16 %v2088
        %v2501 = vunpack.c.l.b16 %v2089
        %v2502 = vunpack.c.h.b16 %v2089
        %v2503 = vunpack.c.l.b16 %v2090
        %v2504 = vunpack.c.h.b16 %v2090
        %v2505 = vunpack.c.l.b16 %v2091
        %v2506 = vunpack.c.h.b16 %v2091
        %v2507 = vunpack.c.l.b16 %v2092
        %v2508 = vunpack.c.h.b16 %v2092
        %v2509 = vunpack.c.l.b16 %v2093
        %v2510 = vunpack.c.h.b16 %v2093
        %v2511 = vunpack.c.l.b16 %v2094
        %v2512 = vunpack.c.h.b16 %v2094
        %v2513 = vunpack.c.l.b16 %v2095
        %v2514 = vunpack.c.h.b16 %v2095
        %v2515 = vunpack.c.l.b16 %v2096
        %v2516 = vunpack.c.h.b16 %v2096
        %v2517 = vunpack.c.l.b16 %v2097
        %v2518 = vunpack.c.h.b16 %v2097
        %v2519 = vunpack.c.l.b16 %v2098
        %v2520 = vunpack.c.h.b16 %v2098
        %v2521 = vunpack.c.l.b16 %v2099
        %v2522 = vunpack.c.h.b16 %v2099
        %v2523 = vunpack.c.l.b16 %v2100
        %v2524 = vunpack.c.h.b16 %v2100
        %v2525 = vunpack.c.l.b16 %v2101
        %v2526 = vunpack.c.h.b16 %v2101
        %v2527 = vunpack.c.l.b16 %v2102
        %v2528 = vunpack.c.h.b16 %v2102
        %v2529 = vpack.c.b16 %v2281, %v2273
        %v2530 = vpack.c.b16 %v2282, %v2274
        %v2531 = vpack.c.b16 %v2283, %v2275
        %v2532 = vpack.c.b16 %v2284, %v2276
        %v2533 = vpack.c.b16 %v2285, %v2277
        %v2534 = vpack.c.b16 %v2286, %v2278
        %v2535 = vpack.c.b16 %v2287, %v2279
        %v2536 = vpack.c.b16 %v2288, %v2280
        %v2537 = vpack.c.b16 %v2297, %v2289
        %v2538 = vpack.c.b16 %v2298, %v2290
        %v2539 = vpack.c.b16 %v2299, %v2291
        %v2540 = vpack.c.b16 %v2300, %v2292
        %v2541 = vpack.c.b16 %v2301, %v2293
        %v2542 = vpack.c.b16 %v2302, %v2294
        %v2543 = vpack.c.b16 %v2303, %v2295
        %v2544 = vpack.c.b16 %v2304, %v2296
        %v2545 = vpack.c.b16 %v2313, %v2305
        %v2546 = vpack.c.b16 %v2314, %v2306
        %v2547 = vpack.c.b16 %v2315, %v2307
        %v2548 = vpack.c.b16 %v2316, %v2308
        %v2549 = vpack.c.b16 %v2317, %v2309
        %v2550 = vpack.c.b16 %v2318, %v2310
        %v2551 = vpack.c.b16 %v2319, %v2311
        %v2552 = vpack.c.b16 %v2320, %v2312
        %v2553 = vpack.c.b16 %v2329, %v2321
        %v2554 = vpack.c.b16 %v2330, %v2322
        %v2555 = vpack.c.b16 %v2331, %v2323
        %v2556 = vpack.c.b16 %v2332, %v2324
        %v2557 = vpack.c.b16 %v2333, %v2325
        %v2558 = vpack.c.b16 %v2334, %v2326
        %v2559 = vpack.c.b16 %v2335, %v2327
        %v2560 = vpack.c.b16 %v2336, %v2328
        %v2561 = vpack.c.b16 %v2345, %v2337
        %v2562 = vpack.c.b16 %v2346, %v2338
        %v2563 = vpack.c.b16 %v2347, %v2339
        %v2564 = vpack.c.b16 %v2348, %v2340
        %v2565 = vpack.c.b16 %v2349, %v2341
        %v2566 = vpack.c.b16 %v2350, %v2342
        %v2567 = vpack.c.b16 %v2351, %v2343
        %v2568 = vpack.c.b16 %v2352, %v2344
        %v2569 = vpack.c.b16 %v2361, %v2353
        %v2570 = vpack.c.b16 %v2362, %v2354
        %v2571 = vpack.c.b16 %v2363, %v2355
        %v2572 = vpack.c.b16 %v2364, %v2356
        %v2573 = vpack.c.b16 %v2365, %v2357
        %v2574 = vpack.c.b16 %v2366, %v2358
        %v2575 = vpack.c.b16 %v2367, %v2359
        %v2576 = vpack.c.b16 %v2368, %v2360
        %v2577 = vpack.c.b16 %v2377, %v2369
        %v2578 = vpack.c.b16 %v2378, %v2370
        %v2579 = vpack.c.b16 %v2379, %v2371
        %v2580 = vpack.c.b16 %v2380, %v2372
        %v2581 = vpack.c.b16 %v2381, %v2373
        %v2582 = vpack.c.b16 %v2382, %v2374
        %v2583 = vpack.c.b16 %v2383, %v2375
        %v2584 = vpack.c.b16 %v2384, %v2376
        %v2585 = vpack.c.b16 %v2393, %v2385
        %v2586 = vpack.c.b16 %v2394, %v2386
        %v2587 = vpack.c.b16 %v2395, %v2387
        %v2588 = vpack.c.b16 %v2396, %v2388
        %v2589 = vpack.c.b16 %v2397, %v2389
        %v2590 = vpack.c.b16 %v2398, %v2390
        %v2591 = vpack.c.b16 %v2399, %v2391
        %v2592 = vpack.c.b16 %v2400, %v2392
        %v2593 = vpack.c.b16 %v2409, %v2401
        %v2594 = vpack.c.b16 %v2410, %v2402
        %v2595 = vpack.c.b16 %v2411, %v2403
        %v2596 = vpack.c.b16 %v2412, %v2404
        %v2597 = vpack.c.b16 %v2413, %v2405
        %v2598 = vpack.c.b16 %v2414, %v2406
        %v2599 = vpack.c.b16 %v2415, %v2407
        %v2600 = vpack.c.b16 %v2416, %v2408
        %v2601 = vpack.c.b16 %v2425, %v2417
        %v2602 = vpack.c.b16 %v2426, %v2418
        %v2603 = vpack.c.b16 %v2427, %v2419
        %v2604 = vpack.c.b16 %v2428, %v2420
        %v2605 = vpack.c.b16 %v2429, %v2421
        %v2606 = vpack.c.b16 %v2430, %v2422
        %v2607 = vpack.c.b16 %v2431, %v2423
        %v2608 = vpack.c.b16 %v2432, %v2424
        %v2609 = vpack.c.b16 %v2441, %v2433
        %v2610 = vpack.c.b16 %v2442, %v2434
        %v2611 = vpack.c.b16 %v2443, %v2435
        %v2612 = vpack.c.b16 %v2444, %v2436
        %v2613 = vpack.c.b16 %v2445, %v2437
        %v2614 = vpack.c.b16 %v2446, %v2438
        %v2615 = vpack.c.b16 %v2447, %v2439
        %v2616 = vpack.c.b16 %v2448, %v2440
        %v2617 = vpack.c.b16 %v2457, %v2449
        %v2618 = vpack.c.b16 %v2458, %v2450
        %v2619 = vpack.c.b16 %v2459, %v2451
        %v2620 = vpack.c.b16 %v2460, %v2452
        %v2621 = vpack.c.b16 %v2461, %v2453
        %v2622 = vpack.c.b16 %v2462, %v2454
        %v2623 = vpack.c.b16 %v2463, %v2455
        %v2624 = vpack.c.b16 %v2464, %v2456
        %v2625 = vpack.c.b16 %v2473, %v2465
        %v2626 = vpack.c.b16 %v2474, %v2466
        %v2627 = vpack.c.b16 %v2475, %v2467
        %v2628 = vpack.c.b16 %v2476, %v2468
        %v2629 = vpack.c.b16 %v2477, %v2469
        %v2630 = vpack.c.b16 %v2478, %v2470
        %v2631 = vpack.c.b16 %v2479, %v2471
        %v2632 = vpack.c.b16 %v2480, %v2472
        %v2633 = vpack.c.b16 %v2489, %v2481
        %v2634 = vpack.c.b16 %v2490, %v2482
        %v2635 = vpack.c.b16 %v2491, %v2483
        %v2636 = vpack.c.b16 %v2492, %v2484
        %v2637 = vpack.c.b16 %v2493, %v2485
        %v2638 = vpack.c.b16 %v2494, %v2486
        %v2639 = vpack.c.b16 %v2495, %v2487
        %v2640 = vpack.c.b16 %v2496, %v2488
        %v2641 = vpack.c.b16 %v2505, %v2497
        %v2642 = vpack.c.b16 %v2506, %v2498
        %v2643 = vpack.c.b16 %v2507, %v2499
        %v2644 = vpack.c.b16 %v2508, %v2500
        %v2645 = vpack.c.b16 %v2509, %v2501
        %v2646 = vpack.c.b16 %v2510, %v2502
        %v2647 = vpack.c.b16 %v2511, %v2503
        %v2648 = vpack.c.b16 %v2512, %v2504
        %v2649 = vpack.c.b16 %v2521, %v2513
        %v2650 = vpack.c.b16 %v2522, %v2514
        %v2651 = vpack.c.b16 %v2523, %v2515
        %v2652 = vpack.c.b16 %v2524, %v2516
        %v2653 = vpack.c.b16 %v2525, %v2517
        %v2654 = vpack.c.b16 %v2526, %v2518
        %v2655 = vpack.c.b16 %v2527, %v2519
        %v2656 = vpack.c.b16 %v2528, %v2520
        %2785 = vmatprep.subr.bf16.mxu0 %v2586
        %2786 = vmatpush1.bf16.msra.mxu0 %v2585
        %2787 = vmatprep.subr.bf16.mxu0 %v2578
        %2788 = vmatpush1.bf16.msra.mxu0 %v2577
        %2789 = vmatprep.subr.bf16.mxu0 %v2570
        %2790 = vmatpush1.bf16.msra.mxu0 %v2569
        %2791 = vmatprep.subr.bf16.mxu0 %v2562
        %2792 = vmatpush1.bf16.msra.mxu0 %v2561
        %2793 = vmatprep.subr.bf16.mxu0 %v2554
        %2794 = vmatpush1.bf16.msra.mxu0 %v2553
        %2795 = vmatprep.subr.bf16.mxu0 %v2546
        %2796 = vmatpush1.bf16.msra.mxu0 %v2545
        %2797 = vmatprep.subr.bf16.mxu0 %v2538
        %2798 = vmatpush1.bf16.msra.mxu0 %v2537
        %2799 = vmatprep.subr.bf16.mxu0 %v2530
        %2800 = vmatpush1.bf16.msra.mxu0 %v2529
        %2801 = vmatprep.subr.bf16.mxu0 %v2650
        %2802 = vmatpush2.bf16.msra.mxu0 %v2649
        %2803 = vmatprep.subr.bf16.mxu0 %v2642
        %2804 = vmatpush2.bf16.msra.mxu0 %v2641
        %2805 = vmatprep.subr.bf16.mxu0 %v2634
        %2806 = vmatpush2.bf16.msra.mxu0 %v2633
        %2807 = vmatprep.subr.bf16.mxu0 %v2626
        %2808 = vmatpush2.bf16.msra.mxu0 %v2625
        %2809 = vmatprep.subr.bf16.mxu0 %v2618
        %2810 = vmatpush2.bf16.msra.mxu0 %v2617
        %2811 = vmatprep.subr.bf16.mxu0 %v2610
        %2812 = vmatpush2.bf16.msra.mxu0 %v2609
        %2813 = vmatprep.subr.bf16.mxu0 %v2602
        %2814 = vmatpush2.bf16.msra.mxu0 %v2601
        %2815 = vmatprep.subr.bf16.mxu0 %v2594
        %2816 = vmatpush2.bf16.msra.mxu0 %v2593
        %2817 = vmatprep.mubr.bf16.mxu0 %v1974
        %2818 = vmatmul.mubr.bf16.gmra.mxu0 %v1973
        %v2819 = vpop.f32.mrf.mxu0
        %v2820 = vadd.f32 %v2108, %v2819
        %v2821 = vpop.f32.mrf.mxu0
        %v2822 = vadd.f32 %v2112, %v2821
        %v2823 = vpop.f32.mrf.mxu0
        %v2824 = vpop.f32.mrf.mxu0
        %2825 = vdwg.mxu0
        %2826 = vmatprep.subr.bf16.mxu0 %v2588
        %2827 = vmatpush1.bf16.msra.mxu0 %v2587
        %2828 = vmatprep.subr.bf16.mxu0 %v2580
        %2829 = vmatpush1.bf16.msra.mxu0 %v2579
        %2830 = vmatprep.subr.bf16.mxu0 %v2572
        %2831 = vmatpush1.bf16.msra.mxu0 %v2571
        %2832 = vmatprep.subr.bf16.mxu0 %v2564
        %2833 = vmatpush1.bf16.msra.mxu0 %v2563
        %2834 = vmatprep.subr.bf16.mxu0 %v2556
        %2835 = vmatpush1.bf16.msra.mxu0 %v2555
        %2836 = vmatprep.subr.bf16.mxu0 %v2548
        %2837 = vmatpush1.bf16.msra.mxu0 %v2547
        %2838 = vmatprep.subr.bf16.mxu0 %v2540
        %2839 = vmatpush1.bf16.msra.mxu0 %v2539
        %2840 = vmatprep.subr.bf16.mxu0 %v2532
        %2841 = vmatpush1.bf16.msra.mxu0 %v2531
        %2842 = vmatprep.subr.bf16.mxu0 %v2652
        %2843 = vmatpush2.bf16.msra.mxu0 %v2651
        %2844 = vmatprep.subr.bf16.mxu0 %v2644
        %2845 = vmatpush2.bf16.msra.mxu0 %v2643
        %2846 = vmatprep.subr.bf16.mxu0 %v2636
        %2847 = vmatpush2.bf16.msra.mxu0 %v2635
        %2848 = vmatprep.subr.bf16.mxu0 %v2628
        %2849 = vmatpush2.bf16.msra.mxu0 %v2627
        %2850 = vmatprep.subr.bf16.mxu0 %v2620
        %2851 = vmatpush2.bf16.msra.mxu0 %v2619
        %2852 = vmatprep.subr.bf16.mxu0 %v2612
        %2853 = vmatpush2.bf16.msra.mxu0 %v2611
        %2854 = vmatprep.subr.bf16.mxu0 %v2604
        %2855 = vmatpush2.bf16.msra.mxu0 %v2603
        %2856 = vmatprep.subr.bf16.mxu0 %v2596
        %2857 = vmatpush2.bf16.msra.mxu0 %v2595
        %2858 = vmatprep.mubr.bf16.mxu0 %v1974
        %2859 = vmatmul.mubr.bf16.gmra.mxu0 %v1973
        %v2860 = vpop.f32.mrf.mxu0
        %v2861 = vadd.f32 %v2116, %v2860
        %v2862 = vpop.f32.mrf.mxu0
        %v2863 = vadd.f32 %v2120, %v2862
        %v2864 = vpop.f32.mrf.mxu0
        %v2865 = vpop.f32.mrf.mxu0
        %2866 = vdwg.mxu0
        %2867 = vmatprep.subr.bf16.mxu0 %v2590
        %2868 = vmatpush1.bf16.msra.mxu0 %v2589
        %2869 = vmatprep.subr.bf16.mxu0 %v2582
        %2870 = vmatpush1.bf16.msra.mxu0 %v2581
        %2871 = vmatprep.subr.bf16.mxu0 %v2574
        %2872 = vmatpush1.bf16.msra.mxu0 %v2573
        %2873 = vmatprep.subr.bf16.mxu0 %v2566
        %2874 = vmatpush1.bf16.msra.mxu0 %v2565
        %2875 = vmatprep.subr.bf16.mxu0 %v2558
        %2876 = vmatpush1.bf16.msra.mxu0 %v2557
        %2877 = vmatprep.subr.bf16.mxu0 %v2550
        %2878 = vmatpush1.bf16.msra.mxu0 %v2549
        %2879 = vmatprep.subr.bf16.mxu0 %v2542
        %2880 = vmatpush1.bf16.msra.mxu0 %v2541
        %2881 = vmatprep.subr.bf16.mxu0 %v2534
        %2882 = vmatpush1.bf16.msra.mxu0 %v2533
        %2883 = vmatprep.subr.bf16.mxu0 %v2654
        %2884 = vmatpush2.bf16.msra.mxu0 %v2653
        %2885 = vmatprep.subr.bf16.mxu0 %v2646
        %2886 = vmatpush2.bf16.msra.mxu0 %v2645
        %2887 = vmatprep.subr.bf16.mxu0 %v2638
        %2888 = vmatpush2.bf16.msra.mxu0 %v2637
        %2889 = vmatprep.subr.bf16.mxu0 %v2630
        %2890 = vmatpush2.bf16.msra.mxu0 %v2629
        %2891 = vmatprep.subr.bf16.mxu0 %v2622
        %2892 = vmatpush2.bf16.msra.mxu0 %v2621
        %2893 = vmatprep.subr.bf16.mxu0 %v2614
        %2894 = vmatpush2.bf16.msra.mxu0 %v2613
        %2895 = vmatprep.subr.bf16.mxu0 %v2606
        %2896 = vmatpush2.bf16.msra.mxu0 %v2605
        %2897 = vmatprep.subr.bf16.mxu0 %v2598
        %2898 = vmatpush2.bf16.msra.mxu0 %v2597
        %2899 = vmatprep.mubr.bf16.mxu0 %v1974
        %2900 = vmatmul.mubr.bf16.gmra.mxu0 %v1973
        %v2901 = vpop.f32.mrf.mxu0
        %v2902 = vadd.f32 %v2124, %v2901
        %v2903 = vpop.f32.mrf.mxu0
        %v2904 = vadd.f32 %v2128, %v2903
        %v2905 = vpop.f32.mrf.mxu0
        %v2906 = vpop.f32.mrf.mxu0
        %2907 = vdwg.mxu0
        %2908 = vmatprep.subr.bf16.mxu0 %v2592
        %2909 = vmatpush1.bf16.msra.mxu0 %v2591
        %2910 = vmatprep.subr.bf16.mxu0 %v2584
        %2911 = vmatpush1.bf16.msra.mxu0 %v2583
        %2912 = vmatprep.subr.bf16.mxu0 %v2576
        %2913 = vmatpush1.bf16.msra.mxu0 %v2575
        %2914 = vmatprep.subr.bf16.mxu0 %v2568
        %2915 = vmatpush1.bf16.msra.mxu0 %v2567
        %2916 = vmatprep.subr.bf16.mxu0 %v2560
        %2917 = vmatpush1.bf16.msra.mxu0 %v2559
        %2918 = vmatprep.subr.bf16.mxu0 %v2552
        %2919 = vmatpush1.bf16.msra.mxu0 %v2551
        %2920 = vmatprep.subr.bf16.mxu0 %v2544
        %2921 = vmatpush1.bf16.msra.mxu0 %v2543
        %2922 = vmatprep.subr.bf16.mxu0 %v2536
        %2923 = vmatpush1.bf16.msra.mxu0 %v2535
        %2924 = vmatprep.subr.bf16.mxu0 %v2656
        %2925 = vmatpush2.bf16.msra.mxu0 %v2655
        %2926 = vmatprep.subr.bf16.mxu0 %v2648
        %2927 = vmatpush2.bf16.msra.mxu0 %v2647
        %2928 = vmatprep.subr.bf16.mxu0 %v2640
        %2929 = vmatpush2.bf16.msra.mxu0 %v2639
        %2930 = vmatprep.subr.bf16.mxu0 %v2632
        %2931 = vmatpush2.bf16.msra.mxu0 %v2631
        %2932 = vmatprep.subr.bf16.mxu0 %v2624
        %2933 = vmatpush2.bf16.msra.mxu0 %v2623
        %2934 = vmatprep.subr.bf16.mxu0 %v2616
        %2935 = vmatpush2.bf16.msra.mxu0 %v2615
        %2936 = vmatprep.subr.bf16.mxu0 %v2608
        %2937 = vmatpush2.bf16.msra.mxu0 %v2607
        %2938 = vmatprep.subr.bf16.mxu0 %v2600
        %2939 = vmatpush2.bf16.msra.mxu0 %v2599
        %2940 = vmatprep.mubr.bf16.mxu0 %v1974
        %2941 = vmatmul.mubr.bf16.gmra.mxu0 %v1973
        %v2942 = vpop.f32.mrf.mxu0
        %v2943 = vadd.f32 %v2132, %v2942
        %v2944 = vpop.f32.mrf.mxu0
        %v2945 = vadd.f32 %v2136, %v2944
        %v2946 = vpop.f32.mrf.mxu0
        %v2947 = vpop.f32.mrf.mxu0
        %2948 = vdwg.mxu0
        %v2949 = vmul.f32 %v2820, 0.5
        %v2950 = vmul.f32 %v2822, 0.5
        %v2951 = vmul.f32 %v2861, 0.5
        %v2952 = vmul.f32 %v2863, 0.5
        %v2953 = vmul.f32 %v2902, 0.5
        %v2954 = vmul.f32 %v2904, 0.5
        %v2955 = vmul.f32 %v2943, 0.5
        %v2956 = vmul.f32 %v2945, 0.5
        %v2957 = vmul.f32 %v2820, 0.70710677
        %v2958 = vmul.f32 %v2822, 0.70710677
        %v2959 = vmul.f32 %v2861, 0.70710677
        %v2960 = vmul.f32 %v2863, 0.70710677
        %v2961 = vmul.f32 %v2902, 0.70710677
        %v2962 = vmul.f32 %v2904, 0.70710677
        %v2963 = vmul.f32 %v2943, 0.70710677
        %v2964 = vmul.f32 %v2945, 0.70710677
        %v2965 = vand.u32 2147483647, %v2957
        %v2966 = vand.u32 2147483647, %v2958
        %v2967 = vand.u32 2147483647, %v2959
        %v2968 = vand.u32 2147483647, %v2960
        %v2969 = vand.u32 2147483647, %v2961
        %v2970 = vand.u32 2147483647, %v2962
        %v2971 = vand.u32 2147483647, %v2963
        %v2972 = vand.u32 2147483647, %v2964
        %v2973 = vmul.f32 %v2965, 0.3275911
        %v2974 = vmul.f32 %v2966, 0.3275911
        %v2975 = vmul.f32 %v2967, 0.3275911
        %v2976 = vmul.f32 %v2968, 0.3275911
        %v2977 = vmul.f32 %v2969, 0.3275911
        %v2978 = vmul.f32 %v2970, 0.3275911
        %v2979 = vmul.f32 %v2971, 0.3275911
        %v2980 = vmul.f32 %v2972, 0.3275911
        %v2981 = vadd.f32 %v2973, 1.0
        %v2982 = vadd.f32 %v2974, 1.0
        %v2983 = vadd.f32 %v2975, 1.0
        %v2984 = vadd.f32 %v2976, 1.0
        %v2985 = vadd.f32 %v2977, 1.0
        %v2986 = vadd.f32 %v2978, 1.0
        %v2987 = vadd.f32 %v2979, 1.0
        %v2988 = vadd.f32 %v2980, 1.0
        %v2989 = vrcp.pop %v2981
        %v2990 = vmul.f32 1.0, %v2989
        %v2991 = vrcp.pop %v2982
        %v2992 = vmul.f32 1.0, %v2991
        %v2993 = vrcp.pop %v2983
        %v2994 = vmul.f32 1.0, %v2993
        %v2995 = vrcp.pop %v2984
        %v2996 = vmul.f32 1.0, %v2995
        %v2997 = vrcp.pop %v2985
        %v2998 = vmul.f32 1.0, %v2997
        %v2999 = vrcp.pop %v2986
        %v3000 = vmul.f32 1.0, %v2999
        %v3001 = vrcp.pop %v2987
        %v3002 = vmul.f32 1.0, %v3001
        %v3003 = vrcp.pop %v2988
        %v3004 = vmul.f32 1.0, %v3003
        %v3005 = vmul.f32 %v2990, 1.0614054
        %v3006 = vmul.f32 %v2992, 1.0614054
        %v3007 = vmul.f32 %v2994, 1.0614054
        %v3008 = vmul.f32 %v2996, 1.0614054
        %v3009 = vmul.f32 %v2998, 1.0614054
        %v3010 = vmul.f32 %v3000, 1.0614054
        %v3011 = vmul.f32 %v3002, 1.0614054
        %v3012 = vmul.f32 %v3004, 1.0614054
        %v3013 = vadd.f32 %v3005, -1.4531521
        %v3014 = vadd.f32 %v3006, -1.4531521
        %v3015 = vadd.f32 %v3007, -1.4531521
        %v3016 = vadd.f32 %v3008, -1.4531521
        %v3017 = vadd.f32 %v3009, -1.4531521
        %v3018 = vadd.f32 %v3010, -1.4531521
        %v3019 = vadd.f32 %v3011, -1.4531521
        %v3020 = vadd.f32 %v3012, -1.4531521
        %v3021 = vmul.f32 %v3013, %v2990
        %v3022 = vmul.f32 %v3014, %v2992
        %v3023 = vmul.f32 %v3015, %v2994
        %v3024 = vmul.f32 %v3016, %v2996
        %v3025 = vmul.f32 %v3017, %v2998
        %v3026 = vmul.f32 %v3018, %v3000
        %v3027 = vmul.f32 %v3019, %v3002
        %v3028 = vmul.f32 %v3020, %v3004
        %v3029 = vadd.f32 %v3021, 1.4214138
        %v3030 = vadd.f32 %v3022, 1.4214138
        %v3031 = vadd.f32 %v3023, 1.4214138
        %v3032 = vadd.f32 %v3024, 1.4214138
        %v3033 = vadd.f32 %v3025, 1.4214138
        %v3034 = vadd.f32 %v3026, 1.4214138
        %v3035 = vadd.f32 %v3027, 1.4214138
        %v3036 = vadd.f32 %v3028, 1.4214138
        %v3037 = vmul.f32 %v3029, %v2990
        %v3038 = vmul.f32 %v3030, %v2992
        %v3039 = vmul.f32 %v3031, %v2994
        %v3040 = vmul.f32 %v3032, %v2996
        %v3041 = vmul.f32 %v3033, %v2998
        %v3042 = vmul.f32 %v3034, %v3000
        %v3043 = vmul.f32 %v3035, %v3002
        %v3044 = vmul.f32 %v3036, %v3004
        %v3045 = vadd.f32 %v3037, -0.28449672
        %v3046 = vadd.f32 %v3038, -0.28449672
        %v3047 = vadd.f32 %v3039, -0.28449672
        %v3048 = vadd.f32 %v3040, -0.28449672
        %v3049 = vadd.f32 %v3041, -0.28449672
        %v3050 = vadd.f32 %v3042, -0.28449672
        %v3051 = vadd.f32 %v3043, -0.28449672
        %v3052 = vadd.f32 %v3044, -0.28449672
        %v3053 = vmul.f32 %v3045, %v2990
        %v3054 = vmul.f32 %v3046, %v2992
        %v3055 = vmul.f32 %v3047, %v2994
        %v3056 = vmul.f32 %v3048, %v2996
        %v3057 = vmul.f32 %v3049, %v2998
        %v3058 = vmul.f32 %v3050, %v3000
        %v3059 = vmul.f32 %v3051, %v3002
        %v3060 = vmul.f32 %v3052, %v3004
        %v3061 = vadd.f32 %v3053, 0.2548296
        %v3062 = vadd.f32 %v3054, 0.2548296
        %v3063 = vadd.f32 %v3055, 0.2548296
        %v3064 = vadd.f32 %v3056, 0.2548296
        %v3065 = vadd.f32 %v3057, 0.2548296
        %v3066 = vadd.f32 %v3058, 0.2548296
        %v3067 = vadd.f32 %v3059, 0.2548296
        %v3068 = vadd.f32 %v3060, 0.2548296
        %v3069 = vmul.f32 %v3061, %v2990
        %v3070 = vmul.f32 %v3062, %v2992
        %v3071 = vmul.f32 %v3063, %v2994
        %v3072 = vmul.f32 %v3064, %v2996
        %v3073 = vmul.f32 %v3065, %v2998
        %v3074 = vmul.f32 %v3066, %v3000
        %v3075 = vmul.f32 %v3067, %v3002
        %v3076 = vmul.f32 %v3068, %v3004
        %v3077 = vsub.f32 0.0, %v2965
        %v3078 = vsub.f32 0.0, %v2966
        %v3079 = vsub.f32 0.0, %v2967
        %v3080 = vsub.f32 0.0, %v2968
        %v3081 = vsub.f32 0.0, %v2969
        %v3082 = vsub.f32 0.0, %v2970
        %v3083 = vsub.f32 0.0, %v2971
        %v3084 = vsub.f32 0.0, %v2972
        %v3085 = vmul.f32 %v3077, %v2965
        %v3086 = vmul.f32 %v3078, %v2966
        %v3087 = vmul.f32 %v3079, %v2967
        %v3088 = vmul.f32 %v3080, %v2968
        %v3089 = vmul.f32 %v3081, %v2969
        %v3090 = vmul.f32 %v3082, %v2970
        %v3091 = vmul.f32 %v3083, %v2971
        %v3092 = vmul.f32 %v3084, %v2972
        %v3093 = vmul.f32 %v3085, 1.442695
        %v3094 = vpow.pop %v3093
        %v3095 = vmul.f32 %v3086, 1.442695
        %v3096 = vpow.pop %v3095
        %v3097 = vmul.f32 %v3087, 1.442695
        %v3098 = vpow.pop %v3097
        %v3099 = vmul.f32 %v3088, 1.442695
        %v3100 = vpow.pop %v3099
        %v3101 = vmul.f32 %v3089, 1.442695
        %v3102 = vpow.pop %v3101
        %v3103 = vmul.f32 %v3090, 1.442695
        %v3104 = vpow.pop %v3103
        %v3105 = vmul.f32 %v3091, 1.442695
        %v3106 = vpow.pop %v3105
        %v3107 = vmul.f32 %v3092, 1.442695
        %v3108 = vpow.pop %v3107
        %v3109 = vmul.f32 %v3069, %v3094
        %v3110 = vmul.f32 %v3070, %v3096
        %v3111 = vmul.f32 %v3071, %v3098
        %v3112 = vmul.f32 %v3072, %v3100
        %v3113 = vmul.f32 %v3073, %v3102
        %v3114 = vmul.f32 %v3074, %v3104
        %v3115 = vmul.f32 %v3075, %v3106
        %v3116 = vmul.f32 %v3076, %v3108
        %v3117 = vsub.f32 1.0, %v3109
        %v3118 = vsub.f32 1.0, %v3110
        %v3119 = vsub.f32 1.0, %v3111
        %v3120 = vsub.f32 1.0, %v3112
        %v3121 = vsub.f32 1.0, %v3113
        %v3122 = vsub.f32 1.0, %v3114
        %v3123 = vsub.f32 1.0, %v3115
        %v3124 = vsub.f32 1.0, %v3116
        %vm3125 = vcmp.ge.f32.partialorder %v2957, 0.0
        %vm3126 = vcmp.ge.f32.partialorder %v2958, 0.0
        %vm3127 = vcmp.ge.f32.partialorder %v2959, 0.0
        %vm3128 = vcmp.ge.f32.partialorder %v2960, 0.0
        %vm3129 = vcmp.ge.f32.partialorder %v2961, 0.0
        %vm3130 = vcmp.ge.f32.partialorder %v2962, 0.0
        %vm3131 = vcmp.ge.f32.partialorder %v2963, 0.0
        %vm3132 = vcmp.ge.f32.partialorder %v2964, 0.0
        %v3133 = vsub.f32 0.0, %v3117
        %v3134 = vsub.f32 0.0, %v3118
        %v3135 = vsub.f32 0.0, %v3119
        %v3136 = vsub.f32 0.0, %v3120
        %v3137 = vsub.f32 0.0, %v3121
        %v3138 = vsub.f32 0.0, %v3122
        %v3139 = vsub.f32 0.0, %v3123
        %v3140 = vsub.f32 0.0, %v3124
        %v3141 = vsel %vm3125, %v3117, %v3133
        %v3142 = vsel %vm3126, %v3118, %v3134
        %v3143 = vsel %vm3127, %v3119, %v3135
        %v3144 = vsel %vm3128, %v3120, %v3136
        %v3145 = vsel %vm3129, %v3121, %v3137
        %v3146 = vsel %vm3130, %v3122, %v3138
        %v3147 = vsel %vm3131, %v3123, %v3139
        %v3148 = vsel %vm3132, %v3124, %v3140
        %v3149 = vadd.f32 %v3141, 1.0
        %v3150 = vadd.f32 %v3142, 1.0
        %v3151 = vadd.f32 %v3143, 1.0
        %v3152 = vadd.f32 %v3144, 1.0
        %v3153 = vadd.f32 %v3145, 1.0
        %v3154 = vadd.f32 %v3146, 1.0
        %v3155 = vadd.f32 %v3147, 1.0
        %v3156 = vadd.f32 %v3148, 1.0
        %v3157 = vmul.f32 %v2949, %v3149
        %v3158 = vmul.f32 %v2950, %v3150
        %v3159 = vmul.f32 %v2951, %v3151
        %v3160 = vmul.f32 %v2952, %v3152
        %v3161 = vmul.f32 %v2953, %v3153
        %v3162 = vmul.f32 %v2954, %v3154
        %v3163 = vmul.f32 %v2955, %v3155
        %v3164 = vmul.f32 %v2956, %v3156
        %v3165 = vpack.c.bf16 %v3157, %v3157
        %v3166 = vpack.c.bf16 %v3158, %v3158
        %v3167 = vpack.c.bf16 %v3159, %v3159
        %v3168 = vpack.c.bf16 %v3160, %v3160
        %v3169 = vpack.c.bf16 %v3161, %v3161
        %v3170 = vpack.c.bf16 %v3162, %v3162
        %v3171 = vpack.c.bf16 %v3163, %v3163
        %v3172 = vpack.c.bf16 %v3164, %v3164
        %v3173 = vld [vmem:[#allocation16] sm:$0xff]
        %v3174 = vld [vmem:[#allocation16 + $0x8] sm:$0xff]
        %v3175 = vld [vmem:[#allocation16 + $0x10] sm:$0xff]
        %v3176 = vld [vmem:[#allocation16 + $0x18] sm:$0xff]
        %v3177 = vld [vmem:[#allocation16 + $0x20] sm:$0xff]
        %v3178 = vld [vmem:[#allocation16 + $0x28] sm:$0xff]
        %v3179 = vld [vmem:[#allocation16 + $0x30] sm:$0xff]
        %v3180 = vld [vmem:[#allocation16 + $0x38] sm:$0xff]
        %v3181 = vld [vmem:[#allocation16 + $0x40] sm:$0xff]
        %v3182 = vld [vmem:[#allocation16 + $0x48] sm:$0xff]
        %v3183 = vld [vmem:[#allocation16 + $0x50] sm:$0xff]
        %v3184 = vld [vmem:[#allocation16 + $0x58] sm:$0xff]
        %v3185 = vld [vmem:[#allocation16 + $0x60] sm:$0xff]
        %v3186 = vld [vmem:[#allocation16 + $0x68] sm:$0xff]
        %v3187 = vld [vmem:[#allocation16 + $0x70] sm:$0xff]
        %v3188 = vld [vmem:[#allocation16 + $0x78] sm:$0xff]
        %v3189 = vld [vmem:[#allocation16 + $0x80] sm:$0xff]
        %v3190 = vld [vmem:[#allocation16 + $0x88] sm:$0xff]
        %v3191 = vld [vmem:[#allocation16 + $0x90] sm:$0xff]
        %v3192 = vld [vmem:[#allocation16 + $0x98] sm:$0xff]
        %v3193 = vld [vmem:[#allocation16 + $0xa0] sm:$0xff]
        %v3194 = vld [vmem:[#allocation16 + $0xa8] sm:$0xff]
        %v3195 = vld [vmem:[#allocation16 + $0xb0] sm:$0xff]
        %v3196 = vld [vmem:[#allocation16 + $0xb8] sm:$0xff]
        %v3197 = vld [vmem:[#allocation16 + $0xc0] sm:$0xff]
        %v3198 = vld [vmem:[#allocation16 + $0xc8] sm:$0xff]
        %v3199 = vld [vmem:[#allocation16 + $0xd0] sm:$0xff]
        %v3200 = vld [vmem:[#allocation16 + $0xd8] sm:$0xff]
        %v3201 = vld [vmem:[#allocation16 + $0xe0] sm:$0xff]
        %v3202 = vld [vmem:[#allocation16 + $0xe8] sm:$0xff]
        %v3203 = vld [vmem:[#allocation16 + $0xf0] sm:$0xff]
        %v3204 = vld [vmem:[#allocation16 + $0xf8] sm:$0xff]
        %v3205 = vld [vmem:[#allocation16 + $0x100] sm:$0xff]
        %v3206 = vld [vmem:[#allocation16 + $0x108] sm:$0xff]
        %v3207 = vld [vmem:[#allocation16 + $0x110] sm:$0xff]
        %v3208 = vld [vmem:[#allocation16 + $0x118] sm:$0xff]
        %v3209 = vld [vmem:[#allocation16 + $0x120] sm:$0xff]
        %v3210 = vld [vmem:[#allocation16 + $0x128] sm:$0xff]
        %v3211 = vld [vmem:[#allocation16 + $0x130] sm:$0xff]
        %v3212 = vld [vmem:[#allocation16 + $0x138] sm:$0xff]
        %v3213 = vld [vmem:[#allocation16 + $0x140] sm:$0xff]
        %v3214 = vld [vmem:[#allocation16 + $0x148] sm:$0xff]
        %v3215 = vld [vmem:[#allocation16 + $0x150] sm:$0xff]
        %v3216 = vld [vmem:[#allocation16 + $0x158] sm:$0xff]
        %v3217 = vld [vmem:[#allocation16 + $0x160] sm:$0xff]
        %v3218 = vld [vmem:[#allocation16 + $0x168] sm:$0xff]
        %v3219 = vld [vmem:[#allocation16 + $0x170] sm:$0xff]
        %v3220 = vld [vmem:[#allocation16 + $0x178] sm:$0xff]
        %v3221 = vld [vmem:[#allocation16 + $0x180] sm:$0xff]
        %v3222 = vld [vmem:[#allocation16 + $0x188] sm:$0xff]
        %v3223 = vld [vmem:[#allocation16 + $0x190] sm:$0xff]
        %v3224 = vld [vmem:[#allocation16 + $0x198] sm:$0xff]
        %v3225 = vld [vmem:[#allocation16 + $0x1a0] sm:$0xff]
        %v3226 = vld [vmem:[#allocation16 + $0x1a8] sm:$0xff]
        %v3227 = vld [vmem:[#allocation16 + $0x1b0] sm:$0xff]
        %v3228 = vld [vmem:[#allocation16 + $0x1b8] sm:$0xff]
        %v3229 = vld [vmem:[#allocation16 + $0x1c0] sm:$0xff]
        %v3230 = vld [vmem:[#allocation16 + $0x1c8] sm:$0xff]
        %v3231 = vld [vmem:[#allocation16 + $0x1d0] sm:$0xff]
        %v3232 = vld [vmem:[#allocation16 + $0x1d8] sm:$0xff]
        %v3233 = vld [vmem:[#allocation16 + $0x1e0] sm:$0xff]
        %v3234 = vld [vmem:[#allocation16 + $0x1e8] sm:$0xff]
        %v3235 = vld [vmem:[#allocation16 + $0x1f0] sm:$0xff]
        %v3236 = vld [vmem:[#allocation16 + $0x1f8] sm:$0xff]
        %v3237 = vld [vmem:[#allocation16 + $0x200] sm:$0xff]
        %v3238 = vld [vmem:[#allocation16 + $0x208] sm:$0xff]
        %v3239 = vld [vmem:[#allocation16 + $0x210] sm:$0xff]
        %v3240 = vld [vmem:[#allocation16 + $0x218] sm:$0xff]
        %v3241 = vld [vmem:[#allocation16 + $0x220] sm:$0xff]
        %v3242 = vld [vmem:[#allocation16 + $0x228] sm:$0xff]
        %v3243 = vld [vmem:[#allocation16 + $0x230] sm:$0xff]
        %v3244 = vld [vmem:[#allocation16 + $0x238] sm:$0xff]
        %v3245 = vld [vmem:[#allocation16 + $0x240] sm:$0xff]
        %v3246 = vld [vmem:[#allocation16 + $0x248] sm:$0xff]
        %v3247 = vld [vmem:[#allocation16 + $0x250] sm:$0xff]
        %v3248 = vld [vmem:[#allocation16 + $0x258] sm:$0xff]
        %v3249 = vld [vmem:[#allocation16 + $0x260] sm:$0xff]
        %v3250 = vld [vmem:[#allocation16 + $0x268] sm:$0xff]
        %v3251 = vld [vmem:[#allocation16 + $0x270] sm:$0xff]
        %v3252 = vld [vmem:[#allocation16 + $0x278] sm:$0xff]
        %v3253 = vld [vmem:[#allocation16 + $0x280] sm:$0xff]
        %v3254 = vld [vmem:[#allocation16 + $0x288] sm:$0xff]
        %v3255 = vld [vmem:[#allocation16 + $0x290] sm:$0xff]
        %v3256 = vld [vmem:[#allocation16 + $0x298] sm:$0xff]
        %v3257 = vld [vmem:[#allocation16 + $0x2a0] sm:$0xff]
        %v3258 = vld [vmem:[#allocation16 + $0x2a8] sm:$0xff]
        %v3259 = vld [vmem:[#allocation16 + $0x2b0] sm:$0xff]
        %v3260 = vld [vmem:[#allocation16 + $0x2b8] sm:$0xff]
        %v3261 = vld [vmem:[#allocation16 + $0x2c0] sm:$0xff]
        %v3262 = vld [vmem:[#allocation16 + $0x2c8] sm:$0xff]
        %v3263 = vld [vmem:[#allocation16 + $0x2d0] sm:$0xff]
        %v3264 = vld [vmem:[#allocation16 + $0x2d8] sm:$0xff]
        %v3265 = vld [vmem:[#allocation16 + $0x2e0] sm:$0xff]
        %v3266 = vld [vmem:[#allocation16 + $0x2e8] sm:$0xff]
        %v3267 = vld [vmem:[#allocation16 + $0x2f0] sm:$0xff]
        %v3268 = vld [vmem:[#allocation16 + $0x2f8] sm:$0xff]
        %v3269 = vld [vmem:[#allocation16 + $0x300] sm:$0xff]
        %v3270 = vld [vmem:[#allocation16 + $0x308] sm:$0xff]
        %v3271 = vld [vmem:[#allocation16 + $0x310] sm:$0xff]
        %v3272 = vld [vmem:[#allocation16 + $0x318] sm:$0xff]
        %v3273 = vld [vmem:[#allocation16 + $0x320] sm:$0xff]
        %v3274 = vld [vmem:[#allocation16 + $0x328] sm:$0xff]
        %v3275 = vld [vmem:[#allocation16 + $0x330] sm:$0xff]
        %v3276 = vld [vmem:[#allocation16 + $0x338] sm:$0xff]
        %v3277 = vld [vmem:[#allocation16 + $0x340] sm:$0xff]
        %v3278 = vld [vmem:[#allocation16 + $0x348] sm:$0xff]
        %v3279 = vld [vmem:[#allocation16 + $0x350] sm:$0xff]
        %v3280 = vld [vmem:[#allocation16 + $0x358] sm:$0xff]
        %v3281 = vld [vmem:[#allocation16 + $0x360] sm:$0xff]
        %v3282 = vld [vmem:[#allocation16 + $0x368] sm:$0xff]
        %v3283 = vld [vmem:[#allocation16 + $0x370] sm:$0xff]
        %v3284 = vld [vmem:[#allocation16 + $0x378] sm:$0xff]
        %v3285 = vld [vmem:[#allocation16 + $0x380] sm:$0xff]
        %v3286 = vld [vmem:[#allocation16 + $0x388] sm:$0xff]
        %v3287 = vld [vmem:[#allocation16 + $0x390] sm:$0xff]
        %v3288 = vld [vmem:[#allocation16 + $0x398] sm:$0xff]
        %v3289 = vld [vmem:[#allocation16 + $0x3a0] sm:$0xff]
        %v3290 = vld [vmem:[#allocation16 + $0x3a8] sm:$0xff]
        %v3291 = vld [vmem:[#allocation16 + $0x3b0] sm:$0xff]
        %v3292 = vld [vmem:[#allocation16 + $0x3b8] sm:$0xff]
        %v3293 = vld [vmem:[#allocation16 + $0x3c0] sm:$0xff]
        %v3294 = vld [vmem:[#allocation16 + $0x3c8] sm:$0xff]
        %v3295 = vld [vmem:[#allocation16 + $0x3d0] sm:$0xff]
        %v3296 = vld [vmem:[#allocation16 + $0x3d8] sm:$0xff]
        %v3297 = vld [vmem:[#allocation16 + $0x3e0] sm:$0xff]
        %v3298 = vld [vmem:[#allocation16 + $0x3e8] sm:$0xff]
        %v3299 = vld [vmem:[#allocation16 + $0x3f0] sm:$0xff]
        %v3300 = vld [vmem:[#allocation16 + $0x3f8] sm:$0xff]
        %v3301 = vld [vmem:[%s16] sm:$0x3]
        %v3303 = vlaneseq
        %v3304 = vshrl.u32 %v3303, 7
        %v3305 = vsub.s32 0, %v3304
        %v3306 = vrot.slane %v3301, %v3305
        %v3307 = vlaneseq
        %v3308 = vshrl.u32 %v3307, 7
        %v3309 = vsub.s32 1, %v3308
        %v3310 = vrot.slane %v3301, %v3309
        %v3441 = vunpack.c.l.b16 %v3173
        %v3442 = vunpack.c.h.b16 %v3173
        %v3443 = vunpack.c.l.b16 %v3174
        %v3444 = vunpack.c.h.b16 %v3174
        %v3445 = vunpack.c.l.b16 %v3175
        %v3446 = vunpack.c.h.b16 %v3175
        %v3447 = vunpack.c.l.b16 %v3176
        %v3448 = vunpack.c.h.b16 %v3176
        %v3449 = vunpack.c.l.b16 %v3177
        %v3450 = vunpack.c.h.b16 %v3177
        %v3451 = vunpack.c.l.b16 %v3178
        %v3452 = vunpack.c.h.b16 %v3178
        %v3453 = vunpack.c.l.b16 %v3179
        %v3454 = vunpack.c.h.b16 %v3179
        %v3455 = vunpack.c.l.b16 %v3180
        %v3456 = vunpack.c.h.b16 %v3180
        %v3457 = vunpack.c.l.b16 %v3181
        %v3458 = vunpack.c.h.b16 %v3181
        %v3459 = vunpack.c.l.b16 %v3182
        %v3460 = vunpack.c.h.b16 %v3182
        %v3461 = vunpack.c.l.b16 %v3183
        %v3462 = vunpack.c.h.b16 %v3183
        %v3463 = vunpack.c.l.b16 %v3184
        %v3464 = vunpack.c.h.b16 %v3184
        %v3465 = vunpack.c.l.b16 %v3185
        %v3466 = vunpack.c.h.b16 %v3185
        %v3467 = vunpack.c.l.b16 %v3186
        %v3468 = vunpack.c.h.b16 %v3186
        %v3469 = vunpack.c.l.b16 %v3187
        %v3470 = vunpack.c.h.b16 %v3187
        %v3471 = vunpack.c.l.b16 %v3188
        %v3472 = vunpack.c.h.b16 %v3188
        %v3473 = vunpack.c.l.b16 %v3189
        %v3474 = vunpack.c.h.b16 %v3189
        %v3475 = vunpack.c.l.b16 %v3190
        %v3476 = vunpack.c.h.b16 %v3190
        %v3477 = vunpack.c.l.b16 %v3191
        %v3478 = vunpack.c.h.b16 %v3191
        %v3479 = vunpack.c.l.b16 %v3192
        %v3480 = vunpack.c.h.b16 %v3192
        %v3481 = vunpack.c.l.b16 %v3193
        %v3482 = vunpack.c.h.b16 %v3193
        %v3483 = vunpack.c.l.b16 %v3194
        %v3484 = vunpack.c.h.b16 %v3194
        %v3485 = vunpack.c.l.b16 %v3195
        %v3486 = vunpack.c.h.b16 %v3195
        %v3487 = vunpack.c.l.b16 %v3196
        %v3488 = vunpack.c.h.b16 %v3196
        %v3489 = vunpack.c.l.b16 %v3197
        %v3490 = vunpack.c.h.b16 %v3197
        %v3491 = vunpack.c.l.b16 %v3198
        %v3492 = vunpack.c.h.b16 %v3198
        %v3493 = vunpack.c.l.b16 %v3199
        %v3494 = vunpack.c.h.b16 %v3199
        %v3495 = vunpack.c.l.b16 %v3200
        %v3496 = vunpack.c.h.b16 %v3200
        %v3497 = vunpack.c.l.b16 %v3201
        %v3498 = vunpack.c.h.b16 %v3201
        %v3499 = vunpack.c.l.b16 %v3202
        %v3500 = vunpack.c.h.b16 %v3202
        %v3501 = vunpack.c.l.b16 %v3203
        %v3502 = vunpack.c.h.b16 %v3203
        %v3503 = vunpack.c.l.b16 %v3204
        %v3504 = vunpack.c.h.b16 %v3204
        %v3505 = vunpack.c.l.b16 %v3205
        %v3506 = vunpack.c.h.b16 %v3205
        %v3507 = vunpack.c.l.b16 %v3206
        %v3508 = vunpack.c.h.b16 %v3206
        %v3509 = vunpack.c.l.b16 %v3207
        %v3510 = vunpack.c.h.b16 %v3207
        %v3511 = vunpack.c.l.b16 %v3208
        %v3512 = vunpack.c.h.b16 %v3208
        %v3513 = vunpack.c.l.b16 %v3209
        %v3514 = vunpack.c.h.b16 %v3209
        %v3515 = vunpack.c.l.b16 %v3210
        %v3516 = vunpack.c.h.b16 %v3210
        %v3517 = vunpack.c.l.b16 %v3211
        %v3518 = vunpack.c.h.b16 %v3211
        %v3519 = vunpack.c.l.b16 %v3212
        %v3520 = vunpack.c.h.b16 %v3212
        %v3521 = vunpack.c.l.b16 %v3213
        %v3522 = vunpack.c.h.b16 %v3213
        %v3523 = vunpack.c.l.b16 %v3214
        %v3524 = vunpack.c.h.b16 %v3214
        %v3525 = vunpack.c.l.b16 %v3215
        %v3526 = vunpack.c.h.b16 %v3215
        %v3527 = vunpack.c.l.b16 %v3216
        %v3528 = vunpack.c.h.b16 %v3216
        %v3529 = vunpack.c.l.b16 %v3217
        %v3530 = vunpack.c.h.b16 %v3217
        %v3531 = vunpack.c.l.b16 %v3218
        %v3532 = vunpack.c.h.b16 %v3218
        %v3533 = vunpack.c.l.b16 %v3219
        %v3534 = vunpack.c.h.b16 %v3219
        %v3535 = vunpack.c.l.b16 %v3220
        %v3536 = vunpack.c.h.b16 %v3220
        %v3537 = vunpack.c.l.b16 %v3221
        %v3538 = vunpack.c.h.b16 %v3221
        %v3539 = vunpack.c.l.b16 %v3222
        %v3540 = vunpack.c.h.b16 %v3222
        %v3541 = vunpack.c.l.b16 %v3223
        %v3542 = vunpack.c.h.b16 %v3223
        %v3543 = vunpack.c.l.b16 %v3224
        %v3544 = vunpack.c.h.b16 %v3224
        %v3545 = vunpack.c.l.b16 %v3225
        %v3546 = vunpack.c.h.b16 %v3225
        %v3547 = vunpack.c.l.b16 %v3226
        %v3548 = vunpack.c.h.b16 %v3226
        %v3549 = vunpack.c.l.b16 %v3227
        %v3550 = vunpack.c.h.b16 %v3227
        %v3551 = vunpack.c.l.b16 %v3228
        %v3552 = vunpack.c.h.b16 %v3228
        %v3553 = vunpack.c.l.b16 %v3229
        %v3554 = vunpack.c.h.b16 %v3229
        %v3555 = vunpack.c.l.b16 %v3230
        %v3556 = vunpack.c.h.b16 %v3230
        %v3557 = vunpack.c.l.b16 %v3231
        %v3558 = vunpack.c.h.b16 %v3231
        %v3559 = vunpack.c.l.b16 %v3232
        %v3560 = vunpack.c.h.b16 %v3232
        %v3561 = vunpack.c.l.b16 %v3233
        %v3562 = vunpack.c.h.b16 %v3233
        %v3563 = vunpack.c.l.b16 %v3234
        %v3564 = vunpack.c.h.b16 %v3234
        %v3565 = vunpack.c.l.b16 %v3235
        %v3566 = vunpack.c.h.b16 %v3235
        %v3567 = vunpack.c.l.b16 %v3236
        %v3568 = vunpack.c.h.b16 %v3236
        %v3569 = vunpack.c.l.b16 %v3237
        %v3570 = vunpack.c.h.b16 %v3237
        %v3571 = vunpack.c.l.b16 %v3238
        %v3572 = vunpack.c.h.b16 %v3238
        %v3573 = vunpack.c.l.b16 %v3239
        %v3574 = vunpack.c.h.b16 %v3239
        %v3575 = vunpack.c.l.b16 %v3240
        %v3576 = vunpack.c.h.b16 %v3240
        %v3577 = vunpack.c.l.b16 %v3241
        %v3578 = vunpack.c.h.b16 %v3241
        %v3579 = vunpack.c.l.b16 %v3242
        %v3580 = vunpack.c.h.b16 %v3242
        %v3581 = vunpack.c.l.b16 %v3243
        %v3582 = vunpack.c.h.b16 %v3243
        %v3583 = vunpack.c.l.b16 %v3244
        %v3584 = vunpack.c.h.b16 %v3244
        %v3585 = vunpack.c.l.b16 %v3245
        %v3586 = vunpack.c.h.b16 %v3245
        %v3587 = vunpack.c.l.b16 %v3246
        %v3588 = vunpack.c.h.b16 %v3246
        %v3589 = vunpack.c.l.b16 %v3247
        %v3590 = vunpack.c.h.b16 %v3247
        %v3591 = vunpack.c.l.b16 %v3248
        %v3592 = vunpack.c.h.b16 %v3248
        %v3593 = vunpack.c.l.b16 %v3249
        %v3594 = vunpack.c.h.b16 %v3249
        %v3595 = vunpack.c.l.b16 %v3250
        %v3596 = vunpack.c.h.b16 %v3250
        %v3597 = vunpack.c.l.b16 %v3251
        %v3598 = vunpack.c.h.b16 %v3251
        %v3599 = vunpack.c.l.b16 %v3252
        %v3600 = vunpack.c.h.b16 %v3252
        %v3601 = vunpack.c.l.b16 %v3253
        %v3602 = vunpack.c.h.b16 %v3253
        %v3603 = vunpack.c.l.b16 %v3254
        %v3604 = vunpack.c.h.b16 %v3254
        %v3605 = vunpack.c.l.b16 %v3255
        %v3606 = vunpack.c.h.b16 %v3255
        %v3607 = vunpack.c.l.b16 %v3256
        %v3608 = vunpack.c.h.b16 %v3256
        %v3609 = vunpack.c.l.b16 %v3257
        %v3610 = vunpack.c.h.b16 %v3257
        %v3611 = vunpack.c.l.b16 %v3258
        %v3612 = vunpack.c.h.b16 %v3258
        %v3613 = vunpack.c.l.b16 %v3259
        %v3614 = vunpack.c.h.b16 %v3259
        %v3615 = vunpack.c.l.b16 %v3260
        %v3616 = vunpack.c.h.b16 %v3260
        %v3617 = vunpack.c.l.b16 %v3261
        %v3618 = vunpack.c.h.b16 %v3261
        %v3619 = vunpack.c.l.b16 %v3262
        %v3620 = vunpack.c.h.b16 %v3262
        %v3621 = vunpack.c.l.b16 %v3263
        %v3622 = vunpack.c.h.b16 %v3263
        %v3623 = vunpack.c.l.b16 %v3264
        %v3624 = vunpack.c.h.b16 %v3264
        %v3625 = vunpack.c.l.b16 %v3265
        %v3626 = vunpack.c.h.b16 %v3265
        %v3627 = vunpack.c.l.b16 %v3266
        %v3628 = vunpack.c.h.b16 %v3266
        %v3629 = vunpack.c.l.b16 %v3267
        %v3630 = vunpack.c.h.b16 %v3267
        %v3631 = vunpack.c.l.b16 %v3268
        %v3632 = vunpack.c.h.b16 %v3268
        %v3633 = vunpack.c.l.b16 %v3269
        %v3634 = vunpack.c.h.b16 %v3269
        %v3635 = vunpack.c.l.b16 %v3270
        %v3636 = vunpack.c.h.b16 %v3270
        %v3637 = vunpack.c.l.b16 %v3271
        %v3638 = vunpack.c.h.b16 %v3271
        %v3639 = vunpack.c.l.b16 %v3272
        %v3640 = vunpack.c.h.b16 %v3272
        %v3641 = vunpack.c.l.b16 %v3273
        %v3642 = vunpack.c.h.b16 %v3273
        %v3643 = vunpack.c.l.b16 %v3274
        %v3644 = vunpack.c.h.b16 %v3274
        %v3645 = vunpack.c.l.b16 %v3275
        %v3646 = vunpack.c.h.b16 %v3275
        %v3647 = vunpack.c.l.b16 %v3276
        %v3648 = vunpack.c.h.b16 %v3276
        %v3649 = vunpack.c.l.b16 %v3277
        %v3650 = vunpack.c.h.b16 %v3277
        %v3651 = vunpack.c.l.b16 %v3278
        %v3652 = vunpack.c.h.b16 %v3278
        %v3653 = vunpack.c.l.b16 %v3279
        %v3654 = vunpack.c.h.b16 %v3279
        %v3655 = vunpack.c.l.b16 %v3280
        %v3656 = vunpack.c.h.b16 %v3280
        %v3657 = vunpack.c.l.b16 %v3281
        %v3658 = vunpack.c.h.b16 %v3281
        %v3659 = vunpack.c.l.b16 %v3282
        %v3660 = vunpack.c.h.b16 %v3282
        %v3661 = vunpack.c.l.b16 %v3283
        %v3662 = vunpack.c.h.b16 %v3283
        %v3663 = vunpack.c.l.b16 %v3284
        %v3664 = vunpack.c.h.b16 %v3284
        %v3665 = vunpack.c.l.b16 %v3285
        %v3666 = vunpack.c.h.b16 %v3285
        %v3667 = vunpack.c.l.b16 %v3286
        %v3668 = vunpack.c.h.b16 %v3286
        %v3669 = vunpack.c.l.b16 %v3287
        %v3670 = vunpack.c.h.b16 %v3287
        %v3671 = vunpack.c.l.b16 %v3288
        %v3672 = vunpack.c.h.b16 %v3288
        %v3673 = vunpack.c.l.b16 %v3289
        %v3674 = vunpack.c.h.b16 %v3289
        %v3675 = vunpack.c.l.b16 %v3290
        %v3676 = vunpack.c.h.b16 %v3290
        %v3677 = vunpack.c.l.b16 %v3291
        %v3678 = vunpack.c.h.b16 %v3291
        %v3679 = vunpack.c.l.b16 %v3292
        %v3680 = vunpack.c.h.b16 %v3292
        %v3681 = vunpack.c.l.b16 %v3293
        %v3682 = vunpack.c.h.b16 %v3293
        %v3683 = vunpack.c.l.b16 %v3294
        %v3684 = vunpack.c.h.b16 %v3294
        %v3685 = vunpack.c.l.b16 %v3295
        %v3686 = vunpack.c.h.b16 %v3295
        %v3687 = vunpack.c.l.b16 %v3296
        %v3688 = vunpack.c.h.b16 %v3296
        %v3689 = vunpack.c.l.b16 %v3297
        %v3690 = vunpack.c.h.b16 %v3297
        %v3691 = vunpack.c.l.b16 %v3298
        %v3692 = vunpack.c.h.b16 %v3298
        %v3693 = vunpack.c.l.b16 %v3299
        %v3694 = vunpack.c.h.b16 %v3299
        %v3695 = vunpack.c.l.b16 %v3300
        %v3696 = vunpack.c.h.b16 %v3300
        %v3697 = vpack.c.b16 %v3443, %v3441
        %v3698 = vpack.c.b16 %v3444, %v3442
        %v3699 = vpack.c.b16 %v3447, %v3445
        %v3700 = vpack.c.b16 %v3448, %v3446
        %v3701 = vpack.c.b16 %v3451, %v3449
        %v3702 = vpack.c.b16 %v3452, %v3450
        %v3703 = vpack.c.b16 %v3455, %v3453
        %v3704 = vpack.c.b16 %v3456, %v3454
        %v3705 = vpack.c.b16 %v3459, %v3457
        %v3706 = vpack.c.b16 %v3460, %v3458
        %v3707 = vpack.c.b16 %v3463, %v3461
        %v3708 = vpack.c.b16 %v3464, %v3462
        %v3709 = vpack.c.b16 %v3467, %v3465
        %v3710 = vpack.c.b16 %v3468, %v3466
        %v3711 = vpack.c.b16 %v3471, %v3469
        %v3712 = vpack.c.b16 %v3472, %v3470
        %v3713 = vpack.c.b16 %v3475, %v3473
        %v3714 = vpack.c.b16 %v3476, %v3474
        %v3715 = vpack.c.b16 %v3479, %v3477
        %v3716 = vpack.c.b16 %v3480, %v3478
        %v3717 = vpack.c.b16 %v3483, %v3481
        %v3718 = vpack.c.b16 %v3484, %v3482
        %v3719 = vpack.c.b16 %v3487, %v3485
        %v3720 = vpack.c.b16 %v3488, %v3486
        %v3721 = vpack.c.b16 %v3491, %v3489
        %v3722 = vpack.c.b16 %v3492, %v3490
        %v3723 = vpack.c.b16 %v3495, %v3493
        %v3724 = vpack.c.b16 %v3496, %v3494
        %v3725 = vpack.c.b16 %v3499, %v3497
        %v3726 = vpack.c.b16 %v3500, %v3498
        %v3727 = vpack.c.b16 %v3503, %v3501
        %v3728 = vpack.c.b16 %v3504, %v3502
        %v3729 = vpack.c.b16 %v3507, %v3505
        %v3730 = vpack.c.b16 %v3508, %v3506
        %v3731 = vpack.c.b16 %v3511, %v3509
        %v3732 = vpack.c.b16 %v3512, %v3510
        %v3733 = vpack.c.b16 %v3515, %v3513
        %v3734 = vpack.c.b16 %v3516, %v3514
        %v3735 = vpack.c.b16 %v3519, %v3517
        %v3736 = vpack.c.b16 %v3520, %v3518
        %v3737 = vpack.c.b16 %v3523, %v3521
        %v3738 = vpack.c.b16 %v3524, %v3522
        %v3739 = vpack.c.b16 %v3527, %v3525
        %v3740 = vpack.c.b16 %v3528, %v3526
        %v3741 = vpack.c.b16 %v3531, %v3529
        %v3742 = vpack.c.b16 %v3532, %v3530
        %v3743 = vpack.c.b16 %v3535, %v3533
        %v3744 = vpack.c.b16 %v3536, %v3534
        %v3745 = vpack.c.b16 %v3539, %v3537
        %v3746 = vpack.c.b16 %v3540, %v3538
        %v3747 = vpack.c.b16 %v3543, %v3541
        %v3748 = vpack.c.b16 %v3544, %v3542
        %v3749 = vpack.c.b16 %v3547, %v3545
        %v3750 = vpack.c.b16 %v3548, %v3546
        %v3751 = vpack.c.b16 %v3551, %v3549
        %v3752 = vpack.c.b16 %v3552, %v3550
        %v3753 = vpack.c.b16 %v3555, %v3553
        %v3754 = vpack.c.b16 %v3556, %v3554
        %v3755 = vpack.c.b16 %v3559, %v3557
        %v3756 = vpack.c.b16 %v3560, %v3558
        %v3757 = vpack.c.b16 %v3563, %v3561
        %v3758 = vpack.c.b16 %v3564, %v3562
        %v3759 = vpack.c.b16 %v3567, %v3565
        %v3760 = vpack.c.b16 %v3568, %v3566
        %v3761 = vpack.c.b16 %v3571, %v3569
        %v3762 = vpack.c.b16 %v3572, %v3570
        %v3763 = vpack.c.b16 %v3575, %v3573
        %v3764 = vpack.c.b16 %v3576, %v3574
        %v3765 = vpack.c.b16 %v3579, %v3577
        %v3766 = vpack.c.b16 %v3580, %v3578
        %v3767 = vpack.c.b16 %v3583, %v3581
        %v3768 = vpack.c.b16 %v3584, %v3582
        %v3769 = vpack.c.b16 %v3587, %v3585
        %v3770 = vpack.c.b16 %v3588, %v3586
        %v3771 = vpack.c.b16 %v3591, %v3589
        %v3772 = vpack.c.b16 %v3592, %v3590
        %v3773 = vpack.c.b16 %v3595, %v3593
        %v3774 = vpack.c.b16 %v3596, %v3594
        %v3775 = vpack.c.b16 %v3599, %v3597
        %v3776 = vpack.c.b16 %v3600, %v3598
        %v3777 = vpack.c.b16 %v3603, %v3601
        %v3778 = vpack.c.b16 %v3604, %v3602
        %v3779 = vpack.c.b16 %v3607, %v3605
        %v3780 = vpack.c.b16 %v3608, %v3606
        %v3781 = vpack.c.b16 %v3611, %v3609
        %v3782 = vpack.c.b16 %v3612, %v3610
        %v3783 = vpack.c.b16 %v3615, %v3613
        %v3784 = vpack.c.b16 %v3616, %v3614
        %v3785 = vpack.c.b16 %v3619, %v3617
        %v3786 = vpack.c.b16 %v3620, %v3618
        %v3787 = vpack.c.b16 %v3623, %v3621
        %v3788 = vpack.c.b16 %v3624, %v3622
        %v3789 = vpack.c.b16 %v3627, %v3625
        %v3790 = vpack.c.b16 %v3628, %v3626
        %v3791 = vpack.c.b16 %v3631, %v3629
        %v3792 = vpack.c.b16 %v3632, %v3630
        %v3793 = vpack.c.b16 %v3635, %v3633
        %v3794 = vpack.c.b16 %v3636, %v3634
        %v3795 = vpack.c.b16 %v3639, %v3637
        %v3796 = vpack.c.b16 %v3640, %v3638
        %v3797 = vpack.c.b16 %v3643, %v3641
        %v3798 = vpack.c.b16 %v3644, %v3642
        %v3799 = vpack.c.b16 %v3647, %v3645
        %v3800 = vpack.c.b16 %v3648, %v3646
        %v3801 = vpack.c.b16 %v3651, %v3649
        %v3802 = vpack.c.b16 %v3652, %v3650
        %v3803 = vpack.c.b16 %v3655, %v3653
        %v3804 = vpack.c.b16 %v3656, %v3654
        %v3805 = vpack.c.b16 %v3659, %v3657
        %v3806 = vpack.c.b16 %v3660, %v3658
        %v3807 = vpack.c.b16 %v3663, %v3661
        %v3808 = vpack.c.b16 %v3664, %v3662
        %v3809 = vpack.c.b16 %v3667, %v3665
        %v3810 = vpack.c.b16 %v3668, %v3666
        %v3811 = vpack.c.b16 %v3671, %v3669
        %v3812 = vpack.c.b16 %v3672, %v3670
        %v3813 = vpack.c.b16 %v3675, %v3673
        %v3814 = vpack.c.b16 %v3676, %v3674
        %v3815 = vpack.c.b16 %v3679, %v3677
        %v3816 = vpack.c.b16 %v3680, %v3678
        %v3817 = vpack.c.b16 %v3683, %v3681
        %v3818 = vpack.c.b16 %v3684, %v3682
        %v3819 = vpack.c.b16 %v3687, %v3685
        %v3820 = vpack.c.b16 %v3688, %v3686
        %v3821 = vpack.c.b16 %v3691, %v3689
        %v3822 = vpack.c.b16 %v3692, %v3690
        %v3823 = vpack.c.b16 %v3695, %v3693
        %v3824 = vpack.c.b16 %v3696, %v3694
        %3953 = vmatprep.subr.bf16.mxu0 %v3712
        %3954 = vmatpush1.bf16.msra.mxu0 %v3711
        %3955 = vmatprep.subr.bf16.mxu0 %v3710
        %3956 = vmatpush1.bf16.msra.mxu0 %v3709
        %3957 = vmatprep.subr.bf16.mxu0 %v3708
        %3958 = vmatpush1.bf16.msra.mxu0 %v3707
        %3959 = vmatprep.subr.bf16.mxu0 %v3706
        %3960 = vmatpush1.bf16.msra.mxu0 %v3705
        %3961 = vmatprep.subr.bf16.mxu0 %v3704
        %3962 = vmatpush1.bf16.msra.mxu0 %v3703
        %3963 = vmatprep.subr.bf16.mxu0 %v3702
        %3964 = vmatpush1.bf16.msra.mxu0 %v3701
        %3965 = vmatprep.subr.bf16.mxu0 %v3700
        %3966 = vmatpush1.bf16.msra.mxu0 %v3699
        %3967 = vmatprep.subr.bf16.mxu0 %v3698
        %3968 = vmatpush1.bf16.msra.mxu0 %v3697
        %3969 = vmatprep.subr.bf16.mxu0 %v3728
        %3970 = vmatpush2.bf16.msra.mxu0 %v3727
        %3971 = vmatprep.subr.bf16.mxu0 %v3726
        %3972 = vmatpush2.bf16.msra.mxu0 %v3725
        %3973 = vmatprep.subr.bf16.mxu0 %v3724
        %3974 = vmatpush2.bf16.msra.mxu0 %v3723
        %3975 = vmatprep.subr.bf16.mxu0 %v3722
        %3976 = vmatpush2.bf16.msra.mxu0 %v3721
        %3977 = vmatprep.subr.bf16.mxu0 %v3720
        %3978 = vmatpush2.bf16.msra.mxu0 %v3719
        %3979 = vmatprep.subr.bf16.mxu0 %v3718
        %3980 = vmatpush2.bf16.msra.mxu0 %v3717
        %3981 = vmatprep.subr.bf16.mxu0 %v3716
        %3982 = vmatpush2.bf16.msra.mxu0 %v3715
        %3983 = vmatprep.subr.bf16.mxu0 %v3714
        %3984 = vmatpush2.bf16.msra.mxu0 %v3713
        %3985 = vmatprep.mubr.bf16.mxu0 %v3166
        %3986 = vmatmul.mubr.bf16.gmra.mxu0 %v3165
        %v3987 = vpop.f32.mrf.mxu0
        %v3988 = vadd.f32 %v3306, %v3987
        %v3989 = vpop.f32.mrf.mxu0
        %v3990 = vadd.f32 %v3310, %v3989
        %v3991 = vpop.f32.mrf.mxu0
        %v3992 = vpop.f32.mrf.mxu0
        %3993 = vdwg.mxu0
        %3994 = vmatprep.subr.bf16.mxu0 %v3744
        %3995 = vmatpush1.bf16.msra.mxu0 %v3743
        %3996 = vmatprep.subr.bf16.mxu0 %v3742
        %3997 = vmatpush1.bf16.msra.mxu0 %v3741
        %3998 = vmatprep.subr.bf16.mxu0 %v3740
        %3999 = vmatpush1.bf16.msra.mxu0 %v3739
        %4000 = vmatprep.subr.bf16.mxu0 %v3738
        %4001 = vmatpush1.bf16.msra.mxu0 %v3737
        %4002 = vmatprep.subr.bf16.mxu0 %v3736
        %4003 = vmatpush1.bf16.msra.mxu0 %v3735
        %4004 = vmatprep.subr.bf16.mxu0 %v3734
        %4005 = vmatpush1.bf16.msra.mxu0 %v3733
        %4006 = vmatprep.subr.bf16.mxu0 %v3732
        %4007 = vmatpush1.bf16.msra.mxu0 %v3731
        %4008 = vmatprep.subr.bf16.mxu0 %v3730
        %4009 = vmatpush1.bf16.msra.mxu0 %v3729
        %4010 = vmatprep.subr.bf16.mxu0 %v3760
        %4011 = vmatpush2.bf16.msra.mxu0 %v3759
        %4012 = vmatprep.subr.bf16.mxu0 %v3758
        %4013 = vmatpush2.bf16.msra.mxu0 %v3757
        %4014 = vmatprep.subr.bf16.mxu0 %v3756
        %4015 = vmatpush2.bf16.msra.mxu0 %v3755
        %4016 = vmatprep.subr.bf16.mxu0 %v3754
        %4017 = vmatpush2.bf16.msra.mxu0 %v3753
        %4018 = vmatprep.subr.bf16.mxu0 %v3752
        %4019 = vmatpush2.bf16.msra.mxu0 %v3751
        %4020 = vmatprep.subr.bf16.mxu0 %v3750
        %4021 = vmatpush2.bf16.msra.mxu0 %v3749
        %4022 = vmatprep.subr.bf16.mxu0 %v3748
        %4023 = vmatpush2.bf16.msra.mxu0 %v3747
        %4024 = vmatprep.subr.bf16.mxu0 %v3746
        %4025 = vmatpush2.bf16.msra.mxu0 %v3745
        %4026 = vmatprep.mubr.bf16.mxu0 %v3168
        %4027 = vmatmul.mubr.bf16.gmra.mxu0 %v3167
        %v4028 = vpop.f32.mrf.mxu0
        %v4029 = vadd.f32 %v3988, %v4028
        %v4030 = vpop.f32.mrf.mxu0
        %v4031 = vadd.f32 %v3990, %v4030
        %v4032 = vpop.f32.mrf.mxu0
        %v4033 = vpop.f32.mrf.mxu0
        %4034 = vdwg.mxu0
        %4035 = vmatprep.subr.bf16.mxu0 %v3776
        %4036 = vmatpush1.bf16.msra.mxu0 %v3775
        %4037 = vmatprep.subr.bf16.mxu0 %v3774
        %4038 = vmatpush1.bf16.msra.mxu0 %v3773
        %4039 = vmatprep.subr.bf16.mxu0 %v3772
        %4040 = vmatpush1.bf16.msra.mxu0 %v3771
        %4041 = vmatprep.subr.bf16.mxu0 %v3770
        %4042 = vmatpush1.bf16.msra.mxu0 %v3769
        %4043 = vmatprep.subr.bf16.mxu0 %v3768
        %4044 = vmatpush1.bf16.msra.mxu0 %v3767
        %4045 = vmatprep.subr.bf16.mxu0 %v3766
        %4046 = vmatpush1.bf16.msra.mxu0 %v3765
        %4047 = vmatprep.subr.bf16.mxu0 %v3764
        %4048 = vmatpush1.bf16.msra.mxu0 %v3763
        %4049 = vmatprep.subr.bf16.mxu0 %v3762
        %4050 = vmatpush1.bf16.msra.mxu0 %v3761
        %4051 = vmatprep.subr.bf16.mxu0 %v3792
        %4052 = vmatpush2.bf16.msra.mxu0 %v3791
        %4053 = vmatprep.subr.bf16.mxu0 %v3790
        %4054 = vmatpush2.bf16.msra.mxu0 %v3789
        %4055 = vmatprep.subr.bf16.mxu0 %v3788
        %4056 = vmatpush2.bf16.msra.mxu0 %v3787
        %4057 = vmatprep.subr.bf16.mxu0 %v3786
        %4058 = vmatpush2.bf16.msra.mxu0 %v3785
        %4059 = vmatprep.subr.bf16.mxu0 %v3784
        %4060 = vmatpush2.bf16.msra.mxu0 %v3783
        %4061 = vmatprep.subr.bf16.mxu0 %v3782
        %4062 = vmatpush2.bf16.msra.mxu0 %v3781
        %4063 = vmatprep.subr.bf16.mxu0 %v3780
        %4064 = vmatpush2.bf16.msra.mxu0 %v3779
        %4065 = vmatprep.subr.bf16.mxu0 %v3778
        %4066 = vmatpush2.bf16.msra.mxu0 %v3777
        %4067 = vmatprep.mubr.bf16.mxu0 %v3170
        %4068 = vmatmul.mubr.bf16.gmra.mxu0 %v3169
        %v4069 = vpop.f32.mrf.mxu0
        %v4070 = vadd.f32 %v4029, %v4069
        %v4071 = vpop.f32.mrf.mxu0
        %v4072 = vadd.f32 %v4031, %v4071
        %v4073 = vpop.f32.mrf.mxu0
        %v4074 = vpop.f32.mrf.mxu0
        %4075 = vdwg.mxu0
        %4076 = vmatprep.subr.bf16.mxu0 %v3808
        %4077 = vmatpush1.bf16.msra.mxu0 %v3807
        %4078 = vmatprep.subr.bf16.mxu0 %v3806
        %4079 = vmatpush1.bf16.msra.mxu0 %v3805
        %4080 = vmatprep.subr.bf16.mxu0 %v3804
        %4081 = vmatpush1.bf16.msra.mxu0 %v3803
        %4082 = vmatprep.subr.bf16.mxu0 %v3802
        %4083 = vmatpush1.bf16.msra.mxu0 %v3801
        %4084 = vmatprep.subr.bf16.mxu0 %v3800
        %4085 = vmatpush1.bf16.msra.mxu0 %v3799
        %4086 = vmatprep.subr.bf16.mxu0 %v3798
        %4087 = vmatpush1.bf16.msra.mxu0 %v3797
        %4088 = vmatprep.subr.bf16.mxu0 %v3796
        %4089 = vmatpush1.bf16.msra.mxu0 %v3795
        %4090 = vmatprep.subr.bf16.mxu0 %v3794
        %4091 = vmatpush1.bf16.msra.mxu0 %v3793
        %4092 = vmatprep.subr.bf16.mxu0 %v3824
        %4093 = vmatpush2.bf16.msra.mxu0 %v3823
        %4094 = vmatprep.subr.bf16.mxu0 %v3822
        %4095 = vmatpush2.bf16.msra.mxu0 %v3821
        %4096 = vmatprep.subr.bf16.mxu0 %v3820
        %4097 = vmatpush2.bf16.msra.mxu0 %v3819
        %4098 = vmatprep.subr.bf16.mxu0 %v3818
        %4099 = vmatpush2.bf16.msra.mxu0 %v3817
        %4100 = vmatprep.subr.bf16.mxu0 %v3816
        %4101 = vmatpush2.bf16.msra.mxu0 %v3815
        %4102 = vmatprep.subr.bf16.mxu0 %v3814
        %4103 = vmatpush2.bf16.msra.mxu0 %v3813
        %4104 = vmatprep.subr.bf16.mxu0 %v3812
        %4105 = vmatpush2.bf16.msra.mxu0 %v3811
        %4106 = vmatprep.subr.bf16.mxu0 %v3810
        %4107 = vmatpush2.bf16.msra.mxu0 %v3809
        %4108 = vmatprep.mubr.bf16.mxu0 %v3172
        %4109 = vmatmul.mubr.bf16.gmra.mxu0 %v3171
        %v4110 = vpop.f32.mrf.mxu0
        %v4111 = vadd.f32 %v4070, %v4110
        %v4112 = vpop.f32.mrf.mxu0
        %v4113 = vadd.f32 %v4072, %v4112
        %v4114 = vpop.f32.mrf.mxu0
        %v4115 = vpop.f32.mrf.mxu0
        %4116 = vdwg.mxu0
        %v4117 = vadd.f32 %v1929, %v4111
        %v4118 = vadd.f32 %v1930, %v4113
        %4119 = vst [vmem:[%s690] sm:$0xff] %v4117
        %4120 = vst [vmem:[%s690 + $0x8] sm:$0xff] %v4118
        %s4121 = sand.u32 %s422, 1
        %s4122 = scalar_lea.sflag [#allocation4], %s4121
        %s4123 = sand.u32 %s422, 1
        %s4124 = smul.addr %s4123, 16
        %s4125 = scalar_lea.vmem [#allocation17], %s4124
        // Predicated region
        $region125: #{tpu_custom_call.1} parent=87 // pred_check
          %p4126 = pneg %p432
        $region126: #{tpu_custom_call.1} parent=87 // pred_check_branch
          %4128 = sbr.rel (%p4126) target = $region128
        $region127: #{tpu_custom_call.1} parent=87 // pred_region
          %s4130 = ssub.s32 256, 256
          %4131 = vsyncadd %s4122, %s4130
          %s4132 = smul.addr %s43, 2
          %s4133 = smul.addr %s42, 2
          %s4134 = sadd.s32 %s4132, %s4133
          %s4135 = smul.addr %s4134, 128
          %s4136 = scalar_lea.hbm %s17, %s4135
          %s4138 = sshll.u32 %s4125, 4
          %s4139 = int_to_ptr.vmem [resolvable:$true] %s4138
          %4141 = dma.vmem_to_hbm [thread:$0]  %s4139, 256, %s4136, %s4122
        $region128: #{tpu_custom_call.1} parent=87 // pred_fallthru
          _
      $region88: #{tpu_custom_call.1} parent=5 // pred_fallthru
        _
      %p4142 = scmp.le.s32.totalorder 2, %s33
      // Predicated region
      $region129: #{tpu_custom_call.1} parent=5 // pred_check
        %p4143 = pneg %p4142
      $region130: #{tpu_custom_call.1} parent=5 // pred_check_branch
        %4145 = sbr.rel (%p4143) target = $region132
      $region131: #{tpu_custom_call.1} parent=5 // pred_region
        %s4146 = ssub.s32 %s33, 2
        // Predicated region
        $region133: #{tpu_custom_call.1} parent=131 // pred_check
          %p4147 = pneg %p438
        $region134: #{tpu_custom_call.1} parent=131 // pred_check_branch
          %4149 = sbr.rel (%p4147) target = $region136
        $region135: #{tpu_custom_call.1} parent=131 // pred_region
          %s4150 = sand.u32 %s423, 1
          %s4151 = scalar_lea.sflag [#allocation4], %s4150
          %s4152 = sand.u32 %s423, 1
          %s4153 = smul.addr %s4152, 16
          %s4154 = scalar_lea.vmem [#allocation17], %s4153
          %4155 = dma.done %s4151, 256
        $region136: #{tpu_custom_call.1} parent=131 // pred_fallthru
          _
      $region132: #{tpu_custom_call.1} parent=5 // pred_fallthru
        _
    $region6: #{tpu_custom_call.1} parent=1 // loop_footer
      %s37 = sadd.s32 1, %s33
    $region7: #{tpu_custom_call.1} parent=1 // loop_footer_branch
      %32 = sbr.rel target = $region3
    $region8: #{tpu_custom_call.1} parent=1 // loop_exit
      _
    %4156 = vsyncpa [#allocation3], 1
    %s4157 = scalar_lea.sflag [#allocation3], 1
    %4158 = vsyncpa %s4157, 1
    %4159 = vsyncpa [#allocation6], 1
    %4160 = vsyncpa [#allocation9], 1
    %4161 = vsyncpa [#allocation12], 1
    %4162 = vsyncpa [#allocation15], 1
    %4163 = vsyncpa [#allocation4], 1
    %s4164 = scalar_lea.sflag [#allocation4], 1
    %4165 = vsyncpa %s4164, 1

</llo_original>
